<compile_context>
chip_gen: v5e
topology: v5e:2x2
jax: 0.10.0
libtpu: 0.0.40
codegen_flags: <defaults>
</compile_context>

<pallas_src>
import functools
import math

import jax
import jax.numpy as jnp
from jax.experimental import pallas as pl
from jax.experimental.pallas import tpu as pltpu

C = 2048             # BitEstimator channel count (fixed by the module)
ROW_TILE = 512       # rows per grid step in the row-major fallback (4 MiB block)
NUM_PARTITIONS = 2   # outer "parallel" axis (v7x megacore; harmless on 1-TC chips)
_INV_LOG2 = 1.0 / math.log(2.0)


# ---------------------------------------------------------------------------
# Shared per-element math (params already hoisted: sp = softplus(h), ta = tanh(a))
# ---------------------------------------------------------------------------
def _bits_from_z(z, prm):
    sp1, b1, ta1, sp2, b2, ta2, sp3, b3, ta3, sp4, b4 = prm

    def cdf(x):
        for sp, b, ta in ((sp1, b1, ta1), (sp2, b2, ta2), (sp3, b3, ta3)):
            x = x * sp + b
            x = x + jnp.tanh(x) * ta
        return jax.nn.sigmoid(x * sp4 + b4)

    prob = cdf(z + 0.5) - cdf(z - 0.5)
    return jnp.clip(-jnp.log(prob + 1e-10) * _INV_LOG2, 0.0, 50.0)


def _sublane_group_sum(b):
    """Sum 8-row groups with plain VALU adds (keeps the XLU out of the hot loop)."""
    groups = b.shape[0] // 8
    acc = b[0:8]
    for g in range(1, groups):
        acc = acc + b[8 * g:8 * (g + 1)]
    return acc


# ---------------------------------------------------------------------------
# Row-major fallback kernel: (rows, C) with channels on the lane axis.
# ---------------------------------------------------------------------------
def _bpp_rows_kernel(z_ref, p_ref, out_ref, acc_ref, *,
                     num_blocks, tail_rows, row_tile, has_dup):
    part = pl.program_id(0)
    j = pl.program_id(1)
    steps = pl.num_programs(1)
    blk = part * steps + j

    @pl.when(j == 0)
    def _():
        acc_ref[...] = jnp.zeros_like(acc_ref)

    def compute():
        prm_all = p_ref[...]                                   # (16, C)
        prm = [prm_all[k:k + 1] for k in range(11)]            # (1, C) sublane-bcast rows
        z = jnp.round(z_ref[...].astype(jnp.float32))          # (row_tile, C)
        bits = _bits_from_z(z, prm)

        if tail_rows == row_tile:                              # rows divide evenly
            acc_ref[...] += _sublane_group_sum(bits)
        else:
            @pl.when(blk != num_blocks - 1)                    # unmasked fast path
            def _():
                acc_ref[...] += _sublane_group_sum(bits)

            @pl.when(blk == num_blocks - 1)                    # ragged tail only
            def _():
                rid = jax.lax.broadcasted_iota(jnp.int32, bits.shape, 0)
                # Keep a select (not a multiply): garbage tail rows may be NaN.
                acc_ref[...] += _sublane_group_sum(
                    jnp.where(rid < tail_rows, bits, 0.0))

    if has_dup:
        pl.when(blk < num_blocks)(compute)   # skip duplicated boundary blocks entirely
    else:
        compute()

    @pl.when(j == steps - 1)
    def _():
        out_ref[...] = jnp.sum(acc_ref[...], axis=0,
                               keepdims=True).reshape(out_ref.shape)


def _bpp_rows(x, packed, num_points, row_tile_cap):
    rows, ch = x.shape
    # Block may be taller than the array for tiny inputs (e.g. rows=20 -> 24);
    # the out-of-range rows are explicitly masked in-kernel (select, not mul).
    row_tile = min(row_tile_cap, max(8, 8 * pl.cdiv(rows, 8)))
    num_blocks = pl.cdiv(rows, row_tile)
    n_parts = min(NUM_PARTITIONS, num_blocks)
    steps = pl.cdiv(num_blocks, n_parts)
    tail_rows = rows - (num_blocks - 1) * row_tile
    has_dup = n_parts * steps != num_blocks

    def z_map(p, j):
        # Clamp out-of-range (duplicated) block indices; compute is skipped in-kernel.
        return (jnp.minimum(p * steps + j, num_blocks - 1), 0)

    partials = pl.pallas_call(
        functools.partial(_bpp_rows_kernel, num_blocks=num_blocks,
                          tail_rows=tail_rows, row_tile=row_tile,
                          has_dup=has_dup),
        out_shape=jax.ShapeDtypeStruct((n_parts, 1, ch), jnp.float32),
        grid_spec=pltpu.PrefetchScalarGridSpec(
            num_scalar_prefetch=0,
            grid=(n_parts, steps),
            in_specs=[pl.BlockSpec((row_tile, ch), z_map),
                      pl.BlockSpec((16, ch), lambda p, j: (0, 0))],
            out_specs=pl.BlockSpec((1, 1, ch), lambda p, j: (p, 0, 0)),
            scratch_shapes=[pltpu.VMEM((8, ch), jnp.float32)],
        ),
        compiler_params=pltpu.CompilerParams(
            dimension_semantics=("parallel", "arbitrary")),
    )(x, packed)

    # Tiny XLA reduction over (n_parts, 1, C) lane-dense partial sums.
    return jnp.sum(partials) / num_points


# ---------------------------------------------------------------------------
# Direct NCHW kernel: (N, C, S) with channels on sublanes, spatial on lanes.
# Used when S % 128 == 0 so no wrapper transpose (extra HBM round trip) needed.
# ---------------------------------------------------------------------------
def _bpp_nchw_kernel(z_ref, p_ref, out_ref, acc_ref, *, total_blocks, has_dup):
    part = pl.program_id(0)
    j = pl.program_id(1)
    steps = pl.num_programs(1)
    blk = part * steps + j

    @pl.when(j == 0)
    def _():
        acc_ref[...] = jnp.zeros_like(acc_ref)

    def compute():
        prm_all = p_ref[...]                                   # (c_tile, 16)
        prm = [prm_all[:, k:k + 1] for k in range(11)]         # (c_tile, 1) lane-bcast cols
        z = jnp.round(z_ref[0].astype(jnp.float32))            # (c_tile, S)
        bits = _bits_from_z(z, prm)
        acc_ref[...] += _sublane_group_sum(bits)               # no masking needed: exact tiling

    if has_dup:
        pl.when(blk < total_blocks)(compute)                   # skip duplicated blocks
    else:
        compute()

    @pl.when(j == steps - 1)
    def _():
        out_ref[...] = jnp.sum(acc_ref[...], axis=0,
                               keepdims=True).reshape(out_ref.shape)


def _bpp_nchw(x, packed_cols, num_points):
    n, ch, s = x.shape
    # Largest power-of-two channel tile giving a <= 4 MiB z block (8 MiB 2x-buffered).
    c_tile = ch
    while c_tile > 8 and c_tile * s * 4 > 4 * 1024 * 1024:
        c_tile //= 2
    c_blocks = ch // c_tile
    total_blocks = n * c_blocks
    n_parts = min(NUM_PARTITIONS, total_blocks)
    steps = pl.cdiv(total_blocks, n_parts)
    has_dup = n_parts * steps != total_blocks

    def z_map(p, j):
        blk = jnp.minimum(p * steps + j, total_blocks - 1)
        return (blk // c_blocks, blk % c_blocks, 0)

    def p_map(p, j):
        blk = jnp.minimum(p * steps + j, total_blocks - 1)
        return (blk % c_blocks, 0)

    partials = pl.pallas_call(
        functools.partial(_bpp_nchw_kernel, total_blocks=total_blocks,
                          has_dup=has_dup),
        out_shape=jax.ShapeDtypeStruct((n_parts, 1, s), jnp.float32),
        grid_spec=pltpu.PrefetchScalarGridSpec(
            num_scalar_prefetch=0,
            grid=(n_parts, steps),
            in_specs=[pl.BlockSpec((1, c_tile, s), z_map),
                      pl.BlockSpec((c_tile, 16), p_map)],
            out_specs=pl.BlockSpec((1, 1, s), lambda p, j: (p, 0, 0)),
            scratch_shapes=[pltpu.VMEM((8, s), jnp.float32)],
        ),
        compiler_params=pltpu.CompilerParams(
            dimension_semantics=("parallel", "arbitrary")),
    )(x, packed_cols)

    return jnp.sum(partials) / num_points


# ---------------------------------------------------------------------------
# Public wrapper
# ---------------------------------------------------------------------------
def _hoisted_param_list(params):
    """softplus(h*)/tanh(a*) are data-independent -> hoist out of the kernel."""
    (h1, b1, a1, h2, b2, a2, h3, b3, a3, h4, b4) = [
        p.reshape(-1).astype(jnp.float32) for p in params]
    return [jax.nn.softplus(h1), b1, jnp.tanh(a1),
            jax.nn.softplus(h2), b2, jnp.tanh(a2),
            jax.nn.softplus(h3), b3, jnp.tanh(a3),
            jax.nn.softplus(h4), b4]


def cal_bpp(latent, num_points, params, *, row_tile=ROW_TILE):
    """latent: (N, 2048, *spatial) float32, channels-second like the PyTorch module."""
    n, ch = latent.shape[0], latent.shape[1]
    assert ch == C, f"BitEstimator was built for {C} channels"
    s = 1
    for d in latent.shape[2:]:
        s *= d
    x3 = latent.reshape(n, ch, s)                 # free reshape (contiguous merge)

    prm = _hoisted_param_list(params)

    if s % 128 == 0:
        # Direct NCHW path: channels on sublanes, spatial on lanes, no transpose.
        packed = jnp.stack(prm, axis=1)                                  # (C, 11)
        packed = jnp.pad(packed, ((0, 0), (0, 16 - packed.shape[1])))    # (C, 16)
        return _bpp_nchw(x3, packed, num_points)

    # Fallback (spatial not lane-aligned): channels on the lane axis.
    packed = jnp.stack(prm, axis=0)                                      # (11, C)
    packed = jnp.pad(packed, ((0, 16 - packed.shape[0]), (0, 0)))        # (16, C)
    x = jnp.transpose(x3, (0, 2, 1)).reshape(-1, ch)                     # (rows, C)
    return _bpp_rows(x, packed, num_points, row_tile)


# ---------------------------------------------------------------------------
# Pure-JAX reference (direct transliteration of the PyTorch forward)
# ---------------------------------------------------------------------------
def _reference_bpp(latent, num_points, params):
    ch = latent.shape[1]
    bshape = (1, ch) + (1,) * (latent.ndim - 2)
    (h1, b1, a1, h2, b2, a2, h3, b3, a3, h4, b4) = [
        p.reshape(bshape).astype(jnp.float32) for p in params]
    z = jnp.round(latent.astype(jnp.float32))

    def be(x):
        for hh, bb, aa in ((h1, b1, a1), (h2, b2, a2), (h3, b3, a3)):
            x = x * jax.nn.softplus(hh) + bb
            x = x + jnp.tanh(x) * jnp.tanh(aa)
        return jax.nn.sigmoid(x * jax.nn.softplus(h4) + b4)

    prob = be(z + 0.5) - be(z - 0.5)
    bits = jnp.clip(-1.0 * jnp.log(prob + 1e-10) / math.log(2.0), 0.0, 50.0)
    return jnp.sum(bits) / num_points


if __name__ == "__main__":
    key = jax.random.PRNGKey(0)
    k1, k2, k3, *k_params = jax.random.split(key, 14)

    # BitEstimator parameters: h1,b1,a1, h2,b2,a2, h3,b3,a3, h4,b4 ~ N(0, 0.01)
    params = tuple(jax.random.normal(k, (C,), dtype=jnp.float32) * 0.01
                   for k in k_params[:11])
    num_points = jnp.float32(1024.0)

    f = jax.jit(cal_bpp, static_argnames=("row_tile",))

    # 1) Row-major fallback path (H*W=16, not lane-aligned), single full block.
    lat1 = jax.random.normal(k1, (2, C, 4, 4), dtype=jnp.float32) * 3.0
    out1 = jax.block_until_ready(f(lat1, num_points, params))
    ref1 = _reference_bpp(lat1, num_points, params)
    assert jnp.allclose(out1, ref1, rtol=1e-4, atol=1e-2), (out1, ref1)

    # 2) Row-major path with tiny tiles: multi-block accumulation, ragged-tail
    #    mask and duplicated partition-boundary block skip all exercised.
    lat2 = jax.random.normal(k2, (1, C, 4, 5), dtype=jnp.float32) * 3.0
    out2 = jax.block_until_ready(f(lat2, num_points, params, row_tile=8))
    ref2 = _reference_bpp(lat2, num_points, params)
    assert jnp.allclose(out2, ref2, rtol=1e-4, atol=1e-2), (out2, ref2)

    # 3) Direct NCHW path (H*W=128): no transpose, channels on sublanes,
    #    3 blocks over 2 partitions (exercises the duplicated-block gate).
    lat3 = jax.random.normal(k3, (3, C, 8, 16), dtype=jnp.float32) * 3.0
    out3 = jax.block_until_ready(f(lat3, num_points, params))
    ref3 = _reference_bpp(lat3, num_points, params)
    assert jnp.allclose(out3, ref3, rtol=1e-4, atol=1e-2), (out3, ref3)

    print("KERNEL_OK")
</pallas_src>

<mosaic_0001>
module attributes {stable_mosaic.version = 11 : i64} {
  func.func @_bpp_rows_kernel(%arg0: i32, %arg1: i32, %arg2: memref<32x2048xf32, #tpu.memory_space<vmem>>, %arg3: memref<16x2048xf32, #tpu.memory_space<vmem>>, %arg4: memref<1x1x2048xf32, #tpu.memory_space<vmem>>, %arg5: memref<8x2048xf32, #tpu.memory_space<vmem>>) attributes {dimension_semantics = [#tpu.dimension_semantics<parallel>, #tpu.dimension_semantics<arbitrary>], iteration_bounds = array<i64: 1, 1>, scalar_prefetch = 0 : i64, scratch_operands = 1 : i64, tpu.core_type = #tpu.core_type<tc>, window_params = [{transform_indices = @transform_0, window_bounds = array<i64: 32, 2048>}, {pipeline_mode = #tpu.pipeline_mode<synchronous>, transform_indices = @transform_1, window_bounds = array<i64: 16, 2048>}, {transform_indices = @transform_2, window_bounds = array<i64: 1, 1, 2048>}]} {
    %c0_i32 = arith.constant 0 : i32
    %0 = arith.cmpi eq, %arg1, %c0_i32 : i32
    %1 = arith.extui %0 : i1 to i32
    %c0_i32_0 = arith.constant 0 : i32
    %2 = arith.cmpi ne, %1, %c0_i32_0 : i32
    scf.if %2 {
      %cst_18 = arith.constant 0.000000e+00 : f32
      %112 = vector.broadcast %cst_18 : f32 to vector<8x2048xf32>
      %c0_19 = arith.constant 0 : index
      %c0_20 = arith.constant 0 : index
      %113 = vector.load %arg5[%c0_19, %c0_20] : memref<8x2048xf32, #tpu.memory_space<vmem>>, vector<8x2048xf32>
      tpu.vector_store %arg5[%c0_19, %c0_20], %112 {strides = array<i32>} : memref<8x2048xf32, #tpu.memory_space<vmem>>, vector<8x2048xf32>,
    } else {
    }
    %c0 = arith.constant 0 : index
    %c0_1 = arith.constant 0 : index
    %3 = vector.load %arg3[%c0, %c0_1] : memref<16x2048xf32, #tpu.memory_space<vmem>>, vector<16x2048xf32>
    %4 = vector.extract_strided_slice %3 {offsets = [0, 0], sizes = [1, 2048], strides = [1, 1]} : vector<16x2048xf32> to vector<1x2048xf32>
    %5 = vector.extract_strided_slice %3 {offsets = [1, 0], sizes = [1, 2048], strides = [1, 1]} : vector<16x2048xf32> to vector<1x2048xf32>
    %6 = vector.extract_strided_slice %3 {offsets = [2, 0], sizes = [1, 2048], strides = [1, 1]} : vector<16x2048xf32> to vector<1x2048xf32>
    %7 = vector.extract_strided_slice %3 {offsets = [3, 0], sizes = [1, 2048], strides = [1, 1]} : vector<16x2048xf32> to vector<1x2048xf32>
    %8 = vector.extract_strided_slice %3 {offsets = [4, 0], sizes = [1, 2048], strides = [1, 1]} : vector<16x2048xf32> to vector<1x2048xf32>
    %9 = vector.extract_strided_slice %3 {offsets = [5, 0], sizes = [1, 2048], strides = [1, 1]} : vector<16x2048xf32> to vector<1x2048xf32>
    %10 = vector.extract_strided_slice %3 {offsets = [6, 0], sizes = [1, 2048], strides = [1, 1]} : vector<16x2048xf32> to vector<1x2048xf32>
    %11 = vector.extract_strided_slice %3 {offsets = [7, 0], sizes = [1, 2048], strides = [1, 1]} : vector<16x2048xf32> to vector<1x2048xf32>
    %12 = vector.extract_strided_slice %3 {offsets = [8, 0], sizes = [1, 2048], strides = [1, 1]} : vector<16x2048xf32> to vector<1x2048xf32>
    %13 = vector.extract_strided_slice %3 {offsets = [9, 0], sizes = [1, 2048], strides = [1, 1]} : vector<16x2048xf32> to vector<1x2048xf32>
    %14 = vector.extract_strided_slice %3 {offsets = [10, 0], sizes = [1, 2048], strides = [1, 1]} : vector<16x2048xf32> to vector<1x2048xf32>
    %c0_2 = arith.constant 0 : index
    %c0_3 = arith.constant 0 : index
    %15 = vector.load %arg2[%c0_2, %c0_3] : memref<32x2048xf32, #tpu.memory_space<vmem>>, vector<32x2048xf32>
    %16 = math.roundeven %15 : vector<32x2048xf32>
    %cst = arith.constant 5.000000e-01 : f32
    %17 = vector.broadcast %cst : f32 to vector<32x2048xf32>
    %18 = arith.addf %16, %17 : vector<32x2048xf32>
    %19 = vector.broadcast %4 : vector<1x2048xf32> to vector<32x2048xf32>
    %20 = arith.mulf %18, %19 : vector<32x2048xf32>
    %21 = vector.broadcast %5 : vector<1x2048xf32> to vector<32x2048xf32>
    %22 = arith.addf %20, %21 : vector<32x2048xf32>
    %23 = math.tanh %22 : vector<32x2048xf32>
    %24 = vector.broadcast %6 : vector<1x2048xf32> to vector<32x2048xf32>
    %25 = arith.mulf %23, %24 : vector<32x2048xf32>
    %26 = arith.addf %22, %25 : vector<32x2048xf32>
    %27 = vector.broadcast %7 : vector<1x2048xf32> to vector<32x2048xf32>
    %28 = arith.mulf %26, %27 : vector<32x2048xf32>
    %29 = vector.broadcast %8 : vector<1x2048xf32> to vector<32x2048xf32>
    %30 = arith.addf %28, %29 : vector<32x2048xf32>
    %31 = math.tanh %30 : vector<32x2048xf32>
    %32 = vector.broadcast %9 : vector<1x2048xf32> to vector<32x2048xf32>
    %33 = arith.mulf %31, %32 : vector<32x2048xf32>
    %34 = arith.addf %30, %33 : vector<32x2048xf32>
    %35 = vector.broadcast %10 : vector<1x2048xf32> to vector<32x2048xf32>
    %36 = arith.mulf %34, %35 : vector<32x2048xf32>
    %37 = vector.broadcast %11 : vector<1x2048xf32> to vector<32x2048xf32>
    %38 = arith.addf %36, %37 : vector<32x2048xf32>
    %39 = math.tanh %38 : vector<32x2048xf32>
    %40 = vector.broadcast %12 : vector<1x2048xf32> to vector<32x2048xf32>
    %41 = arith.mulf %39, %40 : vector<32x2048xf32>
    %42 = arith.addf %38, %41 : vector<32x2048xf32>
    %43 = vector.broadcast %13 : vector<1x2048xf32> to vector<32x2048xf32>
    %44 = arith.mulf %42, %43 : vector<32x2048xf32>
    %45 = vector.broadcast %14 : vector<1x2048xf32> to vector<32x2048xf32>
    %46 = arith.addf %44, %45 : vector<32x2048xf32>
    %47 = arith.negf %46 : vector<32x2048xf32>
    %48 = math.exp %47 : vector<32x2048xf32>
    %cst_4 = arith.constant 1.000000e+00 : f32
    %49 = vector.broadcast %cst_4 : f32 to vector<32x2048xf32>
    %50 = arith.addf %49, %48 : vector<32x2048xf32>
    %51 = arith.divf %49, %50 : vector<32x2048xf32>
    %cst_5 = arith.constant 5.000000e-01 : f32
    %52 = vector.broadcast %cst_5 : f32 to vector<32x2048xf32>
    %53 = arith.subf %16, %52 : vector<32x2048xf32>
    %54 = vector.broadcast %4 : vector<1x2048xf32> to vector<32x2048xf32>
    %55 = arith.mulf %53, %54 : vector<32x2048xf32>
    %56 = vector.broadcast %5 : vector<1x2048xf32> to vector<32x2048xf32>
    %57 = arith.addf %55, %56 : vector<32x2048xf32>
    %58 = math.tanh %57 : vector<32x2048xf32>
    %59 = vector.broadcast %6 : vector<1x2048xf32> to vector<32x2048xf32>
    %60 = arith.mulf %58, %59 : vector<32x2048xf32>
    %61 = arith.addf %57, %60 : vector<32x2048xf32>
    %62 = vector.broadcast %7 : vector<1x2048xf32> to vector<32x2048xf32>
    %63 = arith.mulf %61, %62 : vector<32x2048xf32>
    %64 = vector.broadcast %8 : vector<1x2048xf32> to vector<32x2048xf32>
    %65 = arith.addf %63, %64 : vector<32x2048xf32>
    %66 = math.tanh %65 : vector<32x2048xf32>
    %67 = vector.broadcast %9 : vector<1x2048xf32> to vector<32x2048xf32>
    %68 = arith.mulf %66, %67 : vector<32x2048xf32>
    %69 = arith.addf %65, %68 : vector<32x2048xf32>
    %70 = vector.broadcast %10 : vector<1x2048xf32> to vector<32x2048xf32>
    %71 = arith.mulf %69, %70 : vector<32x2048xf32>
    %72 = vector.broadcast %11 : vector<1x2048xf32> to vector<32x2048xf32>
    %73 = arith.addf %71, %72 : vector<32x2048xf32>
    %74 = math.tanh %73 : vector<32x2048xf32>
    %75 = vector.broadcast %12 : vector<1x2048xf32> to vector<32x2048xf32>
    %76 = arith.mulf %74, %75 : vector<32x2048xf32>
    %77 = arith.addf %73, %76 : vector<32x2048xf32>
    %78 = vector.broadcast %13 : vector<1x2048xf32> to vector<32x2048xf32>
    %79 = arith.mulf %77, %78 : vector<32x2048xf32>
    %80 = vector.broadcast %14 : vector<1x2048xf32> to vector<32x2048xf32>
    %81 = arith.addf %79, %80 : vector<32x2048xf32>
    %82 = arith.negf %81 : vector<32x2048xf32>
    %83 = math.exp %82 : vector<32x2048xf32>
    %cst_6 = arith.constant 1.000000e+00 : f32
    %84 = vector.broadcast %cst_6 : f32 to vector<32x2048xf32>
    %85 = arith.addf %84, %83 : vector<32x2048xf32>
    %86 = arith.divf %84, %85 : vector<32x2048xf32>
    %87 = arith.subf %51, %86 : vector<32x2048xf32>
    %cst_7 = arith.constant 1.000000e-10 : f32
    %88 = vector.broadcast %cst_7 : f32 to vector<32x2048xf32>
    %89 = arith.addf %87, %88 : vector<32x2048xf32>
    %90 = math.log %89 : vector<32x2048xf32>
    %cst_8 = arith.constant 0.000000e+00 : f32
    %91 = vector.broadcast %cst_8 : f32 to vector<32x2048xf32>
    %92 = arith.subf %91, %90 : vector<32x2048xf32>
    %cst_9 = arith.constant 1.44269502 : f32
    %93 = vector.broadcast %cst_9 : f32 to vector<32x2048xf32>
    %94 = arith.mulf %92, %93 : vector<32x2048xf32>
    %cst_10 = arith.constant 0.000000e+00 : f32
    %cst_11 = arith.constant 5.000000e+01 : f32
    %95 = vector.broadcast %cst_10 : f32 to vector<32x2048xf32>
    %96 = arith.maximumf %95, %94 : vector<32x2048xf32>
    %97 = vector.broadcast %cst_11 : f32 to vector<32x2048xf32>
    %98 = arith.minimumf %97, %96 : vector<32x2048xf32>
    %c0_12 = arith.constant 0 : index
    %c0_13 = arith.constant 0 : index
    %99 = vector.load %arg5[%c0_12, %c0_13] : memref<8x2048xf32, #tpu.memory_space<vmem>>, vector<8x2048xf32>
    %100 = vector.extract_strided_slice %98 {offsets = [0, 0], sizes = [8, 2048], strides = [1, 1]} : vector<32x2048xf32> to vector<8x2048xf32>
    %101 = vector.extract_strided_slice %98 {offsets = [8, 0], sizes = [8, 2048], strides = [1, 1]} : vector<32x2048xf32> to vector<8x2048xf32>
    %102 = arith.addf %100, %101 : vector<8x2048xf32>
    %103 = vector.extract_strided_slice %98 {offsets = [16, 0], sizes = [8, 2048], strides = [1, 1]} : vector<32x2048xf32> to vector<8x2048xf32>
    %104 = arith.addf %102, %103 : vector<8x2048xf32>
    %105 = vector.extract_strided_slice %98 {offsets = [24, 0], sizes = [8, 2048], strides = [1, 1]} : vector<32x2048xf32> to vector<8x2048xf32>
    %106 = arith.addf %104, %105 : vector<8x2048xf32>
    %107 = arith.addf %99, %106 : vector<8x2048xf32>
    %c0_14 = arith.constant 0 : index
    %c0_15 = arith.constant 0 : index
    %108 = vector.load %arg5[%c0_14, %c0_15] : memref<8x2048xf32, #tpu.memory_space<vmem>>, vector<8x2048xf32>
    tpu.vector_store %arg5[%c0_14, %c0_15], %107 {strides = array<i32>} : memref<8x2048xf32, #tpu.memory_space<vmem>>, vector<8x2048xf32>,
    %c0_i32_16 = arith.constant 0 : i32
    %109 = arith.cmpi eq, %arg1, %c0_i32_16 : i32
    %110 = arith.extui %109 : i1 to i32
    %c0_i32_17 = arith.constant 0 : i32
    %111 = arith.cmpi ne, %110, %c0_i32_17 : i32
    scf.if %111 {
      %c0_18 = arith.constant 0 : index
      %c0_19 = arith.constant 0 : index
      %112 = vector.load %arg5[%c0_18, %c0_19] : memref<8x2048xf32, #tpu.memory_space<vmem>>, vector<8x2048xf32>
      %cst_20 = arith.constant dense<0.000000e+00> : vector<2048xf32>
      %113 = vector.multi_reduction <add>, %112, %cst_20 [0] : vector<8x2048xf32> to vector<2048xf32>
      %114 = vector.shape_cast %113 : vector<2048xf32> to vector<1x2048xf32>
      %115 = vector.shape_cast %114 : vector<1x2048xf32> to vector<1x1x2048xf32>
      %c0_21 = arith.constant 0 : index
      %c0_22 = arith.constant 0 : index
      %c0_23 = arith.constant 0 : index
      %116 = vector.load %arg4[%c0_21, %c0_22, %c0_23] : memref<1x1x2048xf32, #tpu.memory_space<vmem>>, vector<1x1x2048xf32>
      tpu.vector_store %arg4[%c0_21, %c0_22, %c0_23], %115 {strides = array<i32>} : memref<1x1x2048xf32, #tpu.memory_space<vmem>>, vector<1x1x2048xf32>,
    } else {
    }
    return
  }
  func.func @transform_0(%arg0: i32, %arg1: i32) -> (i32, i32) {
    %c1_i32 = arith.constant 1 : i32
    %0 = arith.muli %arg0, %c1_i32 : i32
    %1 = arith.addi %0, %arg1 : i32
    %c0_i32 = arith.constant 0 : i32
    %2 = arith.minsi %1, %c0_i32 : i32
    %c0_i32_0 = arith.constant 0 : i32
    %c0_i32_1 = arith.constant 0 : i32
    return %2, %c0_i32_0 : i32, i32
  }
  func.func @transform_1(%arg0: i32, %arg1: i32) -> (i32, i32) {
    %c0_i32 = arith.constant 0 : i32
    %c0_i32_0 = arith.constant 0 : i32
    %c0_i32_1 = arith.constant 0 : i32
    return %c0_i32, %c0_i32_0 : i32, i32
  }
  func.func @transform_2(%arg0: i32, %arg1: i32) -> (i32, i32, i32) {
    %c0_i32 = arith.constant 0 : i32
    %c0_i32_0 = arith.constant 0 : i32
    %c0_i32_1 = arith.constant 0 : i32
    return %arg0, %c0_i32, %c0_i32_0 : i32, i32, i32
  }
}

</mosaic_0001>

<llo_original>
// kernel: cal_bpp.1
$region0: #{cal_bpp.1}
  #allocation0 [shape = 'u32[]', space=smem, size = 0x4, offset = 0x4, fixed_abs, tag = 'smem constant byte address 0x4 - core index']
  #allocation1 [shape = 'u32[72,128]{1,0:T(1,128)}', space=vmem, size = 0x9000, scoped, tag = 'internal scratch']
  #allocation2 [shape = 'f32[8,2048]{1,0:T(8,128)}', space=vmem, size = 0x10000, scoped, tag = 'scratch operand']
  %s0 = inlined_call_operand.vmem [shape: f32[32,2048], index: 0, kind: input, shape index: {}]
  %s1 = inlined_call_operand.vmem [shape: f32[16,2048], index: 1, kind: input, shape index: {}]
  %s2 = inlined_call_operand.vmem [shape: f32[1,1,2048], index: 2, kind: output, shape index: {}]
  %s3 = sld [smem:[#allocation0]]
  $region26: #{cal_bpp.1} parent=0
    _
  %s5 = ssub.s32 1, %s3
  %s6 = scalar_select 0, %s5, %s3
  // Predicated region
  $region2: #{cal_bpp.1} parent=0 // pred_check
    _
  $region3: #{cal_bpp.1} parent=0 // pred_check_branch
    %8 = sbr.rel (0) target = $region5
  $region4: #{cal_bpp.1} parent=0 // pred_region
    %s9 = sadd.s32 0, 0
    %p10 = scmp.lt.s32.totalorder %s9, 0
    %s11 = scalar_select %p10, %s9, 0
    %s12 = smul.u32 4, %s11
    %p13 = scmp.lt.s32.totalorder %s12, 3
    %s14 = scalar_select %p13, %s12, 3
    %s15 = smul.addr %s14, 16
    %s16 = smul.addr %s15, 8
    %s17 = scalar_lea.vmem %s0, %s16
    %s18 = sadd.s32 0, 0
    %p19 = scmp.lt.s32.totalorder %s18, 0
    %s20 = scalar_select %p19, %s18, 0
    %s21 = smul.u32 4, %s20
  $region5: #{cal_bpp.1} parent=0 // pred_fallthru
    _
  // Predicated region
  $region6: #{cal_bpp.1} parent=0 // pred_check
    _
  $region7: #{cal_bpp.1} parent=0 // pred_check_branch
    %23 = sbr.rel (0) target = $region9
  $region8: #{cal_bpp.1} parent=0 // pred_region
    _
  $region9: #{cal_bpp.1} parent=0 // pred_fallthru
    _
  %s24 = sadd.s32 0, 0
  %p25 = scmp.lt.s32.totalorder %s24, 0
  %s26 = scalar_select %p25, %s24, 0
  %s27 = smul.u32 4, %s26
  %p28 = scmp.lt.s32.totalorder %s27, 3
  %s29 = scalar_select %p28, %s27, 3
  %s30 = smul.addr %s29, 16
  %s31 = smul.addr %s30, 8
  %s32 = scalar_lea.vmem %s0, %s31
  %s33 = sadd.s32 0, 0
  %p34 = scmp.lt.s32.totalorder %s33, 0
  %s35 = scalar_select %p34, %s33, 0
  %s36 = smul.u32 4, %s35
  %p37 = scmp.lt.s32.totalorder %s36, 3
  %s38 = scalar_select %p37, %s36, 3
  %s39 = smul.addr %s38, 16
  %s40 = smul.addr %s39, 8
  %s41 = scalar_lea.vmem %s0, %s40
  %s42 = sadd.s32 0, 0
  %p43 = scmp.lt.s32.totalorder %s42, 0
  %s44 = scalar_select %p43, %s42, 0
  %s45 = smul.u32 4, %s44
  %p46 = scmp.eq.s32.totalorder 0, 0
  // Predicated region
  $region10: #{cal_bpp.1} parent=0 // pred_check
    %p47 = pneg %p46
  $region11: #{cal_bpp.1} parent=0 // pred_check_branch
    %49 = sbr.rel (%p47) target = $region13
  $region12: #{cal_bpp.1} parent=0 // pred_region
    %50 = vst [vmem:[#allocation2] sm:$0xff] 0.0
    %51 = vst [vmem:[#allocation2 + $0x8] sm:$0xff] 0.0
    %52 = vst [vmem:[#allocation2 + $0x10] sm:$0xff] 0.0
    %53 = vst [vmem:[#allocation2 + $0x18] sm:$0xff] 0.0
    %54 = vst [vmem:[#allocation2 + $0x20] sm:$0xff] 0.0
    %55 = vst [vmem:[#allocation2 + $0x28] sm:$0xff] 0.0
    %56 = vst [vmem:[#allocation2 + $0x30] sm:$0xff] 0.0
    %57 = vst [vmem:[#allocation2 + $0x38] sm:$0xff] 0.0
    %58 = vst [vmem:[#allocation2 + $0x40] sm:$0xff] 0.0
    %59 = vst [vmem:[#allocation2 + $0x48] sm:$0xff] 0.0
    %60 = vst [vmem:[#allocation2 + $0x50] sm:$0xff] 0.0
    %61 = vst [vmem:[#allocation2 + $0x58] sm:$0xff] 0.0
    %62 = vst [vmem:[#allocation2 + $0x60] sm:$0xff] 0.0
    %63 = vst [vmem:[#allocation2 + $0x68] sm:$0xff] 0.0
    %64 = vst [vmem:[#allocation2 + $0x70] sm:$0xff] 0.0
    %65 = vst [vmem:[#allocation2 + $0x78] sm:$0xff] 0.0
  $region13: #{cal_bpp.1} parent=0 // pred_fallthru
    _
  %v66 = vld [vmem:[%s1] sm:$0xff]
  %v67 = vld [vmem:[%s1 + $0x8] sm:$0xff]
  %v68 = vld [vmem:[%s1 + $0x10] sm:$0xff]
  %v69 = vld [vmem:[%s1 + $0x18] sm:$0xff]
  %v70 = vld [vmem:[%s1 + $0x20] sm:$0xff]
  %v71 = vld [vmem:[%s1 + $0x28] sm:$0xff]
  %v72 = vld [vmem:[%s1 + $0x30] sm:$0xff]
  %v73 = vld [vmem:[%s1 + $0x38] sm:$0xff]
  %v74 = vld [vmem:[%s1 + $0x40] sm:$0xff]
  %v75 = vld [vmem:[%s1 + $0x48] sm:$0xff]
  %v76 = vld [vmem:[%s1 + $0x50] sm:$0xff]
  %v77 = vld [vmem:[%s1 + $0x58] sm:$0xff]
  %v78 = vld [vmem:[%s1 + $0x60] sm:$0xff]
  %v79 = vld [vmem:[%s1 + $0x68] sm:$0xff]
  %v80 = vld [vmem:[%s1 + $0x70] sm:$0xff]
  %v81 = vld [vmem:[%s1 + $0x78] sm:$0xff]
  %v82 = vld [vmem:[%s1 + $0x80] sm:$0xff]
  %v83 = vld [vmem:[%s1 + $0x88] sm:$0xff]
  %v84 = vld [vmem:[%s1 + $0x90] sm:$0xff]
  %v85 = vld [vmem:[%s1 + $0x98] sm:$0xff]
  %v86 = vld [vmem:[%s1 + $0xa0] sm:$0xff]
  %v87 = vld [vmem:[%s1 + $0xa8] sm:$0xff]
  %v88 = vld [vmem:[%s1 + $0xb0] sm:$0xff]
  %v89 = vld [vmem:[%s1 + $0xb8] sm:$0xff]
  %v90 = vld [vmem:[%s1 + $0xc0] sm:$0xff]
  %v91 = vld [vmem:[%s1 + $0xc8] sm:$0xff]
  %v92 = vld [vmem:[%s1 + $0xd0] sm:$0xff]
  %v93 = vld [vmem:[%s1 + $0xd8] sm:$0xff]
  %v94 = vld [vmem:[%s1 + $0xe0] sm:$0xff]
  %v95 = vld [vmem:[%s1 + $0xe8] sm:$0xff]
  %v96 = vld [vmem:[%s1 + $0xf0] sm:$0xff]
  %v97 = vld [vmem:[%s1 + $0xf8] sm:$0xff]
  %v98 = vld [vmem:[%s41] sm:$0xff]
  %v99 = vld [vmem:[%s41 + $0x8] sm:$0xff]
  %v100 = vld [vmem:[%s41 + $0x10] sm:$0xff]
  %v101 = vld [vmem:[%s41 + $0x18] sm:$0xff]
  %v102 = vld [vmem:[%s41 + $0x20] sm:$0xff]
  %v103 = vld [vmem:[%s41 + $0x28] sm:$0xff]
  %v104 = vld [vmem:[%s41 + $0x30] sm:$0xff]
  %v105 = vld [vmem:[%s41 + $0x38] sm:$0xff]
  %v106 = vld [vmem:[%s41 + $0x40] sm:$0xff]
  %v107 = vld [vmem:[%s41 + $0x48] sm:$0xff]
  %v108 = vld [vmem:[%s41 + $0x50] sm:$0xff]
  %v109 = vld [vmem:[%s41 + $0x58] sm:$0xff]
  %v110 = vld [vmem:[%s41 + $0x60] sm:$0xff]
  %v111 = vld [vmem:[%s41 + $0x68] sm:$0xff]
  %v112 = vld [vmem:[%s41 + $0x70] sm:$0xff]
  %v113 = vld [vmem:[%s41 + $0x78] sm:$0xff]
  %v114 = vld [vmem:[%s41 + $0x80] sm:$0xff]
  %v115 = vld [vmem:[%s41 + $0x88] sm:$0xff]
  %v116 = vld [vmem:[%s41 + $0x90] sm:$0xff]
  %v117 = vld [vmem:[%s41 + $0x98] sm:$0xff]
  %v118 = vld [vmem:[%s41 + $0xa0] sm:$0xff]
  %v119 = vld [vmem:[%s41 + $0xa8] sm:$0xff]
  %v120 = vld [vmem:[%s41 + $0xb0] sm:$0xff]
  %v121 = vld [vmem:[%s41 + $0xb8] sm:$0xff]
  %v122 = vld [vmem:[%s41 + $0xc0] sm:$0xff]
  %v123 = vld [vmem:[%s41 + $0xc8] sm:$0xff]
  %v124 = vld [vmem:[%s41 + $0xd0] sm:$0xff]
  %v125 = vld [vmem:[%s41 + $0xd8] sm:$0xff]
  %v126 = vld [vmem:[%s41 + $0xe0] sm:$0xff]
  %v127 = vld [vmem:[%s41 + $0xe8] sm:$0xff]
  %v128 = vld [vmem:[%s41 + $0xf0] sm:$0xff]
  %v129 = vld [vmem:[%s41 + $0xf8] sm:$0xff]
  %v130 = vld [vmem:[%s41 + $0x100] sm:$0xff]
  %v131 = vld [vmem:[%s41 + $0x108] sm:$0xff]
  %v132 = vld [vmem:[%s41 + $0x110] sm:$0xff]
  %v133 = vld [vmem:[%s41 + $0x118] sm:$0xff]
  %v134 = vld [vmem:[%s41 + $0x120] sm:$0xff]
  %v135 = vld [vmem:[%s41 + $0x128] sm:$0xff]
  %v136 = vld [vmem:[%s41 + $0x130] sm:$0xff]
  %v137 = vld [vmem:[%s41 + $0x138] sm:$0xff]
  %v138 = vld [vmem:[%s41 + $0x140] sm:$0xff]
  %v139 = vld [vmem:[%s41 + $0x148] sm:$0xff]
  %v140 = vld [vmem:[%s41 + $0x150] sm:$0xff]
  %v141 = vld [vmem:[%s41 + $0x158] sm:$0xff]
  %v142 = vld [vmem:[%s41 + $0x160] sm:$0xff]
  %v143 = vld [vmem:[%s41 + $0x168] sm:$0xff]
  %v144 = vld [vmem:[%s41 + $0x170] sm:$0xff]
  %v145 = vld [vmem:[%s41 + $0x178] sm:$0xff]
  %v146 = vld [vmem:[%s41 + $0x180] sm:$0xff]
  %v147 = vld [vmem:[%s41 + $0x188] sm:$0xff]
  %v148 = vld [vmem:[%s41 + $0x190] sm:$0xff]
  %v149 = vld [vmem:[%s41 + $0x198] sm:$0xff]
  %v150 = vld [vmem:[%s41 + $0x1a0] sm:$0xff]
  %v151 = vld [vmem:[%s41 + $0x1a8] sm:$0xff]
  %v152 = vld [vmem:[%s41 + $0x1b0] sm:$0xff]
  %v153 = vld [vmem:[%s41 + $0x1b8] sm:$0xff]
  %v154 = vld [vmem:[%s41 + $0x1c0] sm:$0xff]
  %v155 = vld [vmem:[%s41 + $0x1c8] sm:$0xff]
  %v156 = vld [vmem:[%s41 + $0x1d0] sm:$0xff]
  %v157 = vld [vmem:[%s41 + $0x1d8] sm:$0xff]
  %v158 = vld [vmem:[%s41 + $0x1e0] sm:$0xff]
  %v159 = vld [vmem:[%s41 + $0x1e8] sm:$0xff]
  %v160 = vld [vmem:[%s41 + $0x1f0] sm:$0xff]
  %v161 = vld [vmem:[%s41 + $0x1f8] sm:$0xff]
  %v162 = vround.ne.pseudo %v98
  %v163 = vround.ne.pseudo %v99
  %v164 = vround.ne.pseudo %v100
  %v165 = vround.ne.pseudo %v101
  %v166 = vround.ne.pseudo %v102
  %v167 = vround.ne.pseudo %v103
  %v168 = vround.ne.pseudo %v104
  %v169 = vround.ne.pseudo %v105
  %v170 = vround.ne.pseudo %v106
  %v171 = vround.ne.pseudo %v107
  %v172 = vround.ne.pseudo %v108
  %v173 = vround.ne.pseudo %v109
  %v174 = vround.ne.pseudo %v110
  %v175 = vround.ne.pseudo %v111
  %v176 = vround.ne.pseudo %v112
  %v177 = vround.ne.pseudo %v113
  %v178 = vround.ne.pseudo %v114
  %v179 = vround.ne.pseudo %v115
  %v180 = vround.ne.pseudo %v116
  %v181 = vround.ne.pseudo %v117
  %v182 = vround.ne.pseudo %v118
  %v183 = vround.ne.pseudo %v119
  %v184 = vround.ne.pseudo %v120
  %v185 = vround.ne.pseudo %v121
  %v186 = vround.ne.pseudo %v122
  %v187 = vround.ne.pseudo %v123
  %v188 = vround.ne.pseudo %v124
  %v189 = vround.ne.pseudo %v125
  %v190 = vround.ne.pseudo %v126
  %v191 = vround.ne.pseudo %v127
  %v192 = vround.ne.pseudo %v128
  %v193 = vround.ne.pseudo %v129
  %v194 = vround.ne.pseudo %v130
  %v195 = vround.ne.pseudo %v131
  %v196 = vround.ne.pseudo %v132
  %v197 = vround.ne.pseudo %v133
  %v198 = vround.ne.pseudo %v134
  %v199 = vround.ne.pseudo %v135
  %v200 = vround.ne.pseudo %v136
  %v201 = vround.ne.pseudo %v137
  %v202 = vround.ne.pseudo %v138
  %v203 = vround.ne.pseudo %v139
  %v204 = vround.ne.pseudo %v140
  %v205 = vround.ne.pseudo %v141
  %v206 = vround.ne.pseudo %v142
  %v207 = vround.ne.pseudo %v143
  %v208 = vround.ne.pseudo %v144
  %v209 = vround.ne.pseudo %v145
  %v210 = vround.ne.pseudo %v146
  %v211 = vround.ne.pseudo %v147
  %v212 = vround.ne.pseudo %v148
  %v213 = vround.ne.pseudo %v149
  %v214 = vround.ne.pseudo %v150
  %v215 = vround.ne.pseudo %v151
  %v216 = vround.ne.pseudo %v152
  %v217 = vround.ne.pseudo %v153
  %v218 = vround.ne.pseudo %v154
  %v219 = vround.ne.pseudo %v155
  %v220 = vround.ne.pseudo %v156
  %v221 = vround.ne.pseudo %v157
  %v222 = vround.ne.pseudo %v158
  %v223 = vround.ne.pseudo %v159
  %v224 = vround.ne.pseudo %v160
  %v225 = vround.ne.pseudo %v161
  %v226 = vadd.f32 %v162, 0.5
  %v227 = vadd.f32 %v163, 0.5
  %v228 = vadd.f32 %v164, 0.5
  %v229 = vadd.f32 %v165, 0.5
  %v230 = vadd.f32 %v166, 0.5
  %v231 = vadd.f32 %v167, 0.5
  %v232 = vadd.f32 %v168, 0.5
  %v233 = vadd.f32 %v169, 0.5
  %v234 = vadd.f32 %v170, 0.5
  %v235 = vadd.f32 %v171, 0.5
  %v236 = vadd.f32 %v172, 0.5
  %v237 = vadd.f32 %v173, 0.5
  %v238 = vadd.f32 %v174, 0.5
  %v239 = vadd.f32 %v175, 0.5
  %v240 = vadd.f32 %v176, 0.5
  %v241 = vadd.f32 %v177, 0.5
  %v242 = vadd.f32 %v178, 0.5
  %v243 = vadd.f32 %v179, 0.5
  %v244 = vadd.f32 %v180, 0.5
  %v245 = vadd.f32 %v181, 0.5
  %v246 = vadd.f32 %v182, 0.5
  %v247 = vadd.f32 %v183, 0.5
  %v248 = vadd.f32 %v184, 0.5
  %v249 = vadd.f32 %v185, 0.5
  %v250 = vadd.f32 %v186, 0.5
  %v251 = vadd.f32 %v187, 0.5
  %v252 = vadd.f32 %v188, 0.5
  %v253 = vadd.f32 %v189, 0.5
  %v254 = vadd.f32 %v190, 0.5
  %v255 = vadd.f32 %v191, 0.5
  %v256 = vadd.f32 %v192, 0.5
  %v257 = vadd.f32 %v193, 0.5
  %v258 = vadd.f32 %v194, 0.5
  %v259 = vadd.f32 %v195, 0.5
  %v260 = vadd.f32 %v196, 0.5
  %v261 = vadd.f32 %v197, 0.5
  %v262 = vadd.f32 %v198, 0.5
  %v263 = vadd.f32 %v199, 0.5
  %v264 = vadd.f32 %v200, 0.5
  %v265 = vadd.f32 %v201, 0.5
  %v266 = vadd.f32 %v202, 0.5
  %v267 = vadd.f32 %v203, 0.5
  %v268 = vadd.f32 %v204, 0.5
  %v269 = vadd.f32 %v205, 0.5
  %v270 = vadd.f32 %v206, 0.5
  %v271 = vadd.f32 %v207, 0.5
  %v272 = vadd.f32 %v208, 0.5
  %v273 = vadd.f32 %v209, 0.5
  %v274 = vadd.f32 %v210, 0.5
  %v275 = vadd.f32 %v211, 0.5
  %v276 = vadd.f32 %v212, 0.5
  %v277 = vadd.f32 %v213, 0.5
  %v278 = vadd.f32 %v214, 0.5
  %v279 = vadd.f32 %v215, 0.5
  %v280 = vadd.f32 %v216, 0.5
  %v281 = vadd.f32 %v217, 0.5
  %v282 = vadd.f32 %v218, 0.5
  %v283 = vadd.f32 %v219, 0.5
  %v284 = vadd.f32 %v220, 0.5
  %v285 = vadd.f32 %v221, 0.5
  %v286 = vadd.f32 %v222, 0.5
  %v287 = vadd.f32 %v223, 0.5
  %v288 = vadd.f32 %v224, 0.5
  %v289 = vadd.f32 %v225, 0.5
  %v290 = vperm.slane %v66, 0
  %v291 = vperm.slane %v67, 0
  %v292 = vperm.slane %v68, 0
  %v293 = vperm.slane %v69, 0
  %v294 = vperm.slane %v70, 0
  %v295 = vperm.slane %v71, 0
  %v296 = vperm.slane %v72, 0
  %v297 = vperm.slane %v73, 0
  %v298 = vperm.slane %v74, 0
  %v299 = vperm.slane %v75, 0
  %v300 = vperm.slane %v76, 0
  %v301 = vperm.slane %v77, 0
  %v302 = vperm.slane %v78, 0
  %v303 = vperm.slane %v79, 0
  %v304 = vperm.slane %v80, 0
  %v305 = vperm.slane %v81, 0
  %v306 = vmul.f32 %v226, %v290
  %v307 = vmul.f32 %v227, %v291
  %v308 = vmul.f32 %v228, %v292
  %v309 = vmul.f32 %v229, %v293
  %v310 = vmul.f32 %v230, %v294
  %v311 = vmul.f32 %v231, %v295
  %v312 = vmul.f32 %v232, %v296
  %v313 = vmul.f32 %v233, %v297
  %v314 = vmul.f32 %v234, %v298
  %v315 = vmul.f32 %v235, %v299
  %v316 = vmul.f32 %v236, %v300
  %v317 = vmul.f32 %v237, %v301
  %v318 = vmul.f32 %v238, %v302
  %v319 = vmul.f32 %v239, %v303
  %v320 = vmul.f32 %v240, %v304
  %v321 = vmul.f32 %v241, %v305
  %v322 = vmul.f32 %v242, %v290
  %v323 = vmul.f32 %v243, %v291
  %v324 = vmul.f32 %v244, %v292
  %v325 = vmul.f32 %v245, %v293
  %v326 = vmul.f32 %v246, %v294
  %v327 = vmul.f32 %v247, %v295
  %v328 = vmul.f32 %v248, %v296
  %v329 = vmul.f32 %v249, %v297
  %v330 = vmul.f32 %v250, %v298
  %v331 = vmul.f32 %v251, %v299
  %v332 = vmul.f32 %v252, %v300
  %v333 = vmul.f32 %v253, %v301
  %v334 = vmul.f32 %v254, %v302
  %v335 = vmul.f32 %v255, %v303
  %v336 = vmul.f32 %v256, %v304
  %v337 = vmul.f32 %v257, %v305
  %v338 = vmul.f32 %v258, %v290
  %v339 = vmul.f32 %v259, %v291
  %v340 = vmul.f32 %v260, %v292
  %v341 = vmul.f32 %v261, %v293
  %v342 = vmul.f32 %v262, %v294
  %v343 = vmul.f32 %v263, %v295
  %v344 = vmul.f32 %v264, %v296
  %v345 = vmul.f32 %v265, %v297
  %v346 = vmul.f32 %v266, %v298
  %v347 = vmul.f32 %v267, %v299
  %v348 = vmul.f32 %v268, %v300
  %v349 = vmul.f32 %v269, %v301
  %v350 = vmul.f32 %v270, %v302
  %v351 = vmul.f32 %v271, %v303
  %v352 = vmul.f32 %v272, %v304
  %v353 = vmul.f32 %v273, %v305
  %v354 = vmul.f32 %v274, %v290
  %v355 = vmul.f32 %v275, %v291
  %v356 = vmul.f32 %v276, %v292
  %v357 = vmul.f32 %v277, %v293
  %v358 = vmul.f32 %v278, %v294
  %v359 = vmul.f32 %v279, %v295
  %v360 = vmul.f32 %v280, %v296
  %v361 = vmul.f32 %v281, %v297
  %v362 = vmul.f32 %v282, %v298
  %v363 = vmul.f32 %v283, %v299
  %v364 = vmul.f32 %v284, %v300
  %v365 = vmul.f32 %v285, %v301
  %v366 = vmul.f32 %v286, %v302
  %v367 = vmul.f32 %v287, %v303
  %v368 = vmul.f32 %v288, %v304
  %v369 = vmul.f32 %v289, %v305
  %v370 = vperm.slane %v66, 1
  %v371 = vperm.slane %v67, 1
  %v372 = vperm.slane %v68, 1
  %v373 = vperm.slane %v69, 1
  %v374 = vperm.slane %v70, 1
  %v375 = vperm.slane %v71, 1
  %v376 = vperm.slane %v72, 1
  %v377 = vperm.slane %v73, 1
  %v378 = vperm.slane %v74, 1
  %v379 = vperm.slane %v75, 1
  %v380 = vperm.slane %v76, 1
  %v381 = vperm.slane %v77, 1
  %v382 = vperm.slane %v78, 1
  %v383 = vperm.slane %v79, 1
  %v384 = vperm.slane %v80, 1
  %v385 = vperm.slane %v81, 1
  %v386 = vadd.f32 %v306, %v370
  %v387 = vadd.f32 %v307, %v371
  %v388 = vadd.f32 %v308, %v372
  %v389 = vadd.f32 %v309, %v373
  %v390 = vadd.f32 %v310, %v374
  %v391 = vadd.f32 %v311, %v375
  %v392 = vadd.f32 %v312, %v376
  %v393 = vadd.f32 %v313, %v377
  %v394 = vadd.f32 %v314, %v378
  %v395 = vadd.f32 %v315, %v379
  %v396 = vadd.f32 %v316, %v380
  %v397 = vadd.f32 %v317, %v381
  %v398 = vadd.f32 %v318, %v382
  %v399 = vadd.f32 %v319, %v383
  %v400 = vadd.f32 %v320, %v384
  %v401 = vadd.f32 %v321, %v385
  %v402 = vadd.f32 %v322, %v370
  %v403 = vadd.f32 %v323, %v371
  %v404 = vadd.f32 %v324, %v372
  %v405 = vadd.f32 %v325, %v373
  %v406 = vadd.f32 %v326, %v374
  %v407 = vadd.f32 %v327, %v375
  %v408 = vadd.f32 %v328, %v376
  %v409 = vadd.f32 %v329, %v377
  %v410 = vadd.f32 %v330, %v378
  %v411 = vadd.f32 %v331, %v379
  %v412 = vadd.f32 %v332, %v380
  %v413 = vadd.f32 %v333, %v381
  %v414 = vadd.f32 %v334, %v382
  %v415 = vadd.f32 %v335, %v383
  %v416 = vadd.f32 %v336, %v384
  %v417 = vadd.f32 %v337, %v385
  %v418 = vadd.f32 %v338, %v370
  %v419 = vadd.f32 %v339, %v371
  %v420 = vadd.f32 %v340, %v372
  %v421 = vadd.f32 %v341, %v373
  %v422 = vadd.f32 %v342, %v374
  %v423 = vadd.f32 %v343, %v375
  %v424 = vadd.f32 %v344, %v376
  %v425 = vadd.f32 %v345, %v377
  %v426 = vadd.f32 %v346, %v378
  %v427 = vadd.f32 %v347, %v379
  %v428 = vadd.f32 %v348, %v380
  %v429 = vadd.f32 %v349, %v381
  %v430 = vadd.f32 %v350, %v382
  %v431 = vadd.f32 %v351, %v383
  %v432 = vadd.f32 %v352, %v384
  %v433 = vadd.f32 %v353, %v385
  %v434 = vadd.f32 %v354, %v370
  %v435 = vadd.f32 %v355, %v371
  %v436 = vadd.f32 %v356, %v372
  %v437 = vadd.f32 %v357, %v373
  %v438 = vadd.f32 %v358, %v374
  %v439 = vadd.f32 %v359, %v375
  %v440 = vadd.f32 %v360, %v376
  %v441 = vadd.f32 %v361, %v377
  %v442 = vadd.f32 %v362, %v378
  %v443 = vadd.f32 %v363, %v379
  %v444 = vadd.f32 %v364, %v380
  %v445 = vadd.f32 %v365, %v381
  %v446 = vadd.f32 %v366, %v382
  %v447 = vadd.f32 %v367, %v383
  %v448 = vadd.f32 %v368, %v384
  %v449 = vadd.f32 %v369, %v385
  %v450 = vtanh.pop %v386
  %v451 = vtanh.pop %v387
  %v452 = vtanh.pop %v388
  %v453 = vtanh.pop %v389
  %v454 = vtanh.pop %v390
  %v455 = vtanh.pop %v391
  %v456 = vtanh.pop %v392
  %v457 = vtanh.pop %v393
  %v458 = vtanh.pop %v394
  %v459 = vtanh.pop %v395
  %v460 = vtanh.pop %v396
  %v461 = vtanh.pop %v397
  %v462 = vtanh.pop %v398
  %v463 = vtanh.pop %v399
  %v464 = vtanh.pop %v400
  %v465 = vtanh.pop %v401
  %v466 = vtanh.pop %v402
  %v467 = vtanh.pop %v403
  %v468 = vtanh.pop %v404
  %v469 = vtanh.pop %v405
  %v470 = vtanh.pop %v406
  %v471 = vtanh.pop %v407
  %v472 = vtanh.pop %v408
  %v473 = vtanh.pop %v409
  %v474 = vtanh.pop %v410
  %v475 = vtanh.pop %v411
  %v476 = vtanh.pop %v412
  %v477 = vtanh.pop %v413
  %v478 = vtanh.pop %v414
  %v479 = vtanh.pop %v415
  %v480 = vtanh.pop %v416
  %v481 = vtanh.pop %v417
  %v482 = vtanh.pop %v418
  %v483 = vtanh.pop %v419
  %v484 = vtanh.pop %v420
  %v485 = vtanh.pop %v421
  %v486 = vtanh.pop %v422
  %v487 = vtanh.pop %v423
  %v488 = vtanh.pop %v424
  %v489 = vtanh.pop %v425
  %v490 = vtanh.pop %v426
  %v491 = vtanh.pop %v427
  %v492 = vtanh.pop %v428
  %v493 = vtanh.pop %v429
  %v494 = vtanh.pop %v430
  %v495 = vtanh.pop %v431
  %v496 = vtanh.pop %v432
  %v497 = vtanh.pop %v433
  %v498 = vtanh.pop %v434
  %v499 = vtanh.pop %v435
  %v500 = vtanh.pop %v436
  %v501 = vtanh.pop %v437
  %v502 = vtanh.pop %v438
  %v503 = vtanh.pop %v439
  %v504 = vtanh.pop %v440
  %v505 = vtanh.pop %v441
  %v506 = vtanh.pop %v442
  %v507 = vtanh.pop %v443
  %v508 = vtanh.pop %v444
  %v509 = vtanh.pop %v445
  %v510 = vtanh.pop %v446
  %v511 = vtanh.pop %v447
  %v512 = vtanh.pop %v448
  %v513 = vtanh.pop %v449
  %v514 = vperm.slane %v66, 2
  %v515 = vperm.slane %v67, 2
  %v516 = vperm.slane %v68, 2
  %v517 = vperm.slane %v69, 2
  %v518 = vperm.slane %v70, 2
  %v519 = vperm.slane %v71, 2
  %v520 = vperm.slane %v72, 2
  %v521 = vperm.slane %v73, 2
  %v522 = vperm.slane %v74, 2
  %v523 = vperm.slane %v75, 2
  %v524 = vperm.slane %v76, 2
  %v525 = vperm.slane %v77, 2
  %v526 = vperm.slane %v78, 2
  %v527 = vperm.slane %v79, 2
  %v528 = vperm.slane %v80, 2
  %v529 = vperm.slane %v81, 2
  %v530 = vmul.f32 %v450, %v514
  %v531 = vmul.f32 %v451, %v515
  %v532 = vmul.f32 %v452, %v516
  %v533 = vmul.f32 %v453, %v517
  %v534 = vmul.f32 %v454, %v518
  %v535 = vmul.f32 %v455, %v519
  %v536 = vmul.f32 %v456, %v520
  %v537 = vmul.f32 %v457, %v521
  %v538 = vmul.f32 %v458, %v522
  %v539 = vmul.f32 %v459, %v523
  %v540 = vmul.f32 %v460, %v524
  %v541 = vmul.f32 %v461, %v525
  %v542 = vmul.f32 %v462, %v526
  %v543 = vmul.f32 %v463, %v527
  %v544 = vmul.f32 %v464, %v528
  %v545 = vmul.f32 %v465, %v529
  %v546 = vmul.f32 %v466, %v514
  %v547 = vmul.f32 %v467, %v515
  %v548 = vmul.f32 %v468, %v516
  %v549 = vmul.f32 %v469, %v517
  %v550 = vmul.f32 %v470, %v518
  %v551 = vmul.f32 %v471, %v519
  %v552 = vmul.f32 %v472, %v520
  %v553 = vmul.f32 %v473, %v521
  %v554 = vmul.f32 %v474, %v522
  %v555 = vmul.f32 %v475, %v523
  %v556 = vmul.f32 %v476, %v524
  %v557 = vmul.f32 %v477, %v525
  %v558 = vmul.f32 %v478, %v526
  %v559 = vmul.f32 %v479, %v527
  %v560 = vmul.f32 %v480, %v528
  %v561 = vmul.f32 %v481, %v529
  %v562 = vmul.f32 %v482, %v514
  %v563 = vmul.f32 %v483, %v515
  %v564 = vmul.f32 %v484, %v516
  %v565 = vmul.f32 %v485, %v517
  %v566 = vmul.f32 %v486, %v518
  %v567 = vmul.f32 %v487, %v519
  %v568 = vmul.f32 %v488, %v520
  %v569 = vmul.f32 %v489, %v521
  %v570 = vmul.f32 %v490, %v522
  %v571 = vmul.f32 %v491, %v523
  %v572 = vmul.f32 %v492, %v524
  %v573 = vmul.f32 %v493, %v525
  %v574 = vmul.f32 %v494, %v526
  %v575 = vmul.f32 %v495, %v527
  %v576 = vmul.f32 %v496, %v528
  %v577 = vmul.f32 %v497, %v529
  %v578 = vmul.f32 %v498, %v514
  %v579 = vmul.f32 %v499, %v515
  %v580 = vmul.f32 %v500, %v516
  %v581 = vmul.f32 %v501, %v517
  %v582 = vmul.f32 %v502, %v518
  %v583 = vmul.f32 %v503, %v519
  %v584 = vmul.f32 %v504, %v520
  %v585 = vmul.f32 %v505, %v521
  %v586 = vmul.f32 %v506, %v522
  %v587 = vmul.f32 %v507, %v523
  %v588 = vmul.f32 %v508, %v524
  %v589 = vmul.f32 %v509, %v525
  %v590 = vmul.f32 %v510, %v526
  %v591 = vmul.f32 %v511, %v527
  %v592 = vmul.f32 %v512, %v528
  %v593 = vmul.f32 %v513, %v529
  %v594 = vadd.f32 %v386, %v530
  %v595 = vadd.f32 %v387, %v531
  %v596 = vadd.f32 %v388, %v532
  %v597 = vadd.f32 %v389, %v533
  %v598 = vadd.f32 %v390, %v534
  %v599 = vadd.f32 %v391, %v535
  %v600 = vadd.f32 %v392, %v536
  %v601 = vadd.f32 %v393, %v537
  %v602 = vadd.f32 %v394, %v538
  %v603 = vadd.f32 %v395, %v539
  %v604 = vadd.f32 %v396, %v540
  %v605 = vadd.f32 %v397, %v541
  %v606 = vadd.f32 %v398, %v542
  %v607 = vadd.f32 %v399, %v543
  %v608 = vadd.f32 %v400, %v544
  %v609 = vadd.f32 %v401, %v545
  %v610 = vadd.f32 %v402, %v546
  %v611 = vadd.f32 %v403, %v547
  %v612 = vadd.f32 %v404, %v548
  %v613 = vadd.f32 %v405, %v549
  %v614 = vadd.f32 %v406, %v550
  %v615 = vadd.f32 %v407, %v551
  %v616 = vadd.f32 %v408, %v552
  %v617 = vadd.f32 %v409, %v553
  %v618 = vadd.f32 %v410, %v554
  %v619 = vadd.f32 %v411, %v555
  %v620 = vadd.f32 %v412, %v556
  %v621 = vadd.f32 %v413, %v557
  %v622 = vadd.f32 %v414, %v558
  %v623 = vadd.f32 %v415, %v559
  %v624 = vadd.f32 %v416, %v560
  %v625 = vadd.f32 %v417, %v561
  %v626 = vadd.f32 %v418, %v562
  %v627 = vadd.f32 %v419, %v563
  %v628 = vadd.f32 %v420, %v564
  %v629 = vadd.f32 %v421, %v565
  %v630 = vadd.f32 %v422, %v566
  %v631 = vadd.f32 %v423, %v567
  %v632 = vadd.f32 %v424, %v568
  %v633 = vadd.f32 %v425, %v569
  %v634 = vadd.f32 %v426, %v570
  %v635 = vadd.f32 %v427, %v571
  %v636 = vadd.f32 %v428, %v572
  %v637 = vadd.f32 %v429, %v573
  %v638 = vadd.f32 %v430, %v574
  %v639 = vadd.f32 %v431, %v575
  %v640 = vadd.f32 %v432, %v576
  %v641 = vadd.f32 %v433, %v577
  %v642 = vadd.f32 %v434, %v578
  %v643 = vadd.f32 %v435, %v579
  %v644 = vadd.f32 %v436, %v580
  %v645 = vadd.f32 %v437, %v581
  %v646 = vadd.f32 %v438, %v582
  %v647 = vadd.f32 %v439, %v583
  %v648 = vadd.f32 %v440, %v584
  %v649 = vadd.f32 %v441, %v585
  %v650 = vadd.f32 %v442, %v586
  %v651 = vadd.f32 %v443, %v587
  %v652 = vadd.f32 %v444, %v588
  %v653 = vadd.f32 %v445, %v589
  %v654 = vadd.f32 %v446, %v590
  %v655 = vadd.f32 %v447, %v591
  %v656 = vadd.f32 %v448, %v592
  %v657 = vadd.f32 %v449, %v593
  %v658 = vperm.slane %v66, 3
  %v659 = vperm.slane %v67, 3
  %v660 = vperm.slane %v68, 3
  %v661 = vperm.slane %v69, 3
  %v662 = vperm.slane %v70, 3
  %v663 = vperm.slane %v71, 3
  %v664 = vperm.slane %v72, 3
  %v665 = vperm.slane %v73, 3
  %v666 = vperm.slane %v74, 3
  %v667 = vperm.slane %v75, 3
  %v668 = vperm.slane %v76, 3
  %v669 = vperm.slane %v77, 3
  %v670 = vperm.slane %v78, 3
  %v671 = vperm.slane %v79, 3
  %v672 = vperm.slane %v80, 3
  %v673 = vperm.slane %v81, 3
  %v674 = vmul.f32 %v594, %v658
  %v675 = vmul.f32 %v595, %v659
  %v676 = vmul.f32 %v596, %v660
  %v677 = vmul.f32 %v597, %v661
  %v678 = vmul.f32 %v598, %v662
  %v679 = vmul.f32 %v599, %v663
  %v680 = vmul.f32 %v600, %v664
  %v681 = vmul.f32 %v601, %v665
  %v682 = vmul.f32 %v602, %v666
  %v683 = vmul.f32 %v603, %v667
  %v684 = vmul.f32 %v604, %v668
  %v685 = vmul.f32 %v605, %v669
  %v686 = vmul.f32 %v606, %v670
  %v687 = vmul.f32 %v607, %v671
  %v688 = vmul.f32 %v608, %v672
  %v689 = vmul.f32 %v609, %v673
  %v690 = vmul.f32 %v610, %v658
  %v691 = vmul.f32 %v611, %v659
  %v692 = vmul.f32 %v612, %v660
  %v693 = vmul.f32 %v613, %v661
  %v694 = vmul.f32 %v614, %v662
  %v695 = vmul.f32 %v615, %v663
  %v696 = vmul.f32 %v616, %v664
  %v697 = vmul.f32 %v617, %v665
  %v698 = vmul.f32 %v618, %v666
  %v699 = vmul.f32 %v619, %v667
  %v700 = vmul.f32 %v620, %v668
  %v701 = vmul.f32 %v621, %v669
  %v702 = vmul.f32 %v622, %v670
  %v703 = vmul.f32 %v623, %v671
  %v704 = vmul.f32 %v624, %v672
  %v705 = vmul.f32 %v625, %v673
  %v706 = vmul.f32 %v626, %v658
  %v707 = vmul.f32 %v627, %v659
  %v708 = vmul.f32 %v628, %v660
  %v709 = vmul.f32 %v629, %v661
  %v710 = vmul.f32 %v630, %v662
  %v711 = vmul.f32 %v631, %v663
  %v712 = vmul.f32 %v632, %v664
  %v713 = vmul.f32 %v633, %v665
  %v714 = vmul.f32 %v634, %v666
  %v715 = vmul.f32 %v635, %v667
  %v716 = vmul.f32 %v636, %v668
  %v717 = vmul.f32 %v637, %v669
  %v718 = vmul.f32 %v638, %v670
  %v719 = vmul.f32 %v639, %v671
  %v720 = vmul.f32 %v640, %v672
  %v721 = vmul.f32 %v641, %v673
  %v722 = vmul.f32 %v642, %v658
  %v723 = vmul.f32 %v643, %v659
  %v724 = vmul.f32 %v644, %v660
  %v725 = vmul.f32 %v645, %v661
  %v726 = vmul.f32 %v646, %v662
  %v727 = vmul.f32 %v647, %v663
  %v728 = vmul.f32 %v648, %v664
  %v729 = vmul.f32 %v649, %v665
  %v730 = vmul.f32 %v650, %v666
  %v731 = vmul.f32 %v651, %v667
  %v732 = vmul.f32 %v652, %v668
  %v733 = vmul.f32 %v653, %v669
  %v734 = vmul.f32 %v654, %v670
  %v735 = vmul.f32 %v655, %v671
  %v736 = vmul.f32 %v656, %v672
  %v737 = vmul.f32 %v657, %v673
  %v738 = vperm.slane %v66, 4
  %v739 = vperm.slane %v67, 4
  %v740 = vperm.slane %v68, 4
  %v741 = vperm.slane %v69, 4
  %v742 = vperm.slane %v70, 4
  %v743 = vperm.slane %v71, 4
  %v744 = vperm.slane %v72, 4
  %v745 = vperm.slane %v73, 4
  %v746 = vperm.slane %v74, 4
  %v747 = vperm.slane %v75, 4
  %v748 = vperm.slane %v76, 4
  %v749 = vperm.slane %v77, 4
  %v750 = vperm.slane %v78, 4
  %v751 = vperm.slane %v79, 4
  %v752 = vperm.slane %v80, 4
  %v753 = vperm.slane %v81, 4
  %v754 = vadd.f32 %v674, %v738
  %v755 = vadd.f32 %v675, %v739
  %v756 = vadd.f32 %v676, %v740
  %v757 = vadd.f32 %v677, %v741
  %v758 = vadd.f32 %v678, %v742
  %v759 = vadd.f32 %v679, %v743
  %v760 = vadd.f32 %v680, %v744
  %v761 = vadd.f32 %v681, %v745
  %v762 = vadd.f32 %v682, %v746
  %v763 = vadd.f32 %v683, %v747
  %v764 = vadd.f32 %v684, %v748
  %v765 = vadd.f32 %v685, %v749
  %v766 = vadd.f32 %v686, %v750
  %v767 = vadd.f32 %v687, %v751
  %v768 = vadd.f32 %v688, %v752
  %v769 = vadd.f32 %v689, %v753
  %v770 = vadd.f32 %v690, %v738
  %v771 = vadd.f32 %v691, %v739
  %v772 = vadd.f32 %v692, %v740
  %v773 = vadd.f32 %v693, %v741
  %v774 = vadd.f32 %v694, %v742
  %v775 = vadd.f32 %v695, %v743
  %v776 = vadd.f32 %v696, %v744
  %v777 = vadd.f32 %v697, %v745
  %v778 = vadd.f32 %v698, %v746
  %v779 = vadd.f32 %v699, %v747
  %v780 = vadd.f32 %v700, %v748
  %v781 = vadd.f32 %v701, %v749
  %v782 = vadd.f32 %v702, %v750
  %v783 = vadd.f32 %v703, %v751
  %v784 = vadd.f32 %v704, %v752
  %v785 = vadd.f32 %v705, %v753
  %v786 = vadd.f32 %v706, %v738
  %v787 = vadd.f32 %v707, %v739
  %v788 = vadd.f32 %v708, %v740
  %v789 = vadd.f32 %v709, %v741
  %v790 = vadd.f32 %v710, %v742
  %v791 = vadd.f32 %v711, %v743
  %v792 = vadd.f32 %v712, %v744
  %v793 = vadd.f32 %v713, %v745
  %v794 = vadd.f32 %v714, %v746
  %v795 = vadd.f32 %v715, %v747
  %v796 = vadd.f32 %v716, %v748
  %v797 = vadd.f32 %v717, %v749
  %v798 = vadd.f32 %v718, %v750
  %v799 = vadd.f32 %v719, %v751
  %v800 = vadd.f32 %v720, %v752
  %v801 = vadd.f32 %v721, %v753
  %v802 = vadd.f32 %v722, %v738
  %v803 = vadd.f32 %v723, %v739
  %v804 = vadd.f32 %v724, %v740
  %v805 = vadd.f32 %v725, %v741
  %v806 = vadd.f32 %v726, %v742
  %v807 = vadd.f32 %v727, %v743
  %v808 = vadd.f32 %v728, %v744
  %v809 = vadd.f32 %v729, %v745
  %v810 = vadd.f32 %v730, %v746
  %v811 = vadd.f32 %v731, %v747
  %v812 = vadd.f32 %v732, %v748
  %v813 = vadd.f32 %v733, %v749
  %v814 = vadd.f32 %v734, %v750
  %v815 = vadd.f32 %v735, %v751
  %v816 = vadd.f32 %v736, %v752
  %v817 = vadd.f32 %v737, %v753
  %v818 = vtanh.pop %v754
  %v819 = vtanh.pop %v755
  %v820 = vtanh.pop %v756
  %v821 = vtanh.pop %v757
  %v822 = vtanh.pop %v758
  %v823 = vtanh.pop %v759
  %v824 = vtanh.pop %v760
  %v825 = vtanh.pop %v761
  %v826 = vtanh.pop %v762
  %v827 = vtanh.pop %v763
  %v828 = vtanh.pop %v764
  %v829 = vtanh.pop %v765
  %v830 = vtanh.pop %v766
  %v831 = vtanh.pop %v767
  %v832 = vtanh.pop %v768
  %v833 = vtanh.pop %v769
  %v834 = vtanh.pop %v770
  %v835 = vtanh.pop %v771
  %v836 = vtanh.pop %v772
  %v837 = vtanh.pop %v773
  %v838 = vtanh.pop %v774
  %v839 = vtanh.pop %v775
  %v840 = vtanh.pop %v776
  %v841 = vtanh.pop %v777
  %v842 = vtanh.pop %v778
  %v843 = vtanh.pop %v779
  %v844 = vtanh.pop %v780
  %v845 = vtanh.pop %v781
  %v846 = vtanh.pop %v782
  %v847 = vtanh.pop %v783
  %v848 = vtanh.pop %v784
  %v849 = vtanh.pop %v785
  %v850 = vtanh.pop %v786
  %v851 = vtanh.pop %v787
  %v852 = vtanh.pop %v788
  %v853 = vtanh.pop %v789
  %v854 = vtanh.pop %v790
  %v855 = vtanh.pop %v791
  %v856 = vtanh.pop %v792
  %v857 = vtanh.pop %v793
  %v858 = vtanh.pop %v794
  %v859 = vtanh.pop %v795
  %v860 = vtanh.pop %v796
  %v861 = vtanh.pop %v797
  %v862 = vtanh.pop %v798
  %v863 = vtanh.pop %v799
  %v864 = vtanh.pop %v800
  %v865 = vtanh.pop %v801
  %v866 = vtanh.pop %v802
  %v867 = vtanh.pop %v803
  %v868 = vtanh.pop %v804
  %v869 = vtanh.pop %v805
  %v870 = vtanh.pop %v806
  %v871 = vtanh.pop %v807
  %v872 = vtanh.pop %v808
  %v873 = vtanh.pop %v809
  %v874 = vtanh.pop %v810
  %v875 = vtanh.pop %v811
  %v876 = vtanh.pop %v812
  %v877 = vtanh.pop %v813
  %v878 = vtanh.pop %v814
  %v879 = vtanh.pop %v815
  %v880 = vtanh.pop %v816
  %v881 = vtanh.pop %v817
  %v882 = vperm.slane %v66, 5
  %v883 = vperm.slane %v67, 5
  %v884 = vperm.slane %v68, 5
  %v885 = vperm.slane %v69, 5
  %v886 = vperm.slane %v70, 5
  %v887 = vperm.slane %v71, 5
  %v888 = vperm.slane %v72, 5
  %v889 = vperm.slane %v73, 5
  %v890 = vperm.slane %v74, 5
  %v891 = vperm.slane %v75, 5
  %v892 = vperm.slane %v76, 5
  %v893 = vperm.slane %v77, 5
  %v894 = vperm.slane %v78, 5
  %v895 = vperm.slane %v79, 5
  %v896 = vperm.slane %v80, 5
  %v897 = vperm.slane %v81, 5
  %v898 = vmul.f32 %v818, %v882
  %v899 = vmul.f32 %v819, %v883
  %v900 = vmul.f32 %v820, %v884
  %v901 = vmul.f32 %v821, %v885
  %v902 = vmul.f32 %v822, %v886
  %v903 = vmul.f32 %v823, %v887
  %v904 = vmul.f32 %v824, %v888
  %v905 = vmul.f32 %v825, %v889
  %v906 = vmul.f32 %v826, %v890
  %v907 = vmul.f32 %v827, %v891
  %v908 = vmul.f32 %v828, %v892
  %v909 = vmul.f32 %v829, %v893
  %v910 = vmul.f32 %v830, %v894
  %v911 = vmul.f32 %v831, %v895
  %v912 = vmul.f32 %v832, %v896
  %v913 = vmul.f32 %v833, %v897
  %v914 = vmul.f32 %v834, %v882
  %v915 = vmul.f32 %v835, %v883
  %v916 = vmul.f32 %v836, %v884
  %v917 = vmul.f32 %v837, %v885
  %v918 = vmul.f32 %v838, %v886
  %v919 = vmul.f32 %v839, %v887
  %v920 = vmul.f32 %v840, %v888
  %v921 = vmul.f32 %v841, %v889
  %v922 = vmul.f32 %v842, %v890
  %v923 = vmul.f32 %v843, %v891
  %v924 = vmul.f32 %v844, %v892
  %v925 = vmul.f32 %v845, %v893
  %v926 = vmul.f32 %v846, %v894
  %v927 = vmul.f32 %v847, %v895
  %v928 = vmul.f32 %v848, %v896
  %v929 = vmul.f32 %v849, %v897
  %v930 = vmul.f32 %v850, %v882
  %v931 = vmul.f32 %v851, %v883
  %v932 = vmul.f32 %v852, %v884
  %v933 = vmul.f32 %v853, %v885
  %v934 = vmul.f32 %v854, %v886
  %v935 = vmul.f32 %v855, %v887
  %v936 = vmul.f32 %v856, %v888
  %v937 = vmul.f32 %v857, %v889
  %v938 = vmul.f32 %v858, %v890
  %v939 = vmul.f32 %v859, %v891
  %v940 = vmul.f32 %v860, %v892
  %v941 = vmul.f32 %v861, %v893
  %v942 = vmul.f32 %v862, %v894
  %v943 = vmul.f32 %v863, %v895
  %v944 = vmul.f32 %v864, %v896
  %v945 = vmul.f32 %v865, %v897
  %v946 = vmul.f32 %v866, %v882
  %v947 = vmul.f32 %v867, %v883
  %v948 = vmul.f32 %v868, %v884
  %v949 = vmul.f32 %v869, %v885
  %v950 = vmul.f32 %v870, %v886
  %v951 = vmul.f32 %v871, %v887
  %v952 = vmul.f32 %v872, %v888
  %v953 = vmul.f32 %v873, %v889
  %v954 = vmul.f32 %v874, %v890
  %v955 = vmul.f32 %v875, %v891
  %v956 = vmul.f32 %v876, %v892
  %v957 = vmul.f32 %v877, %v893
  %v958 = vmul.f32 %v878, %v894
  %v959 = vmul.f32 %v879, %v895
  %v960 = vmul.f32 %v880, %v896
  %v961 = vmul.f32 %v881, %v897
  %v962 = vadd.f32 %v754, %v898
  %v963 = vadd.f32 %v755, %v899
  %v964 = vadd.f32 %v756, %v900
  %v965 = vadd.f32 %v757, %v901
  %v966 = vadd.f32 %v758, %v902
  %v967 = vadd.f32 %v759, %v903
  %v968 = vadd.f32 %v760, %v904
  %v969 = vadd.f32 %v761, %v905
  %v970 = vadd.f32 %v762, %v906
  %v971 = vadd.f32 %v763, %v907
  %v972 = vadd.f32 %v764, %v908
  %v973 = vadd.f32 %v765, %v909
  %v974 = vadd.f32 %v766, %v910
  %v975 = vadd.f32 %v767, %v911
  %v976 = vadd.f32 %v768, %v912
  %v977 = vadd.f32 %v769, %v913
  %v978 = vadd.f32 %v770, %v914
  %v979 = vadd.f32 %v771, %v915
  %v980 = vadd.f32 %v772, %v916
  %v981 = vadd.f32 %v773, %v917
  %v982 = vadd.f32 %v774, %v918
  %v983 = vadd.f32 %v775, %v919
  %v984 = vadd.f32 %v776, %v920
  %v985 = vadd.f32 %v777, %v921
  %v986 = vadd.f32 %v778, %v922
  %v987 = vadd.f32 %v779, %v923
  %v988 = vadd.f32 %v780, %v924
  %v989 = vadd.f32 %v781, %v925
  %v990 = vadd.f32 %v782, %v926
  %v991 = vadd.f32 %v783, %v927
  %v992 = vadd.f32 %v784, %v928
  %v993 = vadd.f32 %v785, %v929
  %v994 = vadd.f32 %v786, %v930
  %v995 = vadd.f32 %v787, %v931
  %v996 = vadd.f32 %v788, %v932
  %v997 = vadd.f32 %v789, %v933
  %v998 = vadd.f32 %v790, %v934
  %v999 = vadd.f32 %v791, %v935
  %v1000 = vadd.f32 %v792, %v936
  %v1001 = vadd.f32 %v793, %v937
  %v1002 = vadd.f32 %v794, %v938
  %v1003 = vadd.f32 %v795, %v939
  %v1004 = vadd.f32 %v796, %v940
  %v1005 = vadd.f32 %v797, %v941
  %v1006 = vadd.f32 %v798, %v942
  %v1007 = vadd.f32 %v799, %v943
  %v1008 = vadd.f32 %v800, %v944
  %v1009 = vadd.f32 %v801, %v945
  %v1010 = vadd.f32 %v802, %v946
  %v1011 = vadd.f32 %v803, %v947
  %v1012 = vadd.f32 %v804, %v948
  %v1013 = vadd.f32 %v805, %v949
  %v1014 = vadd.f32 %v806, %v950
  %v1015 = vadd.f32 %v807, %v951
  %v1016 = vadd.f32 %v808, %v952
  %v1017 = vadd.f32 %v809, %v953
  %v1018 = vadd.f32 %v810, %v954
  %v1019 = vadd.f32 %v811, %v955
  %v1020 = vadd.f32 %v812, %v956
  %v1021 = vadd.f32 %v813, %v957
  %v1022 = vadd.f32 %v814, %v958
  %v1023 = vadd.f32 %v815, %v959
  %v1024 = vadd.f32 %v816, %v960
  %v1025 = vadd.f32 %v817, %v961
  %v1026 = vperm.slane %v66, 6
  %v1027 = vperm.slane %v67, 6
  %v1028 = vperm.slane %v68, 6
  %v1029 = vperm.slane %v69, 6
  %v1030 = vperm.slane %v70, 6
  %v1031 = vperm.slane %v71, 6
  %v1032 = vperm.slane %v72, 6
  %v1033 = vperm.slane %v73, 6
  %v1034 = vperm.slane %v74, 6
  %v1035 = vperm.slane %v75, 6
  %v1036 = vperm.slane %v76, 6
  %v1037 = vperm.slane %v77, 6
  %v1038 = vperm.slane %v78, 6
  %v1039 = vperm.slane %v79, 6
  %v1040 = vperm.slane %v80, 6
  %v1041 = vperm.slane %v81, 6
  %v1042 = vmul.f32 %v962, %v1026
  %v1043 = vmul.f32 %v963, %v1027
  %v1044 = vmul.f32 %v964, %v1028
  %v1045 = vmul.f32 %v965, %v1029
  %v1046 = vmul.f32 %v966, %v1030
  %v1047 = vmul.f32 %v967, %v1031
  %v1048 = vmul.f32 %v968, %v1032
  %v1049 = vmul.f32 %v969, %v1033
  %v1050 = vmul.f32 %v970, %v1034
  %v1051 = vmul.f32 %v971, %v1035
  %v1052 = vmul.f32 %v972, %v1036
  %v1053 = vmul.f32 %v973, %v1037
  %v1054 = vmul.f32 %v974, %v1038
  %v1055 = vmul.f32 %v975, %v1039
  %v1056 = vmul.f32 %v976, %v1040
  %v1057 = vmul.f32 %v977, %v1041
  %v1058 = vmul.f32 %v978, %v1026
  %v1059 = vmul.f32 %v979, %v1027
  %v1060 = vmul.f32 %v980, %v1028
  %v1061 = vmul.f32 %v981, %v1029
  %v1062 = vmul.f32 %v982, %v1030
  %v1063 = vmul.f32 %v983, %v1031
  %v1064 = vmul.f32 %v984, %v1032
  %v1065 = vmul.f32 %v985, %v1033
  %v1066 = vmul.f32 %v986, %v1034
  %v1067 = vmul.f32 %v987, %v1035
  %v1068 = vmul.f32 %v988, %v1036
  %v1069 = vmul.f32 %v989, %v1037
  %v1070 = vmul.f32 %v990, %v1038
  %v1071 = vmul.f32 %v991, %v1039
  %v1072 = vmul.f32 %v992, %v1040
  %v1073 = vmul.f32 %v993, %v1041
  %v1074 = vmul.f32 %v994, %v1026
  %v1075 = vmul.f32 %v995, %v1027
  %v1076 = vmul.f32 %v996, %v1028
  %v1077 = vmul.f32 %v997, %v1029
  %v1078 = vmul.f32 %v998, %v1030
  %v1079 = vmul.f32 %v999, %v1031
  %v1080 = vmul.f32 %v1000, %v1032
  %v1081 = vmul.f32 %v1001, %v1033
  %v1082 = vmul.f32 %v1002, %v1034
  %v1083 = vmul.f32 %v1003, %v1035
  %v1084 = vmul.f32 %v1004, %v1036
  %v1085 = vmul.f32 %v1005, %v1037
  %v1086 = vmul.f32 %v1006, %v1038
  %v1087 = vmul.f32 %v1007, %v1039
  %v1088 = vmul.f32 %v1008, %v1040
  %v1089 = vmul.f32 %v1009, %v1041
  %v1090 = vmul.f32 %v1010, %v1026
  %v1091 = vmul.f32 %v1011, %v1027
  %v1092 = vmul.f32 %v1012, %v1028
  %v1093 = vmul.f32 %v1013, %v1029
  %v1094 = vmul.f32 %v1014, %v1030
  %v1095 = vmul.f32 %v1015, %v1031
  %v1096 = vmul.f32 %v1016, %v1032
  %v1097 = vmul.f32 %v1017, %v1033
  %v1098 = vmul.f32 %v1018, %v1034
  %v1099 = vmul.f32 %v1019, %v1035
  %v1100 = vmul.f32 %v1020, %v1036
  %v1101 = vmul.f32 %v1021, %v1037
  %v1102 = vmul.f32 %v1022, %v1038
  %v1103 = vmul.f32 %v1023, %v1039
  %v1104 = vmul.f32 %v1024, %v1040
  %v1105 = vmul.f32 %v1025, %v1041
  %v1106 = vperm.slane %v66, 7
  %v1107 = vperm.slane %v67, 7
  %v1108 = vperm.slane %v68, 7
  %v1109 = vperm.slane %v69, 7
  %v1110 = vperm.slane %v70, 7
  %v1111 = vperm.slane %v71, 7
  %v1112 = vperm.slane %v72, 7
  %v1113 = vperm.slane %v73, 7
  %v1114 = vperm.slane %v74, 7
  %v1115 = vperm.slane %v75, 7
  %v1116 = vperm.slane %v76, 7
  %v1117 = vperm.slane %v77, 7
  %v1118 = vperm.slane %v78, 7
  %v1119 = vperm.slane %v79, 7
  %v1120 = vperm.slane %v80, 7
  %v1121 = vperm.slane %v81, 7
  %v1122 = vadd.f32 %v1042, %v1106
  %v1123 = vadd.f32 %v1043, %v1107
  %v1124 = vadd.f32 %v1044, %v1108
  %v1125 = vadd.f32 %v1045, %v1109
  %v1126 = vadd.f32 %v1046, %v1110
  %v1127 = vadd.f32 %v1047, %v1111
  %v1128 = vadd.f32 %v1048, %v1112
  %v1129 = vadd.f32 %v1049, %v1113
  %v1130 = vadd.f32 %v1050, %v1114
  %v1131 = vadd.f32 %v1051, %v1115
  %v1132 = vadd.f32 %v1052, %v1116
  %v1133 = vadd.f32 %v1053, %v1117
  %v1134 = vadd.f32 %v1054, %v1118
  %v1135 = vadd.f32 %v1055, %v1119
  %v1136 = vadd.f32 %v1056, %v1120
  %v1137 = vadd.f32 %v1057, %v1121
  %v1138 = vadd.f32 %v1058, %v1106
  %v1139 = vadd.f32 %v1059, %v1107
  %v1140 = vadd.f32 %v1060, %v1108
  %v1141 = vadd.f32 %v1061, %v1109
  %v1142 = vadd.f32 %v1062, %v1110
  %v1143 = vadd.f32 %v1063, %v1111
  %v1144 = vadd.f32 %v1064, %v1112
  %v1145 = vadd.f32 %v1065, %v1113
  %v1146 = vadd.f32 %v1066, %v1114
  %v1147 = vadd.f32 %v1067, %v1115
  %v1148 = vadd.f32 %v1068, %v1116
  %v1149 = vadd.f32 %v1069, %v1117
  %v1150 = vadd.f32 %v1070, %v1118
  %v1151 = vadd.f32 %v1071, %v1119
  %v1152 = vadd.f32 %v1072, %v1120
  %v1153 = vadd.f32 %v1073, %v1121
  %v1154 = vadd.f32 %v1074, %v1106
  %v1155 = vadd.f32 %v1075, %v1107
  %v1156 = vadd.f32 %v1076, %v1108
  %v1157 = vadd.f32 %v1077, %v1109
  %v1158 = vadd.f32 %v1078, %v1110
  %v1159 = vadd.f32 %v1079, %v1111
  %v1160 = vadd.f32 %v1080, %v1112
  %v1161 = vadd.f32 %v1081, %v1113
  %v1162 = vadd.f32 %v1082, %v1114
  %v1163 = vadd.f32 %v1083, %v1115
  %v1164 = vadd.f32 %v1084, %v1116
  %v1165 = vadd.f32 %v1085, %v1117
  %v1166 = vadd.f32 %v1086, %v1118
  %v1167 = vadd.f32 %v1087, %v1119
  %v1168 = vadd.f32 %v1088, %v1120
  %v1169 = vadd.f32 %v1089, %v1121
  %v1170 = vadd.f32 %v1090, %v1106
  %v1171 = vadd.f32 %v1091, %v1107
  %v1172 = vadd.f32 %v1092, %v1108
  %v1173 = vadd.f32 %v1093, %v1109
  %v1174 = vadd.f32 %v1094, %v1110
  %v1175 = vadd.f32 %v1095, %v1111
  %v1176 = vadd.f32 %v1096, %v1112
  %v1177 = vadd.f32 %v1097, %v1113
  %v1178 = vadd.f32 %v1098, %v1114
  %v1179 = vadd.f32 %v1099, %v1115
  %v1180 = vadd.f32 %v1100, %v1116
  %v1181 = vadd.f32 %v1101, %v1117
  %v1182 = vadd.f32 %v1102, %v1118
  %v1183 = vadd.f32 %v1103, %v1119
  %v1184 = vadd.f32 %v1104, %v1120
  %v1185 = vadd.f32 %v1105, %v1121
  %v1186 = vtanh.pop %v1122
  %v1187 = vtanh.pop %v1123
  %v1188 = vtanh.pop %v1124
  %v1189 = vtanh.pop %v1125
  %v1190 = vtanh.pop %v1126
  %v1191 = vtanh.pop %v1127
  %v1192 = vtanh.pop %v1128
  %v1193 = vtanh.pop %v1129
  %v1194 = vtanh.pop %v1130
  %v1195 = vtanh.pop %v1131
  %v1196 = vtanh.pop %v1132
  %v1197 = vtanh.pop %v1133
  %v1198 = vtanh.pop %v1134
  %v1199 = vtanh.pop %v1135
  %v1200 = vtanh.pop %v1136
  %v1201 = vtanh.pop %v1137
  %v1202 = vtanh.pop %v1138
  %v1203 = vtanh.pop %v1139
  %v1204 = vtanh.pop %v1140
  %v1205 = vtanh.pop %v1141
  %v1206 = vtanh.pop %v1142
  %v1207 = vtanh.pop %v1143
  %v1208 = vtanh.pop %v1144
  %v1209 = vtanh.pop %v1145
  %v1210 = vtanh.pop %v1146
  %v1211 = vtanh.pop %v1147
  %v1212 = vtanh.pop %v1148
  %v1213 = vtanh.pop %v1149
  %v1214 = vtanh.pop %v1150
  %v1215 = vtanh.pop %v1151
  %v1216 = vtanh.pop %v1152
  %v1217 = vtanh.pop %v1153
  %v1218 = vtanh.pop %v1154
  %v1219 = vtanh.pop %v1155
  %v1220 = vtanh.pop %v1156
  %v1221 = vtanh.pop %v1157
  %v1222 = vtanh.pop %v1158
  %v1223 = vtanh.pop %v1159
  %v1224 = vtanh.pop %v1160
  %v1225 = vtanh.pop %v1161
  %v1226 = vtanh.pop %v1162
  %v1227 = vtanh.pop %v1163
  %v1228 = vtanh.pop %v1164
  %v1229 = vtanh.pop %v1165
  %v1230 = vtanh.pop %v1166
  %v1231 = vtanh.pop %v1167
  %v1232 = vtanh.pop %v1168
  %v1233 = vtanh.pop %v1169
  %v1234 = vtanh.pop %v1170
  %v1235 = vtanh.pop %v1171
  %v1236 = vtanh.pop %v1172
  %v1237 = vtanh.pop %v1173
  %v1238 = vtanh.pop %v1174
  %v1239 = vtanh.pop %v1175
  %v1240 = vtanh.pop %v1176
  %v1241 = vtanh.pop %v1177
  %v1242 = vtanh.pop %v1178
  %v1243 = vtanh.pop %v1179
  %v1244 = vtanh.pop %v1180
  %v1245 = vtanh.pop %v1181
  %v1246 = vtanh.pop %v1182
  %v1247 = vtanh.pop %v1183
  %v1248 = vtanh.pop %v1184
  %v1249 = vtanh.pop %v1185
  %v1250 = vperm.slane %v82, 0
  %v1251 = vperm.slane %v83, 0
  %v1252 = vperm.slane %v84, 0
  %v1253 = vperm.slane %v85, 0
  %v1254 = vperm.slane %v86, 0
  %v1255 = vperm.slane %v87, 0
  %v1256 = vperm.slane %v88, 0
  %v1257 = vperm.slane %v89, 0
  %v1258 = vperm.slane %v90, 0
  %v1259 = vperm.slane %v91, 0
  %v1260 = vperm.slane %v92, 0
  %v1261 = vperm.slane %v93, 0
  %v1262 = vperm.slane %v94, 0
  %v1263 = vperm.slane %v95, 0
  %v1264 = vperm.slane %v96, 0
  %v1265 = vperm.slane %v97, 0
  %v1266 = vmul.f32 %v1186, %v1250
  %v1267 = vmul.f32 %v1187, %v1251
  %v1268 = vmul.f32 %v1188, %v1252
  %v1269 = vmul.f32 %v1189, %v1253
  %v1270 = vmul.f32 %v1190, %v1254
  %v1271 = vmul.f32 %v1191, %v1255
  %v1272 = vmul.f32 %v1192, %v1256
  %v1273 = vmul.f32 %v1193, %v1257
  %v1274 = vmul.f32 %v1194, %v1258
  %v1275 = vmul.f32 %v1195, %v1259
  %v1276 = vmul.f32 %v1196, %v1260
  %v1277 = vmul.f32 %v1197, %v1261
  %v1278 = vmul.f32 %v1198, %v1262
  %v1279 = vmul.f32 %v1199, %v1263
  %v1280 = vmul.f32 %v1200, %v1264
  %v1281 = vmul.f32 %v1201, %v1265
  %v1282 = vmul.f32 %v1202, %v1250
  %v1283 = vmul.f32 %v1203, %v1251
  %v1284 = vmul.f32 %v1204, %v1252
  %v1285 = vmul.f32 %v1205, %v1253
  %v1286 = vmul.f32 %v1206, %v1254
  %v1287 = vmul.f32 %v1207, %v1255
  %v1288 = vmul.f32 %v1208, %v1256
  %v1289 = vmul.f32 %v1209, %v1257
  %v1290 = vmul.f32 %v1210, %v1258
  %v1291 = vmul.f32 %v1211, %v1259
  %v1292 = vmul.f32 %v1212, %v1260
  %v1293 = vmul.f32 %v1213, %v1261
  %v1294 = vmul.f32 %v1214, %v1262
  %v1295 = vmul.f32 %v1215, %v1263
  %v1296 = vmul.f32 %v1216, %v1264
  %v1297 = vmul.f32 %v1217, %v1265
  %v1298 = vmul.f32 %v1218, %v1250
  %v1299 = vmul.f32 %v1219, %v1251
  %v1300 = vmul.f32 %v1220, %v1252
  %v1301 = vmul.f32 %v1221, %v1253
  %v1302 = vmul.f32 %v1222, %v1254
  %v1303 = vmul.f32 %v1223, %v1255
  %v1304 = vmul.f32 %v1224, %v1256
  %v1305 = vmul.f32 %v1225, %v1257
  %v1306 = vmul.f32 %v1226, %v1258
  %v1307 = vmul.f32 %v1227, %v1259
  %v1308 = vmul.f32 %v1228, %v1260
  %v1309 = vmul.f32 %v1229, %v1261
  %v1310 = vmul.f32 %v1230, %v1262
  %v1311 = vmul.f32 %v1231, %v1263
  %v1312 = vmul.f32 %v1232, %v1264
  %v1313 = vmul.f32 %v1233, %v1265
  %v1314 = vmul.f32 %v1234, %v1250
  %v1315 = vmul.f32 %v1235, %v1251
  %v1316 = vmul.f32 %v1236, %v1252
  %v1317 = vmul.f32 %v1237, %v1253
  %v1318 = vmul.f32 %v1238, %v1254
  %v1319 = vmul.f32 %v1239, %v1255
  %v1320 = vmul.f32 %v1240, %v1256
  %v1321 = vmul.f32 %v1241, %v1257
  %v1322 = vmul.f32 %v1242, %v1258
  %v1323 = vmul.f32 %v1243, %v1259
  %v1324 = vmul.f32 %v1244, %v1260
  %v1325 = vmul.f32 %v1245, %v1261
  %v1326 = vmul.f32 %v1246, %v1262
  %v1327 = vmul.f32 %v1247, %v1263
  %v1328 = vmul.f32 %v1248, %v1264
  %v1329 = vmul.f32 %v1249, %v1265
  %v1330 = vadd.f32 %v1122, %v1266
  %v1331 = vadd.f32 %v1123, %v1267
  %v1332 = vadd.f32 %v1124, %v1268
  %v1333 = vadd.f32 %v1125, %v1269
  %v1334 = vadd.f32 %v1126, %v1270
  %v1335 = vadd.f32 %v1127, %v1271
  %v1336 = vadd.f32 %v1128, %v1272
  %v1337 = vadd.f32 %v1129, %v1273
  %v1338 = vadd.f32 %v1130, %v1274
  %v1339 = vadd.f32 %v1131, %v1275
  %v1340 = vadd.f32 %v1132, %v1276
  %v1341 = vadd.f32 %v1133, %v1277
  %v1342 = vadd.f32 %v1134, %v1278
  %v1343 = vadd.f32 %v1135, %v1279
  %v1344 = vadd.f32 %v1136, %v1280
  %v1345 = vadd.f32 %v1137, %v1281
  %v1346 = vadd.f32 %v1138, %v1282
  %v1347 = vadd.f32 %v1139, %v1283
  %v1348 = vadd.f32 %v1140, %v1284
  %v1349 = vadd.f32 %v1141, %v1285
  %v1350 = vadd.f32 %v1142, %v1286
  %v1351 = vadd.f32 %v1143, %v1287
  %v1352 = vadd.f32 %v1144, %v1288
  %v1353 = vadd.f32 %v1145, %v1289
  %v1354 = vadd.f32 %v1146, %v1290
  %v1355 = vadd.f32 %v1147, %v1291
  %v1356 = vadd.f32 %v1148, %v1292
  %v1357 = vadd.f32 %v1149, %v1293
  %v1358 = vadd.f32 %v1150, %v1294
  %v1359 = vadd.f32 %v1151, %v1295
  %v1360 = vadd.f32 %v1152, %v1296
  %v1361 = vadd.f32 %v1153, %v1297
  %v1362 = vadd.f32 %v1154, %v1298
  %v1363 = vadd.f32 %v1155, %v1299
  %v1364 = vadd.f32 %v1156, %v1300
  %v1365 = vadd.f32 %v1157, %v1301
  %v1366 = vadd.f32 %v1158, %v1302
  %v1367 = vadd.f32 %v1159, %v1303
  %v1368 = vadd.f32 %v1160, %v1304
  %v1369 = vadd.f32 %v1161, %v1305
  %v1370 = vadd.f32 %v1162, %v1306
  %v1371 = vadd.f32 %v1163, %v1307
  %v1372 = vadd.f32 %v1164, %v1308
  %v1373 = vadd.f32 %v1165, %v1309
  %v1374 = vadd.f32 %v1166, %v1310
  %v1375 = vadd.f32 %v1167, %v1311
  %v1376 = vadd.f32 %v1168, %v1312
  %v1377 = vadd.f32 %v1169, %v1313
  %v1378 = vadd.f32 %v1170, %v1314
  %v1379 = vadd.f32 %v1171, %v1315
  %v1380 = vadd.f32 %v1172, %v1316
  %v1381 = vadd.f32 %v1173, %v1317
  %v1382 = vadd.f32 %v1174, %v1318
  %v1383 = vadd.f32 %v1175, %v1319
  %v1384 = vadd.f32 %v1176, %v1320
  %v1385 = vadd.f32 %v1177, %v1321
  %v1386 = vadd.f32 %v1178, %v1322
  %v1387 = vadd.f32 %v1179, %v1323
  %v1388 = vadd.f32 %v1180, %v1324
  %v1389 = vadd.f32 %v1181, %v1325
  %v1390 = vadd.f32 %v1182, %v1326
  %v1391 = vadd.f32 %v1183, %v1327
  %v1392 = vadd.f32 %v1184, %v1328
  %v1393 = vadd.f32 %v1185, %v1329
  %v1394 = vperm.slane %v82, 1
  %v1395 = vperm.slane %v83, 1
  %v1396 = vperm.slane %v84, 1
  %v1397 = vperm.slane %v85, 1
  %v1398 = vperm.slane %v86, 1
  %v1399 = vperm.slane %v87, 1
  %v1400 = vperm.slane %v88, 1
  %v1401 = vperm.slane %v89, 1
  %v1402 = vperm.slane %v90, 1
  %v1403 = vperm.slane %v91, 1
  %v1404 = vperm.slane %v92, 1
  %v1405 = vperm.slane %v93, 1
  %v1406 = vperm.slane %v94, 1
  %v1407 = vperm.slane %v95, 1
  %v1408 = vperm.slane %v96, 1
  %v1409 = vperm.slane %v97, 1
  %v1410 = vmul.f32 %v1330, %v1394
  %v1411 = vmul.f32 %v1331, %v1395
  %v1412 = vmul.f32 %v1332, %v1396
  %v1413 = vmul.f32 %v1333, %v1397
  %v1414 = vmul.f32 %v1334, %v1398
  %v1415 = vmul.f32 %v1335, %v1399
  %v1416 = vmul.f32 %v1336, %v1400
  %v1417 = vmul.f32 %v1337, %v1401
  %v1418 = vmul.f32 %v1338, %v1402
  %v1419 = vmul.f32 %v1339, %v1403
  %v1420 = vmul.f32 %v1340, %v1404
  %v1421 = vmul.f32 %v1341, %v1405
  %v1422 = vmul.f32 %v1342, %v1406
  %v1423 = vmul.f32 %v1343, %v1407
  %v1424 = vmul.f32 %v1344, %v1408
  %v1425 = vmul.f32 %v1345, %v1409
  %v1426 = vmul.f32 %v1346, %v1394
  %v1427 = vmul.f32 %v1347, %v1395
  %v1428 = vmul.f32 %v1348, %v1396
  %v1429 = vmul.f32 %v1349, %v1397
  %v1430 = vmul.f32 %v1350, %v1398
  %v1431 = vmul.f32 %v1351, %v1399
  %v1432 = vmul.f32 %v1352, %v1400
  %v1433 = vmul.f32 %v1353, %v1401
  %v1434 = vmul.f32 %v1354, %v1402
  %v1435 = vmul.f32 %v1355, %v1403
  %v1436 = vmul.f32 %v1356, %v1404
  %v1437 = vmul.f32 %v1357, %v1405
  %v1438 = vmul.f32 %v1358, %v1406
  %v1439 = vmul.f32 %v1359, %v1407
  %v1440 = vmul.f32 %v1360, %v1408
  %v1441 = vmul.f32 %v1361, %v1409
  %v1442 = vmul.f32 %v1362, %v1394
  %v1443 = vmul.f32 %v1363, %v1395
  %v1444 = vmul.f32 %v1364, %v1396
  %v1445 = vmul.f32 %v1365, %v1397
  %v1446 = vmul.f32 %v1366, %v1398
  %v1447 = vmul.f32 %v1367, %v1399
  %v1448 = vmul.f32 %v1368, %v1400
  %v1449 = vmul.f32 %v1369, %v1401
  %v1450 = vmul.f32 %v1370, %v1402
  %v1451 = vmul.f32 %v1371, %v1403
  %v1452 = vmul.f32 %v1372, %v1404
  %v1453 = vmul.f32 %v1373, %v1405
  %v1454 = vmul.f32 %v1374, %v1406
  %v1455 = vmul.f32 %v1375, %v1407
  %v1456 = vmul.f32 %v1376, %v1408
  %v1457 = vmul.f32 %v1377, %v1409
  %v1458 = vmul.f32 %v1378, %v1394
  %v1459 = vmul.f32 %v1379, %v1395
  %v1460 = vmul.f32 %v1380, %v1396
  %v1461 = vmul.f32 %v1381, %v1397
  %v1462 = vmul.f32 %v1382, %v1398
  %v1463 = vmul.f32 %v1383, %v1399
  %v1464 = vmul.f32 %v1384, %v1400
  %v1465 = vmul.f32 %v1385, %v1401
  %v1466 = vmul.f32 %v1386, %v1402
  %v1467 = vmul.f32 %v1387, %v1403
  %v1468 = vmul.f32 %v1388, %v1404
  %v1469 = vmul.f32 %v1389, %v1405
  %v1470 = vmul.f32 %v1390, %v1406
  %v1471 = vmul.f32 %v1391, %v1407
  %v1472 = vmul.f32 %v1392, %v1408
  %v1473 = vmul.f32 %v1393, %v1409
  %v1474 = vperm.slane %v82, 2
  %v1475 = vperm.slane %v83, 2
  %v1476 = vperm.slane %v84, 2
  %v1477 = vperm.slane %v85, 2
  %v1478 = vperm.slane %v86, 2
  %v1479 = vperm.slane %v87, 2
  %v1480 = vperm.slane %v88, 2
  %v1481 = vperm.slane %v89, 2
  %v1482 = vperm.slane %v90, 2
  %v1483 = vperm.slane %v91, 2
  %v1484 = vperm.slane %v92, 2
  %v1485 = vperm.slane %v93, 2
  %v1486 = vperm.slane %v94, 2
  %v1487 = vperm.slane %v95, 2
  %v1488 = vperm.slane %v96, 2
  %v1489 = vperm.slane %v97, 2
  %v1490 = vadd.f32 %v1410, %v1474
  %v1491 = vadd.f32 %v1411, %v1475
  %v1492 = vadd.f32 %v1412, %v1476
  %v1493 = vadd.f32 %v1413, %v1477
  %v1494 = vadd.f32 %v1414, %v1478
  %v1495 = vadd.f32 %v1415, %v1479
  %v1496 = vadd.f32 %v1416, %v1480
  %v1497 = vadd.f32 %v1417, %v1481
  %v1498 = vadd.f32 %v1418, %v1482
  %v1499 = vadd.f32 %v1419, %v1483
  %v1500 = vadd.f32 %v1420, %v1484
  %v1501 = vadd.f32 %v1421, %v1485
  %v1502 = vadd.f32 %v1422, %v1486
  %v1503 = vadd.f32 %v1423, %v1487
  %v1504 = vadd.f32 %v1424, %v1488
  %v1505 = vadd.f32 %v1425, %v1489
  %v1506 = vadd.f32 %v1426, %v1474
  %v1507 = vadd.f32 %v1427, %v1475
  %v1508 = vadd.f32 %v1428, %v1476
  %v1509 = vadd.f32 %v1429, %v1477
  %v1510 = vadd.f32 %v1430, %v1478
  %v1511 = vadd.f32 %v1431, %v1479
  %v1512 = vadd.f32 %v1432, %v1480
  %v1513 = vadd.f32 %v1433, %v1481
  %v1514 = vadd.f32 %v1434, %v1482
  %v1515 = vadd.f32 %v1435, %v1483
  %v1516 = vadd.f32 %v1436, %v1484
  %v1517 = vadd.f32 %v1437, %v1485
  %v1518 = vadd.f32 %v1438, %v1486
  %v1519 = vadd.f32 %v1439, %v1487
  %v1520 = vadd.f32 %v1440, %v1488
  %v1521 = vadd.f32 %v1441, %v1489
  %v1522 = vadd.f32 %v1442, %v1474
  %v1523 = vadd.f32 %v1443, %v1475
  %v1524 = vadd.f32 %v1444, %v1476
  %v1525 = vadd.f32 %v1445, %v1477
  %v1526 = vadd.f32 %v1446, %v1478
  %v1527 = vadd.f32 %v1447, %v1479
  %v1528 = vadd.f32 %v1448, %v1480
  %v1529 = vadd.f32 %v1449, %v1481
  %v1530 = vadd.f32 %v1450, %v1482
  %v1531 = vadd.f32 %v1451, %v1483
  %v1532 = vadd.f32 %v1452, %v1484
  %v1533 = vadd.f32 %v1453, %v1485
  %v1534 = vadd.f32 %v1454, %v1486
  %v1535 = vadd.f32 %v1455, %v1487
  %v1536 = vadd.f32 %v1456, %v1488
  %v1537 = vadd.f32 %v1457, %v1489
  %v1538 = vadd.f32 %v1458, %v1474
  %v1539 = vadd.f32 %v1459, %v1475
  %v1540 = vadd.f32 %v1460, %v1476
  %v1541 = vadd.f32 %v1461, %v1477
  %v1542 = vadd.f32 %v1462, %v1478
  %v1543 = vadd.f32 %v1463, %v1479
  %v1544 = vadd.f32 %v1464, %v1480
  %v1545 = vadd.f32 %v1465, %v1481
  %v1546 = vadd.f32 %v1466, %v1482
  %v1547 = vadd.f32 %v1467, %v1483
  %v1548 = vadd.f32 %v1468, %v1484
  %v1549 = vadd.f32 %v1469, %v1485
  %v1550 = vadd.f32 %v1470, %v1486
  %v1551 = vadd.f32 %v1471, %v1487
  %v1552 = vadd.f32 %v1472, %v1488
  %v1553 = vadd.f32 %v1473, %v1489
  %v1554 = vxor.u32 %v1490, 2147483648
  %v1555 = vxor.u32 %v1491, 2147483648
  %v1556 = vxor.u32 %v1492, 2147483648
  %v1557 = vxor.u32 %v1493, 2147483648
  %v1558 = vxor.u32 %v1494, 2147483648
  %v1559 = vxor.u32 %v1495, 2147483648
  %v1560 = vxor.u32 %v1496, 2147483648
  %v1561 = vxor.u32 %v1497, 2147483648
  %v1562 = vxor.u32 %v1498, 2147483648
  %v1563 = vxor.u32 %v1499, 2147483648
  %v1564 = vxor.u32 %v1500, 2147483648
  %v1565 = vxor.u32 %v1501, 2147483648
  %v1566 = vxor.u32 %v1502, 2147483648
  %v1567 = vxor.u32 %v1503, 2147483648
  %v1568 = vxor.u32 %v1504, 2147483648
  %v1569 = vxor.u32 %v1505, 2147483648
  %v1570 = vxor.u32 %v1506, 2147483648
  %v1571 = vxor.u32 %v1507, 2147483648
  %v1572 = vxor.u32 %v1508, 2147483648
  %v1573 = vxor.u32 %v1509, 2147483648
  %v1574 = vxor.u32 %v1510, 2147483648
  %v1575 = vxor.u32 %v1511, 2147483648
  %v1576 = vxor.u32 %v1512, 2147483648
  %v1577 = vxor.u32 %v1513, 2147483648
  %v1578 = vxor.u32 %v1514, 2147483648
  %v1579 = vxor.u32 %v1515, 2147483648
  %v1580 = vxor.u32 %v1516, 2147483648
  %v1581 = vxor.u32 %v1517, 2147483648
  %v1582 = vxor.u32 %v1518, 2147483648
  %v1583 = vxor.u32 %v1519, 2147483648
  %v1584 = vxor.u32 %v1520, 2147483648
  %v1585 = vxor.u32 %v1521, 2147483648
  %v1586 = vxor.u32 %v1522, 2147483648
  %v1587 = vxor.u32 %v1523, 2147483648
  %v1588 = vxor.u32 %v1524, 2147483648
  %v1589 = vxor.u32 %v1525, 2147483648
  %v1590 = vxor.u32 %v1526, 2147483648
  %v1591 = vxor.u32 %v1527, 2147483648
  %v1592 = vxor.u32 %v1528, 2147483648
  %v1593 = vxor.u32 %v1529, 2147483648
  %v1594 = vxor.u32 %v1530, 2147483648
  %v1595 = vxor.u32 %v1531, 2147483648
  %v1596 = vxor.u32 %v1532, 2147483648
  %v1597 = vxor.u32 %v1533, 2147483648
  %v1598 = vxor.u32 %v1534, 2147483648
  %v1599 = vxor.u32 %v1535, 2147483648
  %v1600 = vxor.u32 %v1536, 2147483648
  %v1601 = vxor.u32 %v1537, 2147483648
  %v1602 = vxor.u32 %v1538, 2147483648
  %v1603 = vxor.u32 %v1539, 2147483648
  %v1604 = vxor.u32 %v1540, 2147483648
  %v1605 = vxor.u32 %v1541, 2147483648
  %v1606 = vxor.u32 %v1542, 2147483648
  %v1607 = vxor.u32 %v1543, 2147483648
  %v1608 = vxor.u32 %v1544, 2147483648
  %v1609 = vxor.u32 %v1545, 2147483648
  %v1610 = vxor.u32 %v1546, 2147483648
  %v1611 = vxor.u32 %v1547, 2147483648
  %v1612 = vxor.u32 %v1548, 2147483648
  %v1613 = vxor.u32 %v1549, 2147483648
  %v1614 = vxor.u32 %v1550, 2147483648
  %v1615 = vxor.u32 %v1551, 2147483648
  %v1616 = vxor.u32 %v1552, 2147483648
  %v1617 = vxor.u32 %v1553, 2147483648
  %v1618 = vmul.f32 %v1554, 1.442695
  %v1619 = vpow.pop %v1618
  %v1620 = vmul.f32 %v1555, 1.442695
  %v1621 = vpow.pop %v1620
  %v1622 = vmul.f32 %v1556, 1.442695
  %v1623 = vpow.pop %v1622
  %v1624 = vmul.f32 %v1557, 1.442695
  %v1625 = vpow.pop %v1624
  %v1626 = vmul.f32 %v1558, 1.442695
  %v1627 = vpow.pop %v1626
  %v1628 = vmul.f32 %v1559, 1.442695
  %v1629 = vpow.pop %v1628
  %v1630 = vmul.f32 %v1560, 1.442695
  %v1631 = vpow.pop %v1630
  %v1632 = vmul.f32 %v1561, 1.442695
  %v1633 = vpow.pop %v1632
  %v1634 = vmul.f32 %v1562, 1.442695
  %v1635 = vpow.pop %v1634
  %v1636 = vmul.f32 %v1563, 1.442695
  %v1637 = vpow.pop %v1636
  %v1638 = vmul.f32 %v1564, 1.442695
  %v1639 = vpow.pop %v1638
  %v1640 = vmul.f32 %v1565, 1.442695
  %v1641 = vpow.pop %v1640
  %v1642 = vmul.f32 %v1566, 1.442695
  %v1643 = vpow.pop %v1642
  %v1644 = vmul.f32 %v1567, 1.442695
  %v1645 = vpow.pop %v1644
  %v1646 = vmul.f32 %v1568, 1.442695
  %v1647 = vpow.pop %v1646
  %v1648 = vmul.f32 %v1569, 1.442695
  %v1649 = vpow.pop %v1648
  %v1650 = vmul.f32 %v1570, 1.442695
  %v1651 = vpow.pop %v1650
  %v1652 = vmul.f32 %v1571, 1.442695
  %v1653 = vpow.pop %v1652
  %v1654 = vmul.f32 %v1572, 1.442695
  %v1655 = vpow.pop %v1654
  %v1656 = vmul.f32 %v1573, 1.442695
  %v1657 = vpow.pop %v1656
  %v1658 = vmul.f32 %v1574, 1.442695
  %v1659 = vpow.pop %v1658
  %v1660 = vmul.f32 %v1575, 1.442695
  %v1661 = vpow.pop %v1660
  %v1662 = vmul.f32 %v1576, 1.442695
  %v1663 = vpow.pop %v1662
  %v1664 = vmul.f32 %v1577, 1.442695
  %v1665 = vpow.pop %v1664
  %v1666 = vmul.f32 %v1578, 1.442695
  %v1667 = vpow.pop %v1666
  %v1668 = vmul.f32 %v1579, 1.442695
  %v1669 = vpow.pop %v1668
  %v1670 = vmul.f32 %v1580, 1.442695
  %v1671 = vpow.pop %v1670
  %v1672 = vmul.f32 %v1581, 1.442695
  %v1673 = vpow.pop %v1672
  %v1674 = vmul.f32 %v1582, 1.442695
  %v1675 = vpow.pop %v1674
  %v1676 = vmul.f32 %v1583, 1.442695
  %v1677 = vpow.pop %v1676
  %v1678 = vmul.f32 %v1584, 1.442695
  %v1679 = vpow.pop %v1678
  %v1680 = vmul.f32 %v1585, 1.442695
  %v1681 = vpow.pop %v1680
  %v1682 = vmul.f32 %v1586, 1.442695
  %v1683 = vpow.pop %v1682
  %v1684 = vmul.f32 %v1587, 1.442695
  %v1685 = vpow.pop %v1684
  %v1686 = vmul.f32 %v1588, 1.442695
  %v1687 = vpow.pop %v1686
  %v1688 = vmul.f32 %v1589, 1.442695
  %v1689 = vpow.pop %v1688
  %v1690 = vmul.f32 %v1590, 1.442695
  %v1691 = vpow.pop %v1690
  %v1692 = vmul.f32 %v1591, 1.442695
  %v1693 = vpow.pop %v1692
  %v1694 = vmul.f32 %v1592, 1.442695
  %v1695 = vpow.pop %v1694
  %v1696 = vmul.f32 %v1593, 1.442695
  %v1697 = vpow.pop %v1696
  %v1698 = vmul.f32 %v1594, 1.442695
  %v1699 = vpow.pop %v1698
  %v1700 = vmul.f32 %v1595, 1.442695
  %v1701 = vpow.pop %v1700
  %v1702 = vmul.f32 %v1596, 1.442695
  %v1703 = vpow.pop %v1702
  %v1704 = vmul.f32 %v1597, 1.442695
  %v1705 = vpow.pop %v1704
  %v1706 = vmul.f32 %v1598, 1.442695
  %v1707 = vpow.pop %v1706
  %v1708 = vmul.f32 %v1599, 1.442695
  %v1709 = vpow.pop %v1708
  %v1710 = vmul.f32 %v1600, 1.442695
  %v1711 = vpow.pop %v1710
  %v1712 = vmul.f32 %v1601, 1.442695
  %v1713 = vpow.pop %v1712
  %v1714 = vmul.f32 %v1602, 1.442695
  %v1715 = vpow.pop %v1714
  %v1716 = vmul.f32 %v1603, 1.442695
  %v1717 = vpow.pop %v1716
  %v1718 = vmul.f32 %v1604, 1.442695
  %v1719 = vpow.pop %v1718
  %v1720 = vmul.f32 %v1605, 1.442695
  %v1721 = vpow.pop %v1720
  %v1722 = vmul.f32 %v1606, 1.442695
  %v1723 = vpow.pop %v1722
  %v1724 = vmul.f32 %v1607, 1.442695
  %v1725 = vpow.pop %v1724
  %v1726 = vmul.f32 %v1608, 1.442695
  %v1727 = vpow.pop %v1726
  %v1728 = vmul.f32 %v1609, 1.442695
  %v1729 = vpow.pop %v1728
  %v1730 = vmul.f32 %v1610, 1.442695
  %v1731 = vpow.pop %v1730
  %v1732 = vmul.f32 %v1611, 1.442695
  %v1733 = vpow.pop %v1732
  %v1734 = vmul.f32 %v1612, 1.442695
  %v1735 = vpow.pop %v1734
  %v1736 = vmul.f32 %v1613, 1.442695
  %v1737 = vpow.pop %v1736
  %v1738 = vmul.f32 %v1614, 1.442695
  %v1739 = vpow.pop %v1738
  %v1740 = vmul.f32 %v1615, 1.442695
  %v1741 = vpow.pop %v1740
  %v1742 = vmul.f32 %v1616, 1.442695
  %v1743 = vpow.pop %v1742
  %v1744 = vmul.f32 %v1617, 1.442695
  %v1745 = vpow.pop %v1744
  %v1746 = vadd.f32 %v1619, 1.0
  %v1747 = vadd.f32 %v1621, 1.0
  %v1748 = vadd.f32 %v1623, 1.0
  %v1749 = vadd.f32 %v1625, 1.0
  %v1750 = vadd.f32 %v1627, 1.0
  %v1751 = vadd.f32 %v1629, 1.0
  %v1752 = vadd.f32 %v1631, 1.0
  %v1753 = vadd.f32 %v1633, 1.0
  %v1754 = vadd.f32 %v1635, 1.0
  %v1755 = vadd.f32 %v1637, 1.0
  %v1756 = vadd.f32 %v1639, 1.0
  %v1757 = vadd.f32 %v1641, 1.0
  %v1758 = vadd.f32 %v1643, 1.0
  %v1759 = vadd.f32 %v1645, 1.0
  %v1760 = vadd.f32 %v1647, 1.0
  %v1761 = vadd.f32 %v1649, 1.0
  %v1762 = vadd.f32 %v1651, 1.0
  %v1763 = vadd.f32 %v1653, 1.0
  %v1764 = vadd.f32 %v1655, 1.0
  %v1765 = vadd.f32 %v1657, 1.0
  %v1766 = vadd.f32 %v1659, 1.0
  %v1767 = vadd.f32 %v1661, 1.0
  %v1768 = vadd.f32 %v1663, 1.0
  %v1769 = vadd.f32 %v1665, 1.0
  %v1770 = vadd.f32 %v1667, 1.0
  %v1771 = vadd.f32 %v1669, 1.0
  %v1772 = vadd.f32 %v1671, 1.0
  %v1773 = vadd.f32 %v1673, 1.0
  %v1774 = vadd.f32 %v1675, 1.0
  %v1775 = vadd.f32 %v1677, 1.0
  %v1776 = vadd.f32 %v1679, 1.0
  %v1777 = vadd.f32 %v1681, 1.0
  %v1778 = vadd.f32 %v1683, 1.0
  %v1779 = vadd.f32 %v1685, 1.0
  %v1780 = vadd.f32 %v1687, 1.0
  %v1781 = vadd.f32 %v1689, 1.0
  %v1782 = vadd.f32 %v1691, 1.0
  %v1783 = vadd.f32 %v1693, 1.0
  %v1784 = vadd.f32 %v1695, 1.0
  %v1785 = vadd.f32 %v1697, 1.0
  %v1786 = vadd.f32 %v1699, 1.0
  %v1787 = vadd.f32 %v1701, 1.0
  %v1788 = vadd.f32 %v1703, 1.0
  %v1789 = vadd.f32 %v1705, 1.0
  %v1790 = vadd.f32 %v1707, 1.0
  %v1791 = vadd.f32 %v1709, 1.0
  %v1792 = vadd.f32 %v1711, 1.0
  %v1793 = vadd.f32 %v1713, 1.0
  %v1794 = vadd.f32 %v1715, 1.0
  %v1795 = vadd.f32 %v1717, 1.0
  %v1796 = vadd.f32 %v1719, 1.0
  %v1797 = vadd.f32 %v1721, 1.0
  %v1798 = vadd.f32 %v1723, 1.0
  %v1799 = vadd.f32 %v1725, 1.0
  %v1800 = vadd.f32 %v1727, 1.0
  %v1801 = vadd.f32 %v1729, 1.0
  %v1802 = vadd.f32 %v1731, 1.0
  %v1803 = vadd.f32 %v1733, 1.0
  %v1804 = vadd.f32 %v1735, 1.0
  %v1805 = vadd.f32 %v1737, 1.0
  %v1806 = vadd.f32 %v1739, 1.0
  %v1807 = vadd.f32 %v1741, 1.0
  %v1808 = vadd.f32 %v1743, 1.0
  %v1809 = vadd.f32 %v1745, 1.0
  %v1810 = vrcp.pop %v1746
  %v1811 = vmul.f32 %v1746, %v1810
  %v1812 = vsub.f32 1.0, %v1811
  %v1813 = vmul.f32 %v1810, %v1812
  %v1814 = vadd.f32 %v1810, %v1813
  %vm1815 = vweird.f32 %v1746
  %vm1816 = vweird.f32 %v1810
  %vm1817 = vmor %vm1815, %vm1816
  %v1818 = vsel %vm1817, %v1810, %v1814
  %v1819 = vand.u32 2147483647, %v1746
  %vm1820 = vcmp.eq.f32.partialorder %v1819, 8.507059e+37
  %v1821 = vand.u32 %v1746, 2147483648
  %v1822 = vor.u32 1.1754944e-38, %v1821
  %v1823 = vsel %vm1820, %v1822, %v1818
  %v1824 = vmul.f32 1.0, %v1823
  %v1825 = vrcp.pop %v1747
  %v1826 = vmul.f32 %v1747, %v1825
  %v1827 = vsub.f32 1.0, %v1826
  %v1828 = vmul.f32 %v1825, %v1827
  %v1829 = vadd.f32 %v1825, %v1828
  %vm1830 = vweird.f32 %v1747
  %vm1831 = vweird.f32 %v1825
  %vm1832 = vmor %vm1830, %vm1831
  %v1833 = vsel %vm1832, %v1825, %v1829
  %v1834 = vand.u32 2147483647, %v1747
  %vm1835 = vcmp.eq.f32.partialorder %v1834, 8.507059e+37
  %v1836 = vand.u32 %v1747, 2147483648
  %v1837 = vor.u32 1.1754944e-38, %v1836
  %v1838 = vsel %vm1835, %v1837, %v1833
  %v1839 = vmul.f32 1.0, %v1838
  %v1840 = vrcp.pop %v1748
  %v1841 = vmul.f32 %v1748, %v1840
  %v1842 = vsub.f32 1.0, %v1841
  %v1843 = vmul.f32 %v1840, %v1842
  %v1844 = vadd.f32 %v1840, %v1843
  %vm1845 = vweird.f32 %v1748
  %vm1846 = vweird.f32 %v1840
  %vm1847 = vmor %vm1845, %vm1846
  %v1848 = vsel %vm1847, %v1840, %v1844
  %v1849 = vand.u32 2147483647, %v1748
  %vm1850 = vcmp.eq.f32.partialorder %v1849, 8.507059e+37
  %v1851 = vand.u32 %v1748, 2147483648
  %v1852 = vor.u32 1.1754944e-38, %v1851
  %v1853 = vsel %vm1850, %v1852, %v1848
  %v1854 = vmul.f32 1.0, %v1853
  %v1855 = vrcp.pop %v1749
  %v1856 = vmul.f32 %v1749, %v1855
  %v1857 = vsub.f32 1.0, %v1856
  %v1858 = vmul.f32 %v1855, %v1857
  %v1859 = vadd.f32 %v1855, %v1858
  %vm1860 = vweird.f32 %v1749
  %vm1861 = vweird.f32 %v1855
  %vm1862 = vmor %vm1860, %vm1861
  %v1863 = vsel %vm1862, %v1855, %v1859
  %v1864 = vand.u32 2147483647, %v1749
  %vm1865 = vcmp.eq.f32.partialorder %v1864, 8.507059e+37
  %v1866 = vand.u32 %v1749, 2147483648
  %v1867 = vor.u32 1.1754944e-38, %v1866
  %v1868 = vsel %vm1865, %v1867, %v1863
  %v1869 = vmul.f32 1.0, %v1868
  %v1870 = vrcp.pop %v1750
  %v1871 = vmul.f32 %v1750, %v1870
  %v1872 = vsub.f32 1.0, %v1871
  %v1873 = vmul.f32 %v1870, %v1872
  %v1874 = vadd.f32 %v1870, %v1873
  %vm1875 = vweird.f32 %v1750
  %vm1876 = vweird.f32 %v1870
  %vm1877 = vmor %vm1875, %vm1876
  %v1878 = vsel %vm1877, %v1870, %v1874
  %v1879 = vand.u32 2147483647, %v1750
  %vm1880 = vcmp.eq.f32.partialorder %v1879, 8.507059e+37
  %v1881 = vand.u32 %v1750, 2147483648
  %v1882 = vor.u32 1.1754944e-38, %v1881
  %v1883 = vsel %vm1880, %v1882, %v1878
  %v1884 = vmul.f32 1.0, %v1883
  %v1885 = vrcp.pop %v1751
  %v1886 = vmul.f32 %v1751, %v1885
  %v1887 = vsub.f32 1.0, %v1886
  %v1888 = vmul.f32 %v1885, %v1887
  %v1889 = vadd.f32 %v1885, %v1888
  %vm1890 = vweird.f32 %v1751
  %vm1891 = vweird.f32 %v1885
  %vm1892 = vmor %vm1890, %vm1891
  %v1893 = vsel %vm1892, %v1885, %v1889
  %v1894 = vand.u32 2147483647, %v1751
  %vm1895 = vcmp.eq.f32.partialorder %v1894, 8.507059e+37
  %v1896 = vand.u32 %v1751, 2147483648
  %v1897 = vor.u32 1.1754944e-38, %v1896
  %v1898 = vsel %vm1895, %v1897, %v1893
  %v1899 = vmul.f32 1.0, %v1898
  %v1900 = vrcp.pop %v1752
  %v1901 = vmul.f32 %v1752, %v1900
  %v1902 = vsub.f32 1.0, %v1901
  %v1903 = vmul.f32 %v1900, %v1902
  %v1904 = vadd.f32 %v1900, %v1903
  %vm1905 = vweird.f32 %v1752
  %vm1906 = vweird.f32 %v1900
  %vm1907 = vmor %vm1905, %vm1906
  %v1908 = vsel %vm1907, %v1900, %v1904
  %v1909 = vand.u32 2147483647, %v1752
  %vm1910 = vcmp.eq.f32.partialorder %v1909, 8.507059e+37
  %v1911 = vand.u32 %v1752, 2147483648
  %v1912 = vor.u32 1.1754944e-38, %v1911
  %v1913 = vsel %vm1910, %v1912, %v1908
  %v1914 = vmul.f32 1.0, %v1913
  %v1915 = vrcp.pop %v1753
  %v1916 = vmul.f32 %v1753, %v1915
  %v1917 = vsub.f32 1.0, %v1916
  %v1918 = vmul.f32 %v1915, %v1917
  %v1919 = vadd.f32 %v1915, %v1918
  %vm1920 = vweird.f32 %v1753
  %vm1921 = vweird.f32 %v1915
  %vm1922 = vmor %vm1920, %vm1921
  %v1923 = vsel %vm1922, %v1915, %v1919
  %v1924 = vand.u32 2147483647, %v1753
  %vm1925 = vcmp.eq.f32.partialorder %v1924, 8.507059e+37
  %v1926 = vand.u32 %v1753, 2147483648
  %v1927 = vor.u32 1.1754944e-38, %v1926
  %v1928 = vsel %vm1925, %v1927, %v1923
  %v1929 = vmul.f32 1.0, %v1928
  %v1930 = vrcp.pop %v1754
  %v1931 = vmul.f32 %v1754, %v1930
  %v1932 = vsub.f32 1.0, %v1931
  %v1933 = vmul.f32 %v1930, %v1932
  %v1934 = vadd.f32 %v1930, %v1933
  %vm1935 = vweird.f32 %v1754
  %vm1936 = vweird.f32 %v1930
  %vm1937 = vmor %vm1935, %vm1936
  %v1938 = vsel %vm1937, %v1930, %v1934
  %v1939 = vand.u32 2147483647, %v1754
  %vm1940 = vcmp.eq.f32.partialorder %v1939, 8.507059e+37
  %v1941 = vand.u32 %v1754, 2147483648
  %v1942 = vor.u32 1.1754944e-38, %v1941
  %v1943 = vsel %vm1940, %v1942, %v1938
  %v1944 = vmul.f32 1.0, %v1943
  %v1945 = vrcp.pop %v1755
  %v1946 = vmul.f32 %v1755, %v1945
  %v1947 = vsub.f32 1.0, %v1946
  %v1948 = vmul.f32 %v1945, %v1947
  %v1949 = vadd.f32 %v1945, %v1948
  %vm1950 = vweird.f32 %v1755
  %vm1951 = vweird.f32 %v1945
  %vm1952 = vmor %vm1950, %vm1951
  %v1953 = vsel %vm1952, %v1945, %v1949
  %v1954 = vand.u32 2147483647, %v1755
  %vm1955 = vcmp.eq.f32.partialorder %v1954, 8.507059e+37
  %v1956 = vand.u32 %v1755, 2147483648
  %v1957 = vor.u32 1.1754944e-38, %v1956
  %v1958 = vsel %vm1955, %v1957, %v1953
  %v1959 = vmul.f32 1.0, %v1958
  %v1960 = vrcp.pop %v1756
  %v1961 = vmul.f32 %v1756, %v1960
  %v1962 = vsub.f32 1.0, %v1961
  %v1963 = vmul.f32 %v1960, %v1962
  %v1964 = vadd.f32 %v1960, %v1963
  %vm1965 = vweird.f32 %v1756
  %vm1966 = vweird.f32 %v1960
  %vm1967 = vmor %vm1965, %vm1966
  %v1968 = vsel %vm1967, %v1960, %v1964
  %v1969 = vand.u32 2147483647, %v1756
  %vm1970 = vcmp.eq.f32.partialorder %v1969, 8.507059e+37
  %v1971 = vand.u32 %v1756, 2147483648
  %v1972 = vor.u32 1.1754944e-38, %v1971
  %v1973 = vsel %vm1970, %v1972, %v1968
  %v1974 = vmul.f32 1.0, %v1973
  %v1975 = vrcp.pop %v1757
  %v1976 = vmul.f32 %v1757, %v1975
  %v1977 = vsub.f32 1.0, %v1976
  %v1978 = vmul.f32 %v1975, %v1977
  %v1979 = vadd.f32 %v1975, %v1978
  %vm1980 = vweird.f32 %v1757
  %vm1981 = vweird.f32 %v1975
  %vm1982 = vmor %vm1980, %vm1981
  %v1983 = vsel %vm1982, %v1975, %v1979
  %v1984 = vand.u32 2147483647, %v1757
  %vm1985 = vcmp.eq.f32.partialorder %v1984, 8.507059e+37
  %v1986 = vand.u32 %v1757, 2147483648
  %v1987 = vor.u32 1.1754944e-38, %v1986
  %v1988 = vsel %vm1985, %v1987, %v1983
  %v1989 = vmul.f32 1.0, %v1988
  %v1990 = vrcp.pop %v1758
  %v1991 = vmul.f32 %v1758, %v1990
  %v1992 = vsub.f32 1.0, %v1991
  %v1993 = vmul.f32 %v1990, %v1992
  %v1994 = vadd.f32 %v1990, %v1993
  %vm1995 = vweird.f32 %v1758
  %vm1996 = vweird.f32 %v1990
  %vm1997 = vmor %vm1995, %vm1996
  %v1998 = vsel %vm1997, %v1990, %v1994
  %v1999 = vand.u32 2147483647, %v1758
  %vm2000 = vcmp.eq.f32.partialorder %v1999, 8.507059e+37
  %v2001 = vand.u32 %v1758, 2147483648
  %v2002 = vor.u32 1.1754944e-38, %v2001
  %v2003 = vsel %vm2000, %v2002, %v1998
  %v2004 = vmul.f32 1.0, %v2003
  %v2005 = vrcp.pop %v1759
  %v2006 = vmul.f32 %v1759, %v2005
  %v2007 = vsub.f32 1.0, %v2006
  %v2008 = vmul.f32 %v2005, %v2007
  %v2009 = vadd.f32 %v2005, %v2008
  %vm2010 = vweird.f32 %v1759
  %vm2011 = vweird.f32 %v2005
  %vm2012 = vmor %vm2010, %vm2011
  %v2013 = vsel %vm2012, %v2005, %v2009
  %v2014 = vand.u32 2147483647, %v1759
  %vm2015 = vcmp.eq.f32.partialorder %v2014, 8.507059e+37
  %v2016 = vand.u32 %v1759, 2147483648
  %v2017 = vor.u32 1.1754944e-38, %v2016
  %v2018 = vsel %vm2015, %v2017, %v2013
  %v2019 = vmul.f32 1.0, %v2018
  %v2020 = vrcp.pop %v1760
  %v2021 = vmul.f32 %v1760, %v2020
  %v2022 = vsub.f32 1.0, %v2021
  %v2023 = vmul.f32 %v2020, %v2022
  %v2024 = vadd.f32 %v2020, %v2023
  %vm2025 = vweird.f32 %v1760
  %vm2026 = vweird.f32 %v2020
  %vm2027 = vmor %vm2025, %vm2026
  %v2028 = vsel %vm2027, %v2020, %v2024
  %v2029 = vand.u32 2147483647, %v1760
  %vm2030 = vcmp.eq.f32.partialorder %v2029, 8.507059e+37
  %v2031 = vand.u32 %v1760, 2147483648
  %v2032 = vor.u32 1.1754944e-38, %v2031
  %v2033 = vsel %vm2030, %v2032, %v2028
  %v2034 = vmul.f32 1.0, %v2033
  %v2035 = vrcp.pop %v1761
  %v2036 = vmul.f32 %v1761, %v2035
  %v2037 = vsub.f32 1.0, %v2036
  %v2038 = vmul.f32 %v2035, %v2037
  %v2039 = vadd.f32 %v2035, %v2038
  %vm2040 = vweird.f32 %v1761
  %vm2041 = vweird.f32 %v2035
  %vm2042 = vmor %vm2040, %vm2041
  %v2043 = vsel %vm2042, %v2035, %v2039
  %v2044 = vand.u32 2147483647, %v1761
  %vm2045 = vcmp.eq.f32.partialorder %v2044, 8.507059e+37
  %v2046 = vand.u32 %v1761, 2147483648
  %v2047 = vor.u32 1.1754944e-38, %v2046
  %v2048 = vsel %vm2045, %v2047, %v2043
  %v2049 = vmul.f32 1.0, %v2048
  %v2050 = vrcp.pop %v1762
  %v2051 = vmul.f32 %v1762, %v2050
  %v2052 = vsub.f32 1.0, %v2051
  %v2053 = vmul.f32 %v2050, %v2052
  %v2054 = vadd.f32 %v2050, %v2053
  %vm2055 = vweird.f32 %v1762
  %vm2056 = vweird.f32 %v2050
  %vm2057 = vmor %vm2055, %vm2056
  %v2058 = vsel %vm2057, %v2050, %v2054
  %v2059 = vand.u32 2147483647, %v1762
  %vm2060 = vcmp.eq.f32.partialorder %v2059, 8.507059e+37
  %v2061 = vand.u32 %v1762, 2147483648
  %v2062 = vor.u32 1.1754944e-38, %v2061
  %v2063 = vsel %vm2060, %v2062, %v2058
  %v2064 = vmul.f32 1.0, %v2063
  %v2065 = vrcp.pop %v1763
  %v2066 = vmul.f32 %v1763, %v2065
  %v2067 = vsub.f32 1.0, %v2066
  %v2068 = vmul.f32 %v2065, %v2067
  %v2069 = vadd.f32 %v2065, %v2068
  %vm2070 = vweird.f32 %v1763
  %vm2071 = vweird.f32 %v2065
  %vm2072 = vmor %vm2070, %vm2071
  %v2073 = vsel %vm2072, %v2065, %v2069
  %v2074 = vand.u32 2147483647, %v1763
  %vm2075 = vcmp.eq.f32.partialorder %v2074, 8.507059e+37
  %v2076 = vand.u32 %v1763, 2147483648
  %v2077 = vor.u32 1.1754944e-38, %v2076
  %v2078 = vsel %vm2075, %v2077, %v2073
  %v2079 = vmul.f32 1.0, %v2078
  %v2080 = vrcp.pop %v1764
  %v2081 = vmul.f32 %v1764, %v2080
  %v2082 = vsub.f32 1.0, %v2081
  %v2083 = vmul.f32 %v2080, %v2082
  %v2084 = vadd.f32 %v2080, %v2083
  %vm2085 = vweird.f32 %v1764
  %vm2086 = vweird.f32 %v2080
  %vm2087 = vmor %vm2085, %vm2086
  %v2088 = vsel %vm2087, %v2080, %v2084
  %v2089 = vand.u32 2147483647, %v1764
  %vm2090 = vcmp.eq.f32.partialorder %v2089, 8.507059e+37
  %v2091 = vand.u32 %v1764, 2147483648
  %v2092 = vor.u32 1.1754944e-38, %v2091
  %v2093 = vsel %vm2090, %v2092, %v2088
  %v2094 = vmul.f32 1.0, %v2093
  %v2095 = vrcp.pop %v1765
  %v2096 = vmul.f32 %v1765, %v2095
  %v2097 = vsub.f32 1.0, %v2096
  %v2098 = vmul.f32 %v2095, %v2097
  %v2099 = vadd.f32 %v2095, %v2098
  %vm2100 = vweird.f32 %v1765
  %vm2101 = vweird.f32 %v2095
  %vm2102 = vmor %vm2100, %vm2101
  %v2103 = vsel %vm2102, %v2095, %v2099
  %v2104 = vand.u32 2147483647, %v1765
  %vm2105 = vcmp.eq.f32.partialorder %v2104, 8.507059e+37
  %v2106 = vand.u32 %v1765, 2147483648
  %v2107 = vor.u32 1.1754944e-38, %v2106
  %v2108 = vsel %vm2105, %v2107, %v2103
  %v2109 = vmul.f32 1.0, %v2108
  %v2110 = vrcp.pop %v1766
  %v2111 = vmul.f32 %v1766, %v2110
  %v2112 = vsub.f32 1.0, %v2111
  %v2113 = vmul.f32 %v2110, %v2112
  %v2114 = vadd.f32 %v2110, %v2113
  %vm2115 = vweird.f32 %v1766
  %vm2116 = vweird.f32 %v2110
  %vm2117 = vmor %vm2115, %vm2116
  %v2118 = vsel %vm2117, %v2110, %v2114
  %v2119 = vand.u32 2147483647, %v1766
  %vm2120 = vcmp.eq.f32.partialorder %v2119, 8.507059e+37
  %v2121 = vand.u32 %v1766, 2147483648
  %v2122 = vor.u32 1.1754944e-38, %v2121
  %v2123 = vsel %vm2120, %v2122, %v2118
  %v2124 = vmul.f32 1.0, %v2123
  %v2125 = vrcp.pop %v1767
  %v2126 = vmul.f32 %v1767, %v2125
  %v2127 = vsub.f32 1.0, %v2126
  %v2128 = vmul.f32 %v2125, %v2127
  %v2129 = vadd.f32 %v2125, %v2128
  %vm2130 = vweird.f32 %v1767
  %vm2131 = vweird.f32 %v2125
  %vm2132 = vmor %vm2130, %vm2131
  %v2133 = vsel %vm2132, %v2125, %v2129
  %v2134 = vand.u32 2147483647, %v1767
  %vm2135 = vcmp.eq.f32.partialorder %v2134, 8.507059e+37
  %v2136 = vand.u32 %v1767, 2147483648
  %v2137 = vor.u32 1.1754944e-38, %v2136
  %v2138 = vsel %vm2135, %v2137, %v2133
  %v2139 = vmul.f32 1.0, %v2138
  %v2140 = vrcp.pop %v1768
  %v2141 = vmul.f32 %v1768, %v2140
  %v2142 = vsub.f32 1.0, %v2141
  %v2143 = vmul.f32 %v2140, %v2142
  %v2144 = vadd.f32 %v2140, %v2143
  %vm2145 = vweird.f32 %v1768
  %vm2146 = vweird.f32 %v2140
  %vm2147 = vmor %vm2145, %vm2146
  %v2148 = vsel %vm2147, %v2140, %v2144
  %v2149 = vand.u32 2147483647, %v1768
  %vm2150 = vcmp.eq.f32.partialorder %v2149, 8.507059e+37
  %v2151 = vand.u32 %v1768, 2147483648
  %v2152 = vor.u32 1.1754944e-38, %v2151
  %v2153 = vsel %vm2150, %v2152, %v2148
  %v2154 = vmul.f32 1.0, %v2153
  %v2155 = vrcp.pop %v1769
  %v2156 = vmul.f32 %v1769, %v2155
  %v2157 = vsub.f32 1.0, %v2156
  %v2158 = vmul.f32 %v2155, %v2157
  %v2159 = vadd.f32 %v2155, %v2158
  %vm2160 = vweird.f32 %v1769
  %vm2161 = vweird.f32 %v2155
  %vm2162 = vmor %vm2160, %vm2161
  %v2163 = vsel %vm2162, %v2155, %v2159
  %v2164 = vand.u32 2147483647, %v1769
  %vm2165 = vcmp.eq.f32.partialorder %v2164, 8.507059e+37
  %v2166 = vand.u32 %v1769, 2147483648
  %v2167 = vor.u32 1.1754944e-38, %v2166
  %v2168 = vsel %vm2165, %v2167, %v2163
  %v2169 = vmul.f32 1.0, %v2168
  %v2170 = vrcp.pop %v1770
  %v2171 = vmul.f32 %v1770, %v2170
  %v2172 = vsub.f32 1.0, %v2171
  %v2173 = vmul.f32 %v2170, %v2172
  %v2174 = vadd.f32 %v2170, %v2173
  %vm2175 = vweird.f32 %v1770
  %vm2176 = vweird.f32 %v2170
  %vm2177 = vmor %vm2175, %vm2176
  %v2178 = vsel %vm2177, %v2170, %v2174
  %v2179 = vand.u32 2147483647, %v1770
  %vm2180 = vcmp.eq.f32.partialorder %v2179, 8.507059e+37
  %v2181 = vand.u32 %v1770, 2147483648
  %v2182 = vor.u32 1.1754944e-38, %v2181
  %v2183 = vsel %vm2180, %v2182, %v2178
  %v2184 = vmul.f32 1.0, %v2183
  %v2185 = vrcp.pop %v1771
  %v2186 = vmul.f32 %v1771, %v2185
  %v2187 = vsub.f32 1.0, %v2186
  %v2188 = vmul.f32 %v2185, %v2187
  %v2189 = vadd.f32 %v2185, %v2188
  %vm2190 = vweird.f32 %v1771
  %vm2191 = vweird.f32 %v2185
  %vm2192 = vmor %vm2190, %vm2191
  %v2193 = vsel %vm2192, %v2185, %v2189
  %v2194 = vand.u32 2147483647, %v1771
  %vm2195 = vcmp.eq.f32.partialorder %v2194, 8.507059e+37
  %v2196 = vand.u32 %v1771, 2147483648
  %v2197 = vor.u32 1.1754944e-38, %v2196
  %v2198 = vsel %vm2195, %v2197, %v2193
  %v2199 = vmul.f32 1.0, %v2198
  %v2200 = vrcp.pop %v1772
  %v2201 = vmul.f32 %v1772, %v2200
  %v2202 = vsub.f32 1.0, %v2201
  %v2203 = vmul.f32 %v2200, %v2202
  %v2204 = vadd.f32 %v2200, %v2203
  %vm2205 = vweird.f32 %v1772
  %vm2206 = vweird.f32 %v2200
  %vm2207 = vmor %vm2205, %vm2206
  %v2208 = vsel %vm2207, %v2200, %v2204
  %v2209 = vand.u32 2147483647, %v1772
  %vm2210 = vcmp.eq.f32.partialorder %v2209, 8.507059e+37
  %v2211 = vand.u32 %v1772, 2147483648
  %v2212 = vor.u32 1.1754944e-38, %v2211
  %v2213 = vsel %vm2210, %v2212, %v2208
  %v2214 = vmul.f32 1.0, %v2213
  %v2215 = vrcp.pop %v1773
  %v2216 = vmul.f32 %v1773, %v2215
  %v2217 = vsub.f32 1.0, %v2216
  %v2218 = vmul.f32 %v2215, %v2217
  %v2219 = vadd.f32 %v2215, %v2218
  %vm2220 = vweird.f32 %v1773
  %vm2221 = vweird.f32 %v2215
  %vm2222 = vmor %vm2220, %vm2221
  %v2223 = vsel %vm2222, %v2215, %v2219
  %v2224 = vand.u32 2147483647, %v1773
  %vm2225 = vcmp.eq.f32.partialorder %v2224, 8.507059e+37
  %v2226 = vand.u32 %v1773, 2147483648
  %v2227 = vor.u32 1.1754944e-38, %v2226
  %v2228 = vsel %vm2225, %v2227, %v2223
  %v2229 = vmul.f32 1.0, %v2228
  %v2230 = vrcp.pop %v1774
  %v2231 = vmul.f32 %v1774, %v2230
  %v2232 = vsub.f32 1.0, %v2231
  %v2233 = vmul.f32 %v2230, %v2232
  %v2234 = vadd.f32 %v2230, %v2233
  %vm2235 = vweird.f32 %v1774
  %vm2236 = vweird.f32 %v2230
  %vm2237 = vmor %vm2235, %vm2236
  %v2238 = vsel %vm2237, %v2230, %v2234
  %v2239 = vand.u32 2147483647, %v1774
  %vm2240 = vcmp.eq.f32.partialorder %v2239, 8.507059e+37
  %v2241 = vand.u32 %v1774, 2147483648
  %v2242 = vor.u32 1.1754944e-38, %v2241
  %v2243 = vsel %vm2240, %v2242, %v2238
  %v2244 = vmul.f32 1.0, %v2243
  %v2245 = vrcp.pop %v1775
  %v2246 = vmul.f32 %v1775, %v2245
  %v2247 = vsub.f32 1.0, %v2246
  %v2248 = vmul.f32 %v2245, %v2247
  %v2249 = vadd.f32 %v2245, %v2248
  %vm2250 = vweird.f32 %v1775
  %vm2251 = vweird.f32 %v2245
  %vm2252 = vmor %vm2250, %vm2251
  %v2253 = vsel %vm2252, %v2245, %v2249
  %v2254 = vand.u32 2147483647, %v1775
  %vm2255 = vcmp.eq.f32.partialorder %v2254, 8.507059e+37
  %v2256 = vand.u32 %v1775, 2147483648
  %v2257 = vor.u32 1.1754944e-38, %v2256
  %v2258 = vsel %vm2255, %v2257, %v2253
  %v2259 = vmul.f32 1.0, %v2258
  %v2260 = vrcp.pop %v1776
  %v2261 = vmul.f32 %v1776, %v2260
  %v2262 = vsub.f32 1.0, %v2261
  %v2263 = vmul.f32 %v2260, %v2262
  %v2264 = vadd.f32 %v2260, %v2263
  %vm2265 = vweird.f32 %v1776
  %vm2266 = vweird.f32 %v2260
  %vm2267 = vmor %vm2265, %vm2266
  %v2268 = vsel %vm2267, %v2260, %v2264
  %v2269 = vand.u32 2147483647, %v1776
  %vm2270 = vcmp.eq.f32.partialorder %v2269, 8.507059e+37
  %v2271 = vand.u32 %v1776, 2147483648
  %v2272 = vor.u32 1.1754944e-38, %v2271
  %v2273 = vsel %vm2270, %v2272, %v2268
  %v2274 = vmul.f32 1.0, %v2273
  %v2275 = vrcp.pop %v1777
  %v2276 = vmul.f32 %v1777, %v2275
  %v2277 = vsub.f32 1.0, %v2276
  %v2278 = vmul.f32 %v2275, %v2277
  %v2279 = vadd.f32 %v2275, %v2278
  %vm2280 = vweird.f32 %v1777
  %vm2281 = vweird.f32 %v2275
  %vm2282 = vmor %vm2280, %vm2281
  %v2283 = vsel %vm2282, %v2275, %v2279
  %v2284 = vand.u32 2147483647, %v1777
  %vm2285 = vcmp.eq.f32.partialorder %v2284, 8.507059e+37
  %v2286 = vand.u32 %v1777, 2147483648
  %v2287 = vor.u32 1.1754944e-38, %v2286
  %v2288 = vsel %vm2285, %v2287, %v2283
  %v2289 = vmul.f32 1.0, %v2288
  %v2290 = vrcp.pop %v1778
  %v2291 = vmul.f32 %v1778, %v2290
  %v2292 = vsub.f32 1.0, %v2291
  %v2293 = vmul.f32 %v2290, %v2292
  %v2294 = vadd.f32 %v2290, %v2293
  %vm2295 = vweird.f32 %v1778
  %vm2296 = vweird.f32 %v2290
  %vm2297 = vmor %vm2295, %vm2296
  %v2298 = vsel %vm2297, %v2290, %v2294
  %v2299 = vand.u32 2147483647, %v1778
  %vm2300 = vcmp.eq.f32.partialorder %v2299, 8.507059e+37
  %v2301 = vand.u32 %v1778, 2147483648
  %v2302 = vor.u32 1.1754944e-38, %v2301
  %v2303 = vsel %vm2300, %v2302, %v2298
  %v2304 = vmul.f32 1.0, %v2303
  %v2305 = vrcp.pop %v1779
  %v2306 = vmul.f32 %v1779, %v2305
  %v2307 = vsub.f32 1.0, %v2306
  %v2308 = vmul.f32 %v2305, %v2307
  %v2309 = vadd.f32 %v2305, %v2308
  %vm2310 = vweird.f32 %v1779
  %vm2311 = vweird.f32 %v2305
  %vm2312 = vmor %vm2310, %vm2311
  %v2313 = vsel %vm2312, %v2305, %v2309
  %v2314 = vand.u32 2147483647, %v1779
  %vm2315 = vcmp.eq.f32.partialorder %v2314, 8.507059e+37
  %v2316 = vand.u32 %v1779, 2147483648
  %v2317 = vor.u32 1.1754944e-38, %v2316
  %v2318 = vsel %vm2315, %v2317, %v2313
  %v2319 = vmul.f32 1.0, %v2318
  %v2320 = vrcp.pop %v1780
  %v2321 = vmul.f32 %v1780, %v2320
  %v2322 = vsub.f32 1.0, %v2321
  %v2323 = vmul.f32 %v2320, %v2322
  %v2324 = vadd.f32 %v2320, %v2323
  %vm2325 = vweird.f32 %v1780
  %vm2326 = vweird.f32 %v2320
  %vm2327 = vmor %vm2325, %vm2326
  %v2328 = vsel %vm2327, %v2320, %v2324
  %v2329 = vand.u32 2147483647, %v1780
  %vm2330 = vcmp.eq.f32.partialorder %v2329, 8.507059e+37
  %v2331 = vand.u32 %v1780, 2147483648
  %v2332 = vor.u32 1.1754944e-38, %v2331
  %v2333 = vsel %vm2330, %v2332, %v2328
  %v2334 = vmul.f32 1.0, %v2333
  %v2335 = vrcp.pop %v1781
  %v2336 = vmul.f32 %v1781, %v2335
  %v2337 = vsub.f32 1.0, %v2336
  %v2338 = vmul.f32 %v2335, %v2337
  %v2339 = vadd.f32 %v2335, %v2338
  %vm2340 = vweird.f32 %v1781
  %vm2341 = vweird.f32 %v2335
  %vm2342 = vmor %vm2340, %vm2341
  %v2343 = vsel %vm2342, %v2335, %v2339
  %v2344 = vand.u32 2147483647, %v1781
  %vm2345 = vcmp.eq.f32.partialorder %v2344, 8.507059e+37
  %v2346 = vand.u32 %v1781, 2147483648
  %v2347 = vor.u32 1.1754944e-38, %v2346
  %v2348 = vsel %vm2345, %v2347, %v2343
  %v2349 = vmul.f32 1.0, %v2348
  %v2350 = vrcp.pop %v1782
  %v2351 = vmul.f32 %v1782, %v2350
  %v2352 = vsub.f32 1.0, %v2351
  %v2353 = vmul.f32 %v2350, %v2352
  %v2354 = vadd.f32 %v2350, %v2353
  %vm2355 = vweird.f32 %v1782
  %vm2356 = vweird.f32 %v2350
  %vm2357 = vmor %vm2355, %vm2356
  %v2358 = vsel %vm2357, %v2350, %v2354
  %v2359 = vand.u32 2147483647, %v1782
  %vm2360 = vcmp.eq.f32.partialorder %v2359, 8.507059e+37
  %v2361 = vand.u32 %v1782, 2147483648
  %v2362 = vor.u32 1.1754944e-38, %v2361
  %v2363 = vsel %vm2360, %v2362, %v2358
  %v2364 = vmul.f32 1.0, %v2363
  %v2365 = vrcp.pop %v1783
  %v2366 = vmul.f32 %v1783, %v2365
  %v2367 = vsub.f32 1.0, %v2366
  %v2368 = vmul.f32 %v2365, %v2367
  %v2369 = vadd.f32 %v2365, %v2368
  %vm2370 = vweird.f32 %v1783
  %vm2371 = vweird.f32 %v2365
  %vm2372 = vmor %vm2370, %vm2371
  %v2373 = vsel %vm2372, %v2365, %v2369
  %v2374 = vand.u32 2147483647, %v1783
  %vm2375 = vcmp.eq.f32.partialorder %v2374, 8.507059e+37
  %v2376 = vand.u32 %v1783, 2147483648
  %v2377 = vor.u32 1.1754944e-38, %v2376
  %v2378 = vsel %vm2375, %v2377, %v2373
  %v2379 = vmul.f32 1.0, %v2378
  %v2380 = vrcp.pop %v1784
  %v2381 = vmul.f32 %v1784, %v2380
  %v2382 = vsub.f32 1.0, %v2381
  %v2383 = vmul.f32 %v2380, %v2382
  %v2384 = vadd.f32 %v2380, %v2383
  %vm2385 = vweird.f32 %v1784
  %vm2386 = vweird.f32 %v2380
  %vm2387 = vmor %vm2385, %vm2386
  %v2388 = vsel %vm2387, %v2380, %v2384
  %v2389 = vand.u32 2147483647, %v1784
  %vm2390 = vcmp.eq.f32.partialorder %v2389, 8.507059e+37
  %v2391 = vand.u32 %v1784, 2147483648
  %v2392 = vor.u32 1.1754944e-38, %v2391
  %v2393 = vsel %vm2390, %v2392, %v2388
  %v2394 = vmul.f32 1.0, %v2393
  %v2395 = vrcp.pop %v1785
  %v2396 = vmul.f32 %v1785, %v2395
  %v2397 = vsub.f32 1.0, %v2396
  %v2398 = vmul.f32 %v2395, %v2397
  %v2399 = vadd.f32 %v2395, %v2398
  %vm2400 = vweird.f32 %v1785
  %vm2401 = vweird.f32 %v2395
  %vm2402 = vmor %vm2400, %vm2401
  %v2403 = vsel %vm2402, %v2395, %v2399
  %v2404 = vand.u32 2147483647, %v1785
  %vm2405 = vcmp.eq.f32.partialorder %v2404, 8.507059e+37
  %v2406 = vand.u32 %v1785, 2147483648
  %v2407 = vor.u32 1.1754944e-38, %v2406
  %v2408 = vsel %vm2405, %v2407, %v2403
  %v2409 = vmul.f32 1.0, %v2408
  %v2410 = vrcp.pop %v1786
  %v2411 = vmul.f32 %v1786, %v2410
  %v2412 = vsub.f32 1.0, %v2411
  %v2413 = vmul.f32 %v2410, %v2412
  %v2414 = vadd.f32 %v2410, %v2413
  %vm2415 = vweird.f32 %v1786
  %vm2416 = vweird.f32 %v2410
  %vm2417 = vmor %vm2415, %vm2416
  %v2418 = vsel %vm2417, %v2410, %v2414
  %v2419 = vand.u32 2147483647, %v1786
  %vm2420 = vcmp.eq.f32.partialorder %v2419, 8.507059e+37
  %v2421 = vand.u32 %v1786, 2147483648
  %v2422 = vor.u32 1.1754944e-38, %v2421
  %v2423 = vsel %vm2420, %v2422, %v2418
  %v2424 = vmul.f32 1.0, %v2423
  %v2425 = vrcp.pop %v1787
  %v2426 = vmul.f32 %v1787, %v2425
  %v2427 = vsub.f32 1.0, %v2426
  %v2428 = vmul.f32 %v2425, %v2427
  %v2429 = vadd.f32 %v2425, %v2428
  %vm2430 = vweird.f32 %v1787
  %vm2431 = vweird.f32 %v2425
  %vm2432 = vmor %vm2430, %vm2431
  %v2433 = vsel %vm2432, %v2425, %v2429
  %v2434 = vand.u32 2147483647, %v1787
  %vm2435 = vcmp.eq.f32.partialorder %v2434, 8.507059e+37
  %v2436 = vand.u32 %v1787, 2147483648
  %v2437 = vor.u32 1.1754944e-38, %v2436
  %v2438 = vsel %vm2435, %v2437, %v2433
  %v2439 = vmul.f32 1.0, %v2438
  %v2440 = vrcp.pop %v1788
  %v2441 = vmul.f32 %v1788, %v2440
  %v2442 = vsub.f32 1.0, %v2441
  %v2443 = vmul.f32 %v2440, %v2442
  %v2444 = vadd.f32 %v2440, %v2443
  %vm2445 = vweird.f32 %v1788
  %vm2446 = vweird.f32 %v2440
  %vm2447 = vmor %vm2445, %vm2446
  %v2448 = vsel %vm2447, %v2440, %v2444
  %v2449 = vand.u32 2147483647, %v1788
  %vm2450 = vcmp.eq.f32.partialorder %v2449, 8.507059e+37
  %v2451 = vand.u32 %v1788, 2147483648
  %v2452 = vor.u32 1.1754944e-38, %v2451
  %v2453 = vsel %vm2450, %v2452, %v2448
  %v2454 = vmul.f32 1.0, %v2453
  %v2455 = vrcp.pop %v1789
  %v2456 = vmul.f32 %v1789, %v2455
  %v2457 = vsub.f32 1.0, %v2456
  %v2458 = vmul.f32 %v2455, %v2457
  %v2459 = vadd.f32 %v2455, %v2458
  %vm2460 = vweird.f32 %v1789
  %vm2461 = vweird.f32 %v2455
  %vm2462 = vmor %vm2460, %vm2461
  %v2463 = vsel %vm2462, %v2455, %v2459
  %v2464 = vand.u32 2147483647, %v1789
  %vm2465 = vcmp.eq.f32.partialorder %v2464, 8.507059e+37
  %v2466 = vand.u32 %v1789, 2147483648
  %v2467 = vor.u32 1.1754944e-38, %v2466
  %v2468 = vsel %vm2465, %v2467, %v2463
  %v2469 = vmul.f32 1.0, %v2468
  %v2470 = vrcp.pop %v1790
  %v2471 = vmul.f32 %v1790, %v2470
  %v2472 = vsub.f32 1.0, %v2471
  %v2473 = vmul.f32 %v2470, %v2472
  %v2474 = vadd.f32 %v2470, %v2473
  %vm2475 = vweird.f32 %v1790
  %vm2476 = vweird.f32 %v2470
  %vm2477 = vmor %vm2475, %vm2476
  %v2478 = vsel %vm2477, %v2470, %v2474
  %v2479 = vand.u32 2147483647, %v1790
  %vm2480 = vcmp.eq.f32.partialorder %v2479, 8.507059e+37
  %v2481 = vand.u32 %v1790, 2147483648
  %v2482 = vor.u32 1.1754944e-38, %v2481
  %v2483 = vsel %vm2480, %v2482, %v2478
  %v2484 = vmul.f32 1.0, %v2483
  %v2485 = vrcp.pop %v1791
  %v2486 = vmul.f32 %v1791, %v2485
  %v2487 = vsub.f32 1.0, %v2486
  %v2488 = vmul.f32 %v2485, %v2487
  %v2489 = vadd.f32 %v2485, %v2488
  %vm2490 = vweird.f32 %v1791
  %vm2491 = vweird.f32 %v2485
  %vm2492 = vmor %vm2490, %vm2491
  %v2493 = vsel %vm2492, %v2485, %v2489
  %v2494 = vand.u32 2147483647, %v1791
  %vm2495 = vcmp.eq.f32.partialorder %v2494, 8.507059e+37
  %v2496 = vand.u32 %v1791, 2147483648
  %v2497 = vor.u32 1.1754944e-38, %v2496
  %v2498 = vsel %vm2495, %v2497, %v2493
  %v2499 = vmul.f32 1.0, %v2498
  %v2500 = vrcp.pop %v1792
  %v2501 = vmul.f32 %v1792, %v2500
  %v2502 = vsub.f32 1.0, %v2501
  %v2503 = vmul.f32 %v2500, %v2502
  %v2504 = vadd.f32 %v2500, %v2503
  %vm2505 = vweird.f32 %v1792
  %vm2506 = vweird.f32 %v2500
  %vm2507 = vmor %vm2505, %vm2506
  %v2508 = vsel %vm2507, %v2500, %v2504
  %v2509 = vand.u32 2147483647, %v1792
  %vm2510 = vcmp.eq.f32.partialorder %v2509, 8.507059e+37
  %v2511 = vand.u32 %v1792, 2147483648
  %v2512 = vor.u32 1.1754944e-38, %v2511
  %v2513 = vsel %vm2510, %v2512, %v2508
  %v2514 = vmul.f32 1.0, %v2513
  %v2515 = vrcp.pop %v1793
  %v2516 = vmul.f32 %v1793, %v2515
  %v2517 = vsub.f32 1.0, %v2516
  %v2518 = vmul.f32 %v2515, %v2517
  %v2519 = vadd.f32 %v2515, %v2518
  %vm2520 = vweird.f32 %v1793
  %vm2521 = vweird.f32 %v2515
  %vm2522 = vmor %vm2520, %vm2521
  %v2523 = vsel %vm2522, %v2515, %v2519
  %v2524 = vand.u32 2147483647, %v1793
  %vm2525 = vcmp.eq.f32.partialorder %v2524, 8.507059e+37
  %v2526 = vand.u32 %v1793, 2147483648
  %v2527 = vor.u32 1.1754944e-38, %v2526
  %v2528 = vsel %vm2525, %v2527, %v2523
  %v2529 = vmul.f32 1.0, %v2528
  %v2530 = vrcp.pop %v1794
  %v2531 = vmul.f32 %v1794, %v2530
  %v2532 = vsub.f32 1.0, %v2531
  %v2533 = vmul.f32 %v2530, %v2532
  %v2534 = vadd.f32 %v2530, %v2533
  %vm2535 = vweird.f32 %v1794
  %vm2536 = vweird.f32 %v2530
  %vm2537 = vmor %vm2535, %vm2536
  %v2538 = vsel %vm2537, %v2530, %v2534
  %v2539 = vand.u32 2147483647, %v1794
  %vm2540 = vcmp.eq.f32.partialorder %v2539, 8.507059e+37
  %v2541 = vand.u32 %v1794, 2147483648
  %v2542 = vor.u32 1.1754944e-38, %v2541
  %v2543 = vsel %vm2540, %v2542, %v2538
  %v2544 = vmul.f32 1.0, %v2543
  %v2545 = vrcp.pop %v1795
  %v2546 = vmul.f32 %v1795, %v2545
  %v2547 = vsub.f32 1.0, %v2546
  %v2548 = vmul.f32 %v2545, %v2547
  %v2549 = vadd.f32 %v2545, %v2548
  %vm2550 = vweird.f32 %v1795
  %vm2551 = vweird.f32 %v2545
  %vm2552 = vmor %vm2550, %vm2551
  %v2553 = vsel %vm2552, %v2545, %v2549
  %v2554 = vand.u32 2147483647, %v1795
  %vm2555 = vcmp.eq.f32.partialorder %v2554, 8.507059e+37
  %v2556 = vand.u32 %v1795, 2147483648
  %v2557 = vor.u32 1.1754944e-38, %v2556
  %v2558 = vsel %vm2555, %v2557, %v2553
  %v2559 = vmul.f32 1.0, %v2558
  %v2560 = vrcp.pop %v1796
  %v2561 = vmul.f32 %v1796, %v2560
  %v2562 = vsub.f32 1.0, %v2561
  %v2563 = vmul.f32 %v2560, %v2562
  %v2564 = vadd.f32 %v2560, %v2563
  %vm2565 = vweird.f32 %v1796
  %vm2566 = vweird.f32 %v2560
  %vm2567 = vmor %vm2565, %vm2566
  %v2568 = vsel %vm2567, %v2560, %v2564
  %v2569 = vand.u32 2147483647, %v1796
  %vm2570 = vcmp.eq.f32.partialorder %v2569, 8.507059e+37
  %v2571 = vand.u32 %v1796, 2147483648
  %v2572 = vor.u32 1.1754944e-38, %v2571
  %v2573 = vsel %vm2570, %v2572, %v2568
  %v2574 = vmul.f32 1.0, %v2573
  %v2575 = vrcp.pop %v1797
  %v2576 = vmul.f32 %v1797, %v2575
  %v2577 = vsub.f32 1.0, %v2576
  %v2578 = vmul.f32 %v2575, %v2577
  %v2579 = vadd.f32 %v2575, %v2578
  %vm2580 = vweird.f32 %v1797
  %vm2581 = vweird.f32 %v2575
  %vm2582 = vmor %vm2580, %vm2581
  %v2583 = vsel %vm2582, %v2575, %v2579
  %v2584 = vand.u32 2147483647, %v1797
  %vm2585 = vcmp.eq.f32.partialorder %v2584, 8.507059e+37
  %v2586 = vand.u32 %v1797, 2147483648
  %v2587 = vor.u32 1.1754944e-38, %v2586
  %v2588 = vsel %vm2585, %v2587, %v2583
  %v2589 = vmul.f32 1.0, %v2588
  %v2590 = vrcp.pop %v1798
  %v2591 = vmul.f32 %v1798, %v2590
  %v2592 = vsub.f32 1.0, %v2591
  %v2593 = vmul.f32 %v2590, %v2592
  %v2594 = vadd.f32 %v2590, %v2593
  %vm2595 = vweird.f32 %v1798
  %vm2596 = vweird.f32 %v2590
  %vm2597 = vmor %vm2595, %vm2596
  %v2598 = vsel %vm2597, %v2590, %v2594
  %v2599 = vand.u32 2147483647, %v1798
  %vm2600 = vcmp.eq.f32.partialorder %v2599, 8.507059e+37
  %v2601 = vand.u32 %v1798, 2147483648
  %v2602 = vor.u32 1.1754944e-38, %v2601
  %v2603 = vsel %vm2600, %v2602, %v2598
  %v2604 = vmul.f32 1.0, %v2603
  %v2605 = vrcp.pop %v1799
  %v2606 = vmul.f32 %v1799, %v2605
  %v2607 = vsub.f32 1.0, %v2606
  %v2608 = vmul.f32 %v2605, %v2607
  %v2609 = vadd.f32 %v2605, %v2608
  %vm2610 = vweird.f32 %v1799
  %vm2611 = vweird.f32 %v2605
  %vm2612 = vmor %vm2610, %vm2611
  %v2613 = vsel %vm2612, %v2605, %v2609
  %v2614 = vand.u32 2147483647, %v1799
  %vm2615 = vcmp.eq.f32.partialorder %v2614, 8.507059e+37
  %v2616 = vand.u32 %v1799, 2147483648
  %v2617 = vor.u32 1.1754944e-38, %v2616
  %v2618 = vsel %vm2615, %v2617, %v2613
  %v2619 = vmul.f32 1.0, %v2618
  %v2620 = vrcp.pop %v1800
  %v2621 = vmul.f32 %v1800, %v2620
  %v2622 = vsub.f32 1.0, %v2621
  %v2623 = vmul.f32 %v2620, %v2622
  %v2624 = vadd.f32 %v2620, %v2623
  %vm2625 = vweird.f32 %v1800
  %vm2626 = vweird.f32 %v2620
  %vm2627 = vmor %vm2625, %vm2626
  %v2628 = vsel %vm2627, %v2620, %v2624
  %v2629 = vand.u32 2147483647, %v1800
  %vm2630 = vcmp.eq.f32.partialorder %v2629, 8.507059e+37
  %v2631 = vand.u32 %v1800, 2147483648
  %v2632 = vor.u32 1.1754944e-38, %v2631
  %v2633 = vsel %vm2630, %v2632, %v2628
  %v2634 = vmul.f32 1.0, %v2633
  %v2635 = vrcp.pop %v1801
  %v2636 = vmul.f32 %v1801, %v2635
  %v2637 = vsub.f32 1.0, %v2636
  %v2638 = vmul.f32 %v2635, %v2637
  %v2639 = vadd.f32 %v2635, %v2638
  %vm2640 = vweird.f32 %v1801
  %vm2641 = vweird.f32 %v2635
  %vm2642 = vmor %vm2640, %vm2641
  %v2643 = vsel %vm2642, %v2635, %v2639
  %v2644 = vand.u32 2147483647, %v1801
  %vm2645 = vcmp.eq.f32.partialorder %v2644, 8.507059e+37
  %v2646 = vand.u32 %v1801, 2147483648
  %v2647 = vor.u32 1.1754944e-38, %v2646
  %v2648 = vsel %vm2645, %v2647, %v2643
  %v2649 = vmul.f32 1.0, %v2648
  %v2650 = vrcp.pop %v1802
  %v2651 = vmul.f32 %v1802, %v2650
  %v2652 = vsub.f32 1.0, %v2651
  %v2653 = vmul.f32 %v2650, %v2652
  %v2654 = vadd.f32 %v2650, %v2653
  %vm2655 = vweird.f32 %v1802
  %vm2656 = vweird.f32 %v2650
  %vm2657 = vmor %vm2655, %vm2656
  %v2658 = vsel %vm2657, %v2650, %v2654
  %v2659 = vand.u32 2147483647, %v1802
  %vm2660 = vcmp.eq.f32.partialorder %v2659, 8.507059e+37
  %v2661 = vand.u32 %v1802, 2147483648
  %v2662 = vor.u32 1.1754944e-38, %v2661
  %v2663 = vsel %vm2660, %v2662, %v2658
  %v2664 = vmul.f32 1.0, %v2663
  %v2665 = vrcp.pop %v1803
  %v2666 = vmul.f32 %v1803, %v2665
  %v2667 = vsub.f32 1.0, %v2666
  %v2668 = vmul.f32 %v2665, %v2667
  %v2669 = vadd.f32 %v2665, %v2668
  %vm2670 = vweird.f32 %v1803
  %vm2671 = vweird.f32 %v2665
  %vm2672 = vmor %vm2670, %vm2671
  %v2673 = vsel %vm2672, %v2665, %v2669
  %v2674 = vand.u32 2147483647, %v1803
  %vm2675 = vcmp.eq.f32.partialorder %v2674, 8.507059e+37
  %v2676 = vand.u32 %v1803, 2147483648
  %v2677 = vor.u32 1.1754944e-38, %v2676
  %v2678 = vsel %vm2675, %v2677, %v2673
  %v2679 = vmul.f32 1.0, %v2678
  %v2680 = vrcp.pop %v1804
  %v2681 = vmul.f32 %v1804, %v2680
  %v2682 = vsub.f32 1.0, %v2681
  %v2683 = vmul.f32 %v2680, %v2682
  %v2684 = vadd.f32 %v2680, %v2683
  %vm2685 = vweird.f32 %v1804
  %vm2686 = vweird.f32 %v2680
  %vm2687 = vmor %vm2685, %vm2686
  %v2688 = vsel %vm2687, %v2680, %v2684
  %v2689 = vand.u32 2147483647, %v1804
  %vm2690 = vcmp.eq.f32.partialorder %v2689, 8.507059e+37
  %v2691 = vand.u32 %v1804, 2147483648
  %v2692 = vor.u32 1.1754944e-38, %v2691
  %v2693 = vsel %vm2690, %v2692, %v2688
  %v2694 = vmul.f32 1.0, %v2693
  %v2695 = vrcp.pop %v1805
  %v2696 = vmul.f32 %v1805, %v2695
  %v2697 = vsub.f32 1.0, %v2696
  %v2698 = vmul.f32 %v2695, %v2697
  %v2699 = vadd.f32 %v2695, %v2698
  %vm2700 = vweird.f32 %v1805
  %vm2701 = vweird.f32 %v2695
  %vm2702 = vmor %vm2700, %vm2701
  %v2703 = vsel %vm2702, %v2695, %v2699
  %v2704 = vand.u32 2147483647, %v1805
  %vm2705 = vcmp.eq.f32.partialorder %v2704, 8.507059e+37
  %v2706 = vand.u32 %v1805, 2147483648
  %v2707 = vor.u32 1.1754944e-38, %v2706
  %v2708 = vsel %vm2705, %v2707, %v2703
  %v2709 = vmul.f32 1.0, %v2708
  %v2710 = vrcp.pop %v1806
  %v2711 = vmul.f32 %v1806, %v2710
  %v2712 = vsub.f32 1.0, %v2711
  %v2713 = vmul.f32 %v2710, %v2712
  %v2714 = vadd.f32 %v2710, %v2713
  %vm2715 = vweird.f32 %v1806
  %vm2716 = vweird.f32 %v2710
  %vm2717 = vmor %vm2715, %vm2716
  %v2718 = vsel %vm2717, %v2710, %v2714
  %v2719 = vand.u32 2147483647, %v1806
  %vm2720 = vcmp.eq.f32.partialorder %v2719, 8.507059e+37
  %v2721 = vand.u32 %v1806, 2147483648
  %v2722 = vor.u32 1.1754944e-38, %v2721
  %v2723 = vsel %vm2720, %v2722, %v2718
  %v2724 = vmul.f32 1.0, %v2723
  %v2725 = vrcp.pop %v1807
  %v2726 = vmul.f32 %v1807, %v2725
  %v2727 = vsub.f32 1.0, %v2726
  %v2728 = vmul.f32 %v2725, %v2727
  %v2729 = vadd.f32 %v2725, %v2728
  %vm2730 = vweird.f32 %v1807
  %vm2731 = vweird.f32 %v2725
  %vm2732 = vmor %vm2730, %vm2731
  %v2733 = vsel %vm2732, %v2725, %v2729
  %v2734 = vand.u32 2147483647, %v1807
  %vm2735 = vcmp.eq.f32.partialorder %v2734, 8.507059e+37
  %v2736 = vand.u32 %v1807, 2147483648
  %v2737 = vor.u32 1.1754944e-38, %v2736
  %v2738 = vsel %vm2735, %v2737, %v2733
  %v2739 = vmul.f32 1.0, %v2738
  %v2740 = vrcp.pop %v1808
  %v2741 = vmul.f32 %v1808, %v2740
  %v2742 = vsub.f32 1.0, %v2741
  %v2743 = vmul.f32 %v2740, %v2742
  %v2744 = vadd.f32 %v2740, %v2743
  %vm2745 = vweird.f32 %v1808
  %vm2746 = vweird.f32 %v2740
  %vm2747 = vmor %vm2745, %vm2746
  %v2748 = vsel %vm2747, %v2740, %v2744
  %v2749 = vand.u32 2147483647, %v1808
  %vm2750 = vcmp.eq.f32.partialorder %v2749, 8.507059e+37
  %v2751 = vand.u32 %v1808, 2147483648
  %v2752 = vor.u32 1.1754944e-38, %v2751
  %v2753 = vsel %vm2750, %v2752, %v2748
  %v2754 = vmul.f32 1.0, %v2753
  %v2755 = vrcp.pop %v1809
  %v2756 = vmul.f32 %v1809, %v2755
  %v2757 = vsub.f32 1.0, %v2756
  %v2758 = vmul.f32 %v2755, %v2757
  %v2759 = vadd.f32 %v2755, %v2758
  %vm2760 = vweird.f32 %v1809
  %vm2761 = vweird.f32 %v2755
  %vm2762 = vmor %vm2760, %vm2761
  %v2763 = vsel %vm2762, %v2755, %v2759
  %v2764 = vand.u32 2147483647, %v1809
  %vm2765 = vcmp.eq.f32.partialorder %v2764, 8.507059e+37
  %v2766 = vand.u32 %v1809, 2147483648
  %v2767 = vor.u32 1.1754944e-38, %v2766
  %v2768 = vsel %vm2765, %v2767, %v2763
  %v2769 = vmul.f32 1.0, %v2768
  %v2770 = vsub.f32 %v162, 0.5
  %v2771 = vsub.f32 %v163, 0.5
  %v2772 = vsub.f32 %v164, 0.5
  %v2773 = vsub.f32 %v165, 0.5
  %v2774 = vsub.f32 %v166, 0.5
  %v2775 = vsub.f32 %v167, 0.5
  %v2776 = vsub.f32 %v168, 0.5
  %v2777 = vsub.f32 %v169, 0.5
  %v2778 = vsub.f32 %v170, 0.5
  %v2779 = vsub.f32 %v171, 0.5
  %v2780 = vsub.f32 %v172, 0.5
  %v2781 = vsub.f32 %v173, 0.5
  %v2782 = vsub.f32 %v174, 0.5
  %v2783 = vsub.f32 %v175, 0.5
  %v2784 = vsub.f32 %v176, 0.5
  %v2785 = vsub.f32 %v177, 0.5
  %v2786 = vsub.f32 %v178, 0.5
  %v2787 = vsub.f32 %v179, 0.5
  %v2788 = vsub.f32 %v180, 0.5
  %v2789 = vsub.f32 %v181, 0.5
  %v2790 = vsub.f32 %v182, 0.5
  %v2791 = vsub.f32 %v183, 0.5
  %v2792 = vsub.f32 %v184, 0.5
  %v2793 = vsub.f32 %v185, 0.5
  %v2794 = vsub.f32 %v186, 0.5
  %v2795 = vsub.f32 %v187, 0.5
  %v2796 = vsub.f32 %v188, 0.5
  %v2797 = vsub.f32 %v189, 0.5
  %v2798 = vsub.f32 %v190, 0.5
  %v2799 = vsub.f32 %v191, 0.5
  %v2800 = vsub.f32 %v192, 0.5
  %v2801 = vsub.f32 %v193, 0.5
  %v2802 = vsub.f32 %v194, 0.5
  %v2803 = vsub.f32 %v195, 0.5
  %v2804 = vsub.f32 %v196, 0.5
  %v2805 = vsub.f32 %v197, 0.5
  %v2806 = vsub.f32 %v198, 0.5
  %v2807 = vsub.f32 %v199, 0.5
  %v2808 = vsub.f32 %v200, 0.5
  %v2809 = vsub.f32 %v201, 0.5
  %v2810 = vsub.f32 %v202, 0.5
  %v2811 = vsub.f32 %v203, 0.5
  %v2812 = vsub.f32 %v204, 0.5
  %v2813 = vsub.f32 %v205, 0.5
  %v2814 = vsub.f32 %v206, 0.5
  %v2815 = vsub.f32 %v207, 0.5
  %v2816 = vsub.f32 %v208, 0.5
  %v2817 = vsub.f32 %v209, 0.5
  %v2818 = vsub.f32 %v210, 0.5
  %v2819 = vsub.f32 %v211, 0.5
  %v2820 = vsub.f32 %v212, 0.5
  %v2821 = vsub.f32 %v213, 0.5
  %v2822 = vsub.f32 %v214, 0.5
  %v2823 = vsub.f32 %v215, 0.5
  %v2824 = vsub.f32 %v216, 0.5
  %v2825 = vsub.f32 %v217, 0.5
  %v2826 = vsub.f32 %v218, 0.5
  %v2827 = vsub.f32 %v219, 0.5
  %v2828 = vsub.f32 %v220, 0.5
  %v2829 = vsub.f32 %v221, 0.5
  %v2830 = vsub.f32 %v222, 0.5
  %v2831 = vsub.f32 %v223, 0.5
  %v2832 = vsub.f32 %v224, 0.5
  %v2833 = vsub.f32 %v225, 0.5
  %v2834 = vmul.f32 %v2770, %v290
  %v2835 = vmul.f32 %v2771, %v291
  %v2836 = vmul.f32 %v2772, %v292
  %v2837 = vmul.f32 %v2773, %v293
  %v2838 = vmul.f32 %v2774, %v294
  %v2839 = vmul.f32 %v2775, %v295
  %v2840 = vmul.f32 %v2776, %v296
  %v2841 = vmul.f32 %v2777, %v297
  %v2842 = vmul.f32 %v2778, %v298
  %v2843 = vmul.f32 %v2779, %v299
  %v2844 = vmul.f32 %v2780, %v300
  %v2845 = vmul.f32 %v2781, %v301
  %v2846 = vmul.f32 %v2782, %v302
  %v2847 = vmul.f32 %v2783, %v303
  %v2848 = vmul.f32 %v2784, %v304
  %v2849 = vmul.f32 %v2785, %v305
  %v2850 = vmul.f32 %v2786, %v290
  %v2851 = vmul.f32 %v2787, %v291
  %v2852 = vmul.f32 %v2788, %v292
  %v2853 = vmul.f32 %v2789, %v293
  %v2854 = vmul.f32 %v2790, %v294
  %v2855 = vmul.f32 %v2791, %v295
  %v2856 = vmul.f32 %v2792, %v296
  %v2857 = vmul.f32 %v2793, %v297
  %v2858 = vmul.f32 %v2794, %v298
  %v2859 = vmul.f32 %v2795, %v299
  %v2860 = vmul.f32 %v2796, %v300
  %v2861 = vmul.f32 %v2797, %v301
  %v2862 = vmul.f32 %v2798, %v302
  %v2863 = vmul.f32 %v2799, %v303
  %v2864 = vmul.f32 %v2800, %v304
  %v2865 = vmul.f32 %v2801, %v305
  %v2866 = vmul.f32 %v2802, %v290
  %v2867 = vmul.f32 %v2803, %v291
  %v2868 = vmul.f32 %v2804, %v292
  %v2869 = vmul.f32 %v2805, %v293
  %v2870 = vmul.f32 %v2806, %v294
  %v2871 = vmul.f32 %v2807, %v295
  %v2872 = vmul.f32 %v2808, %v296
  %v2873 = vmul.f32 %v2809, %v297
  %v2874 = vmul.f32 %v2810, %v298
  %v2875 = vmul.f32 %v2811, %v299
  %v2876 = vmul.f32 %v2812, %v300
  %v2877 = vmul.f32 %v2813, %v301
  %v2878 = vmul.f32 %v2814, %v302
  %v2879 = vmul.f32 %v2815, %v303
  %v2880 = vmul.f32 %v2816, %v304
  %v2881 = vmul.f32 %v2817, %v305
  %v2882 = vmul.f32 %v2818, %v290
  %v2883 = vmul.f32 %v2819, %v291
  %v2884 = vmul.f32 %v2820, %v292
  %v2885 = vmul.f32 %v2821, %v293
  %v2886 = vmul.f32 %v2822, %v294
  %v2887 = vmul.f32 %v2823, %v295
  %v2888 = vmul.f32 %v2824, %v296
  %v2889 = vmul.f32 %v2825, %v297
  %v2890 = vmul.f32 %v2826, %v298
  %v2891 = vmul.f32 %v2827, %v299
  %v2892 = vmul.f32 %v2828, %v300
  %v2893 = vmul.f32 %v2829, %v301
  %v2894 = vmul.f32 %v2830, %v302
  %v2895 = vmul.f32 %v2831, %v303
  %v2896 = vmul.f32 %v2832, %v304
  %v2897 = vmul.f32 %v2833, %v305
  %v2898 = vadd.f32 %v2834, %v370
  %v2899 = vadd.f32 %v2835, %v371
  %v2900 = vadd.f32 %v2836, %v372
  %v2901 = vadd.f32 %v2837, %v373
  %v2902 = vadd.f32 %v2838, %v374
  %v2903 = vadd.f32 %v2839, %v375
  %v2904 = vadd.f32 %v2840, %v376
  %v2905 = vadd.f32 %v2841, %v377
  %v2906 = vadd.f32 %v2842, %v378
  %v2907 = vadd.f32 %v2843, %v379
  %v2908 = vadd.f32 %v2844, %v380
  %v2909 = vadd.f32 %v2845, %v381
  %v2910 = vadd.f32 %v2846, %v382
  %v2911 = vadd.f32 %v2847, %v383
  %v2912 = vadd.f32 %v2848, %v384
  %v2913 = vadd.f32 %v2849, %v385
  %v2914 = vadd.f32 %v2850, %v370
  %v2915 = vadd.f32 %v2851, %v371
  %v2916 = vadd.f32 %v2852, %v372
  %v2917 = vadd.f32 %v2853, %v373
  %v2918 = vadd.f32 %v2854, %v374
  %v2919 = vadd.f32 %v2855, %v375
  %v2920 = vadd.f32 %v2856, %v376
  %v2921 = vadd.f32 %v2857, %v377
  %v2922 = vadd.f32 %v2858, %v378
  %v2923 = vadd.f32 %v2859, %v379
  %v2924 = vadd.f32 %v2860, %v380
  %v2925 = vadd.f32 %v2861, %v381
  %v2926 = vadd.f32 %v2862, %v382
  %v2927 = vadd.f32 %v2863, %v383
  %v2928 = vadd.f32 %v2864, %v384
  %v2929 = vadd.f32 %v2865, %v385
  %v2930 = vadd.f32 %v2866, %v370
  %v2931 = vadd.f32 %v2867, %v371
  %v2932 = vadd.f32 %v2868, %v372
  %v2933 = vadd.f32 %v2869, %v373
  %v2934 = vadd.f32 %v2870, %v374
  %v2935 = vadd.f32 %v2871, %v375
  %v2936 = vadd.f32 %v2872, %v376
  %v2937 = vadd.f32 %v2873, %v377
  %v2938 = vadd.f32 %v2874, %v378
  %v2939 = vadd.f32 %v2875, %v379
  %v2940 = vadd.f32 %v2876, %v380
  %v2941 = vadd.f32 %v2877, %v381
  %v2942 = vadd.f32 %v2878, %v382
  %v2943 = vadd.f32 %v2879, %v383
  %v2944 = vadd.f32 %v2880, %v384
  %v2945 = vadd.f32 %v2881, %v385
  %v2946 = vadd.f32 %v2882, %v370
  %v2947 = vadd.f32 %v2883, %v371
  %v2948 = vadd.f32 %v2884, %v372
  %v2949 = vadd.f32 %v2885, %v373
  %v2950 = vadd.f32 %v2886, %v374
  %v2951 = vadd.f32 %v2887, %v375
  %v2952 = vadd.f32 %v2888, %v376
  %v2953 = vadd.f32 %v2889, %v377
  %v2954 = vadd.f32 %v2890, %v378
  %v2955 = vadd.f32 %v2891, %v379
  %v2956 = vadd.f32 %v2892, %v380
  %v2957 = vadd.f32 %v2893, %v381
  %v2958 = vadd.f32 %v2894, %v382
  %v2959 = vadd.f32 %v2895, %v383
  %v2960 = vadd.f32 %v2896, %v384
  %v2961 = vadd.f32 %v2897, %v385
  %v2962 = vtanh.pop %v2898
  %v2963 = vtanh.pop %v2899
  %v2964 = vtanh.pop %v2900
  %v2965 = vtanh.pop %v2901
  %v2966 = vtanh.pop %v2902
  %v2967 = vtanh.pop %v2903
  %v2968 = vtanh.pop %v2904
  %v2969 = vtanh.pop %v2905
  %v2970 = vtanh.pop %v2906
  %v2971 = vtanh.pop %v2907
  %v2972 = vtanh.pop %v2908
  %v2973 = vtanh.pop %v2909
  %v2974 = vtanh.pop %v2910
  %v2975 = vtanh.pop %v2911
  %v2976 = vtanh.pop %v2912
  %v2977 = vtanh.pop %v2913
  %v2978 = vtanh.pop %v2914
  %v2979 = vtanh.pop %v2915
  %v2980 = vtanh.pop %v2916
  %v2981 = vtanh.pop %v2917
  %v2982 = vtanh.pop %v2918
  %v2983 = vtanh.pop %v2919
  %v2984 = vtanh.pop %v2920
  %v2985 = vtanh.pop %v2921
  %v2986 = vtanh.pop %v2922
  %v2987 = vtanh.pop %v2923
  %v2988 = vtanh.pop %v2924
  %v2989 = vtanh.pop %v2925
  %v2990 = vtanh.pop %v2926
  %v2991 = vtanh.pop %v2927
  %v2992 = vtanh.pop %v2928
  %v2993 = vtanh.pop %v2929
  %v2994 = vtanh.pop %v2930
  %v2995 = vtanh.pop %v2931
  %v2996 = vtanh.pop %v2932
  %v2997 = vtanh.pop %v2933
  %v2998 = vtanh.pop %v2934
  %v2999 = vtanh.pop %v2935
  %v3000 = vtanh.pop %v2936
  %v3001 = vtanh.pop %v2937
  %v3002 = vtanh.pop %v2938
  %v3003 = vtanh.pop %v2939
  %v3004 = vtanh.pop %v2940
  %v3005 = vtanh.pop %v2941
  %v3006 = vtanh.pop %v2942
  %v3007 = vtanh.pop %v2943
  %v3008 = vtanh.pop %v2944
  %v3009 = vtanh.pop %v2945
  %v3010 = vtanh.pop %v2946
  %v3011 = vtanh.pop %v2947
  %v3012 = vtanh.pop %v2948
  %v3013 = vtanh.pop %v2949
  %v3014 = vtanh.pop %v2950
  %v3015 = vtanh.pop %v2951
  %v3016 = vtanh.pop %v2952
  %v3017 = vtanh.pop %v2953
  %v3018 = vtanh.pop %v2954
  %v3019 = vtanh.pop %v2955
  %v3020 = vtanh.pop %v2956
  %v3021 = vtanh.pop %v2957
  %v3022 = vtanh.pop %v2958
  %v3023 = vtanh.pop %v2959
  %v3024 = vtanh.pop %v2960
  %v3025 = vtanh.pop %v2961
  %v3026 = vmul.f32 %v2962, %v514
  %v3027 = vmul.f32 %v2963, %v515
  %v3028 = vmul.f32 %v2964, %v516
  %v3029 = vmul.f32 %v2965, %v517
  %v3030 = vmul.f32 %v2966, %v518
  %v3031 = vmul.f32 %v2967, %v519
  %v3032 = vmul.f32 %v2968, %v520
  %v3033 = vmul.f32 %v2969, %v521
  %v3034 = vmul.f32 %v2970, %v522
  %v3035 = vmul.f32 %v2971, %v523
  %v3036 = vmul.f32 %v2972, %v524
  %v3037 = vmul.f32 %v2973, %v525
  %v3038 = vmul.f32 %v2974, %v526
  %v3039 = vmul.f32 %v2975, %v527
  %v3040 = vmul.f32 %v2976, %v528
  %v3041 = vmul.f32 %v2977, %v529
  %v3042 = vmul.f32 %v2978, %v514
  %v3043 = vmul.f32 %v2979, %v515
  %v3044 = vmul.f32 %v2980, %v516
  %v3045 = vmul.f32 %v2981, %v517
  %v3046 = vmul.f32 %v2982, %v518
  %v3047 = vmul.f32 %v2983, %v519
  %v3048 = vmul.f32 %v2984, %v520
  %v3049 = vmul.f32 %v2985, %v521
  %v3050 = vmul.f32 %v2986, %v522
  %v3051 = vmul.f32 %v2987, %v523
  %v3052 = vmul.f32 %v2988, %v524
  %v3053 = vmul.f32 %v2989, %v525
  %v3054 = vmul.f32 %v2990, %v526
  %v3055 = vmul.f32 %v2991, %v527
  %v3056 = vmul.f32 %v2992, %v528
  %v3057 = vmul.f32 %v2993, %v529
  %v3058 = vmul.f32 %v2994, %v514
  %v3059 = vmul.f32 %v2995, %v515
  %v3060 = vmul.f32 %v2996, %v516
  %v3061 = vmul.f32 %v2997, %v517
  %v3062 = vmul.f32 %v2998, %v518
  %v3063 = vmul.f32 %v2999, %v519
  %v3064 = vmul.f32 %v3000, %v520
  %v3065 = vmul.f32 %v3001, %v521
  %v3066 = vmul.f32 %v3002, %v522
  %v3067 = vmul.f32 %v3003, %v523
  %v3068 = vmul.f32 %v3004, %v524
  %v3069 = vmul.f32 %v3005, %v525
  %v3070 = vmul.f32 %v3006, %v526
  %v3071 = vmul.f32 %v3007, %v527
  %v3072 = vmul.f32 %v3008, %v528
  %v3073 = vmul.f32 %v3009, %v529
  %v3074 = vmul.f32 %v3010, %v514
  %v3075 = vmul.f32 %v3011, %v515
  %v3076 = vmul.f32 %v3012, %v516
  %v3077 = vmul.f32 %v3013, %v517
  %v3078 = vmul.f32 %v3014, %v518
  %v3079 = vmul.f32 %v3015, %v519
  %v3080 = vmul.f32 %v3016, %v520
  %v3081 = vmul.f32 %v3017, %v521
  %v3082 = vmul.f32 %v3018, %v522
  %v3083 = vmul.f32 %v3019, %v523
  %v3084 = vmul.f32 %v3020, %v524
  %v3085 = vmul.f32 %v3021, %v525
  %v3086 = vmul.f32 %v3022, %v526
  %v3087 = vmul.f32 %v3023, %v527
  %v3088 = vmul.f32 %v3024, %v528
  %v3089 = vmul.f32 %v3025, %v529
  %v3090 = vadd.f32 %v2898, %v3026
  %v3091 = vadd.f32 %v2899, %v3027
  %v3092 = vadd.f32 %v2900, %v3028
  %v3093 = vadd.f32 %v2901, %v3029
  %v3094 = vadd.f32 %v2902, %v3030
  %v3095 = vadd.f32 %v2903, %v3031
  %v3096 = vadd.f32 %v2904, %v3032
  %v3097 = vadd.f32 %v2905, %v3033
  %v3098 = vadd.f32 %v2906, %v3034
  %v3099 = vadd.f32 %v2907, %v3035
  %v3100 = vadd.f32 %v2908, %v3036
  %v3101 = vadd.f32 %v2909, %v3037
  %v3102 = vadd.f32 %v2910, %v3038
  %v3103 = vadd.f32 %v2911, %v3039
  %v3104 = vadd.f32 %v2912, %v3040
  %v3105 = vadd.f32 %v2913, %v3041
  %v3106 = vadd.f32 %v2914, %v3042
  %v3107 = vadd.f32 %v2915, %v3043
  %v3108 = vadd.f32 %v2916, %v3044
  %v3109 = vadd.f32 %v2917, %v3045
  %v3110 = vadd.f32 %v2918, %v3046
  %v3111 = vadd.f32 %v2919, %v3047
  %v3112 = vadd.f32 %v2920, %v3048
  %v3113 = vadd.f32 %v2921, %v3049
  %v3114 = vadd.f32 %v2922, %v3050
  %v3115 = vadd.f32 %v2923, %v3051
  %v3116 = vadd.f32 %v2924, %v3052
  %v3117 = vadd.f32 %v2925, %v3053
  %v3118 = vadd.f32 %v2926, %v3054
  %v3119 = vadd.f32 %v2927, %v3055
  %v3120 = vadd.f32 %v2928, %v3056
  %v3121 = vadd.f32 %v2929, %v3057
  %v3122 = vadd.f32 %v2930, %v3058
  %v3123 = vadd.f32 %v2931, %v3059
  %v3124 = vadd.f32 %v2932, %v3060
  %v3125 = vadd.f32 %v2933, %v3061
  %v3126 = vadd.f32 %v2934, %v3062
  %v3127 = vadd.f32 %v2935, %v3063
  %v3128 = vadd.f32 %v2936, %v3064
  %v3129 = vadd.f32 %v2937, %v3065
  %v3130 = vadd.f32 %v2938, %v3066
  %v3131 = vadd.f32 %v2939, %v3067
  %v3132 = vadd.f32 %v2940, %v3068
  %v3133 = vadd.f32 %v2941, %v3069
  %v3134 = vadd.f32 %v2942, %v3070
  %v3135 = vadd.f32 %v2943, %v3071
  %v3136 = vadd.f32 %v2944, %v3072
  %v3137 = vadd.f32 %v2945, %v3073
  %v3138 = vadd.f32 %v2946, %v3074
  %v3139 = vadd.f32 %v2947, %v3075
  %v3140 = vadd.f32 %v2948, %v3076
  %v3141 = vadd.f32 %v2949, %v3077
  %v3142 = vadd.f32 %v2950, %v3078
  %v3143 = vadd.f32 %v2951, %v3079
  %v3144 = vadd.f32 %v2952, %v3080
  %v3145 = vadd.f32 %v2953, %v3081
  %v3146 = vadd.f32 %v2954, %v3082
  %v3147 = vadd.f32 %v2955, %v3083
  %v3148 = vadd.f32 %v2956, %v3084
  %v3149 = vadd.f32 %v2957, %v3085
  %v3150 = vadd.f32 %v2958, %v3086
  %v3151 = vadd.f32 %v2959, %v3087
  %v3152 = vadd.f32 %v2960, %v3088
  %v3153 = vadd.f32 %v2961, %v3089
  %v3154 = vmul.f32 %v3090, %v658
  %v3155 = vmul.f32 %v3091, %v659
  %v3156 = vmul.f32 %v3092, %v660
  %v3157 = vmul.f32 %v3093, %v661
  %v3158 = vmul.f32 %v3094, %v662
  %v3159 = vmul.f32 %v3095, %v663
  %v3160 = vmul.f32 %v3096, %v664
  %v3161 = vmul.f32 %v3097, %v665
  %v3162 = vmul.f32 %v3098, %v666
  %v3163 = vmul.f32 %v3099, %v667
  %v3164 = vmul.f32 %v3100, %v668
  %v3165 = vmul.f32 %v3101, %v669
  %v3166 = vmul.f32 %v3102, %v670
  %v3167 = vmul.f32 %v3103, %v671
  %v3168 = vmul.f32 %v3104, %v672
  %v3169 = vmul.f32 %v3105, %v673
  %v3170 = vmul.f32 %v3106, %v658
  %v3171 = vmul.f32 %v3107, %v659
  %v3172 = vmul.f32 %v3108, %v660
  %v3173 = vmul.f32 %v3109, %v661
  %v3174 = vmul.f32 %v3110, %v662
  %v3175 = vmul.f32 %v3111, %v663
  %v3176 = vmul.f32 %v3112, %v664
  %v3177 = vmul.f32 %v3113, %v665
  %v3178 = vmul.f32 %v3114, %v666
  %v3179 = vmul.f32 %v3115, %v667
  %v3180 = vmul.f32 %v3116, %v668
  %v3181 = vmul.f32 %v3117, %v669
  %v3182 = vmul.f32 %v3118, %v670
  %v3183 = vmul.f32 %v3119, %v671
  %v3184 = vmul.f32 %v3120, %v672
  %v3185 = vmul.f32 %v3121, %v673
  %v3186 = vmul.f32 %v3122, %v658
  %v3187 = vmul.f32 %v3123, %v659
  %v3188 = vmul.f32 %v3124, %v660
  %v3189 = vmul.f32 %v3125, %v661
  %v3190 = vmul.f32 %v3126, %v662
  %v3191 = vmul.f32 %v3127, %v663
  %v3192 = vmul.f32 %v3128, %v664
  %v3193 = vmul.f32 %v3129, %v665
  %v3194 = vmul.f32 %v3130, %v666
  %v3195 = vmul.f32 %v3131, %v667
  %v3196 = vmul.f32 %v3132, %v668
  %v3197 = vmul.f32 %v3133, %v669
  %v3198 = vmul.f32 %v3134, %v670
  %v3199 = vmul.f32 %v3135, %v671
  %v3200 = vmul.f32 %v3136, %v672
  %v3201 = vmul.f32 %v3137, %v673
  %v3202 = vmul.f32 %v3138, %v658
  %v3203 = vmul.f32 %v3139, %v659
  %v3204 = vmul.f32 %v3140, %v660
  %v3205 = vmul.f32 %v3141, %v661
  %v3206 = vmul.f32 %v3142, %v662
  %v3207 = vmul.f32 %v3143, %v663
  %v3208 = vmul.f32 %v3144, %v664
  %v3209 = vmul.f32 %v3145, %v665
  %v3210 = vmul.f32 %v3146, %v666
  %v3211 = vmul.f32 %v3147, %v667
  %v3212 = vmul.f32 %v3148, %v668
  %v3213 = vmul.f32 %v3149, %v669
  %v3214 = vmul.f32 %v3150, %v670
  %v3215 = vmul.f32 %v3151, %v671
  %v3216 = vmul.f32 %v3152, %v672
  %v3217 = vmul.f32 %v3153, %v673
  %v3218 = vadd.f32 %v3154, %v738
  %v3219 = vadd.f32 %v3155, %v739
  %v3220 = vadd.f32 %v3156, %v740
  %v3221 = vadd.f32 %v3157, %v741
  %v3222 = vadd.f32 %v3158, %v742
  %v3223 = vadd.f32 %v3159, %v743
  %v3224 = vadd.f32 %v3160, %v744
  %v3225 = vadd.f32 %v3161, %v745
  %v3226 = vadd.f32 %v3162, %v746
  %v3227 = vadd.f32 %v3163, %v747
  %v3228 = vadd.f32 %v3164, %v748
  %v3229 = vadd.f32 %v3165, %v749
  %v3230 = vadd.f32 %v3166, %v750
  %v3231 = vadd.f32 %v3167, %v751
  %v3232 = vadd.f32 %v3168, %v752
  %v3233 = vadd.f32 %v3169, %v753
  %v3234 = vadd.f32 %v3170, %v738
  %v3235 = vadd.f32 %v3171, %v739
  %v3236 = vadd.f32 %v3172, %v740
  %v3237 = vadd.f32 %v3173, %v741
  %v3238 = vadd.f32 %v3174, %v742
  %v3239 = vadd.f32 %v3175, %v743
  %v3240 = vadd.f32 %v3176, %v744
  %v3241 = vadd.f32 %v3177, %v745
  %v3242 = vadd.f32 %v3178, %v746
  %v3243 = vadd.f32 %v3179, %v747
  %v3244 = vadd.f32 %v3180, %v748
  %v3245 = vadd.f32 %v3181, %v749
  %v3246 = vadd.f32 %v3182, %v750
  %v3247 = vadd.f32 %v3183, %v751
  %v3248 = vadd.f32 %v3184, %v752
  %v3249 = vadd.f32 %v3185, %v753
  %v3250 = vadd.f32 %v3186, %v738
  %v3251 = vadd.f32 %v3187, %v739
  %v3252 = vadd.f32 %v3188, %v740
  %v3253 = vadd.f32 %v3189, %v741
  %v3254 = vadd.f32 %v3190, %v742
  %v3255 = vadd.f32 %v3191, %v743
  %v3256 = vadd.f32 %v3192, %v744
  %v3257 = vadd.f32 %v3193, %v745
  %v3258 = vadd.f32 %v3194, %v746
  %v3259 = vadd.f32 %v3195, %v747
  %v3260 = vadd.f32 %v3196, %v748
  %v3261 = vadd.f32 %v3197, %v749
  %v3262 = vadd.f32 %v3198, %v750
  %v3263 = vadd.f32 %v3199, %v751
  %v3264 = vadd.f32 %v3200, %v752
  %v3265 = vadd.f32 %v3201, %v753
  %v3266 = vadd.f32 %v3202, %v738
  %v3267 = vadd.f32 %v3203, %v739
  %v3268 = vadd.f32 %v3204, %v740
  %v3269 = vadd.f32 %v3205, %v741
  %v3270 = vadd.f32 %v3206, %v742
  %v3271 = vadd.f32 %v3207, %v743
  %v3272 = vadd.f32 %v3208, %v744
  %v3273 = vadd.f32 %v3209, %v745
  %v3274 = vadd.f32 %v3210, %v746
  %v3275 = vadd.f32 %v3211, %v747
  %v3276 = vadd.f32 %v3212, %v748
  %v3277 = vadd.f32 %v3213, %v749
  %v3278 = vadd.f32 %v3214, %v750
  %v3279 = vadd.f32 %v3215, %v751
  %v3280 = vadd.f32 %v3216, %v752
  %v3281 = vadd.f32 %v3217, %v753
  %v3282 = vtanh.pop %v3218
  %v3283 = vtanh.pop %v3219
  %v3284 = vtanh.pop %v3220
  %v3285 = vtanh.pop %v3221
  %v3286 = vtanh.pop %v3222
  %v3287 = vtanh.pop %v3223
  %v3288 = vtanh.pop %v3224
  %v3289 = vtanh.pop %v3225
  %v3290 = vtanh.pop %v3226
  %v3291 = vtanh.pop %v3227
  %v3292 = vtanh.pop %v3228
  %v3293 = vtanh.pop %v3229
  %v3294 = vtanh.pop %v3230
  %v3295 = vtanh.pop %v3231
  %v3296 = vtanh.pop %v3232
  %v3297 = vtanh.pop %v3233
  %v3298 = vtanh.pop %v3234
  %v3299 = vtanh.pop %v3235
  %v3300 = vtanh.pop %v3236
  %v3301 = vtanh.pop %v3237
  %v3302 = vtanh.pop %v3238
  %v3303 = vtanh.pop %v3239
  %v3304 = vtanh.pop %v3240
  %v3305 = vtanh.pop %v3241
  %v3306 = vtanh.pop %v3242
  %v3307 = vtanh.pop %v3243
  %v3308 = vtanh.pop %v3244
  %v3309 = vtanh.pop %v3245
  %v3310 = vtanh.pop %v3246
  %v3311 = vtanh.pop %v3247
  %v3312 = vtanh.pop %v3248
  %v3313 = vtanh.pop %v3249
  %v3314 = vtanh.pop %v3250
  %v3315 = vtanh.pop %v3251
  %v3316 = vtanh.pop %v3252
  %v3317 = vtanh.pop %v3253
  %v3318 = vtanh.pop %v3254
  %v3319 = vtanh.pop %v3255
  %v3320 = vtanh.pop %v3256
  %v3321 = vtanh.pop %v3257
  %v3322 = vtanh.pop %v3258
  %v3323 = vtanh.pop %v3259
  %v3324 = vtanh.pop %v3260
  %v3325 = vtanh.pop %v3261
  %v3326 = vtanh.pop %v3262
  %v3327 = vtanh.pop %v3263
  %v3328 = vtanh.pop %v3264
  %v3329 = vtanh.pop %v3265
  %v3330 = vtanh.pop %v3266
  %v3331 = vtanh.pop %v3267
  %v3332 = vtanh.pop %v3268
  %v3333 = vtanh.pop %v3269
  %v3334 = vtanh.pop %v3270
  %v3335 = vtanh.pop %v3271
  %v3336 = vtanh.pop %v3272
  %v3337 = vtanh.pop %v3273
  %v3338 = vtanh.pop %v3274
  %v3339 = vtanh.pop %v3275
  %v3340 = vtanh.pop %v3276
  %v3341 = vtanh.pop %v3277
  %v3342 = vtanh.pop %v3278
  %v3343 = vtanh.pop %v3279
  %v3344 = vtanh.pop %v3280
  %v3345 = vtanh.pop %v3281
  %v3346 = vmul.f32 %v3282, %v882
  %v3347 = vmul.f32 %v3283, %v883
  %v3348 = vmul.f32 %v3284, %v884
  %v3349 = vmul.f32 %v3285, %v885
  %v3350 = vmul.f32 %v3286, %v886
  %v3351 = vmul.f32 %v3287, %v887
  %v3352 = vmul.f32 %v3288, %v888
  %v3353 = vmul.f32 %v3289, %v889
  %v3354 = vmul.f32 %v3290, %v890
  %v3355 = vmul.f32 %v3291, %v891
  %v3356 = vmul.f32 %v3292, %v892
  %v3357 = vmul.f32 %v3293, %v893
  %v3358 = vmul.f32 %v3294, %v894
  %v3359 = vmul.f32 %v3295, %v895
  %v3360 = vmul.f32 %v3296, %v896
  %v3361 = vmul.f32 %v3297, %v897
  %v3362 = vmul.f32 %v3298, %v882
  %v3363 = vmul.f32 %v3299, %v883
  %v3364 = vmul.f32 %v3300, %v884
  %v3365 = vmul.f32 %v3301, %v885
  %v3366 = vmul.f32 %v3302, %v886
  %v3367 = vmul.f32 %v3303, %v887
  %v3368 = vmul.f32 %v3304, %v888
  %v3369 = vmul.f32 %v3305, %v889
  %v3370 = vmul.f32 %v3306, %v890
  %v3371 = vmul.f32 %v3307, %v891
  %v3372 = vmul.f32 %v3308, %v892
  %v3373 = vmul.f32 %v3309, %v893
  %v3374 = vmul.f32 %v3310, %v894
  %v3375 = vmul.f32 %v3311, %v895
  %v3376 = vmul.f32 %v3312, %v896
  %v3377 = vmul.f32 %v3313, %v897
  %v3378 = vmul.f32 %v3314, %v882
  %v3379 = vmul.f32 %v3315, %v883
  %v3380 = vmul.f32 %v3316, %v884
  %v3381 = vmul.f32 %v3317, %v885
  %v3382 = vmul.f32 %v3318, %v886
  %v3383 = vmul.f32 %v3319, %v887
  %v3384 = vmul.f32 %v3320, %v888
  %v3385 = vmul.f32 %v3321, %v889
  %v3386 = vmul.f32 %v3322, %v890
  %v3387 = vmul.f32 %v3323, %v891
  %v3388 = vmul.f32 %v3324, %v892
  %v3389 = vmul.f32 %v3325, %v893
  %v3390 = vmul.f32 %v3326, %v894
  %v3391 = vmul.f32 %v3327, %v895
  %v3392 = vmul.f32 %v3328, %v896
  %v3393 = vmul.f32 %v3329, %v897
  %v3394 = vmul.f32 %v3330, %v882
  %v3395 = vmul.f32 %v3331, %v883
  %v3396 = vmul.f32 %v3332, %v884
  %v3397 = vmul.f32 %v3333, %v885
  %v3398 = vmul.f32 %v3334, %v886
  %v3399 = vmul.f32 %v3335, %v887
  %v3400 = vmul.f32 %v3336, %v888
  %v3401 = vmul.f32 %v3337, %v889
  %v3402 = vmul.f32 %v3338, %v890
  %v3403 = vmul.f32 %v3339, %v891
  %v3404 = vmul.f32 %v3340, %v892
  %v3405 = vmul.f32 %v3341, %v893
  %v3406 = vmul.f32 %v3342, %v894
  %v3407 = vmul.f32 %v3343, %v895
  %v3408 = vmul.f32 %v3344, %v896
  %v3409 = vmul.f32 %v3345, %v897
  %v3410 = vadd.f32 %v3218, %v3346
  %v3411 = vadd.f32 %v3219, %v3347
  %v3412 = vadd.f32 %v3220, %v3348
  %v3413 = vadd.f32 %v3221, %v3349
  %v3414 = vadd.f32 %v3222, %v3350
  %v3415 = vadd.f32 %v3223, %v3351
  %v3416 = vadd.f32 %v3224, %v3352
  %v3417 = vadd.f32 %v3225, %v3353
  %v3418 = vadd.f32 %v3226, %v3354
  %v3419 = vadd.f32 %v3227, %v3355
  %v3420 = vadd.f32 %v3228, %v3356
  %v3421 = vadd.f32 %v3229, %v3357
  %v3422 = vadd.f32 %v3230, %v3358
  %v3423 = vadd.f32 %v3231, %v3359
  %v3424 = vadd.f32 %v3232, %v3360
  %v3425 = vadd.f32 %v3233, %v3361
  %v3426 = vadd.f32 %v3234, %v3362
  %v3427 = vadd.f32 %v3235, %v3363
  %v3428 = vadd.f32 %v3236, %v3364
  %v3429 = vadd.f32 %v3237, %v3365
  %v3430 = vadd.f32 %v3238, %v3366
  %v3431 = vadd.f32 %v3239, %v3367
  %v3432 = vadd.f32 %v3240, %v3368
  %v3433 = vadd.f32 %v3241, %v3369
  %v3434 = vadd.f32 %v3242, %v3370
  %v3435 = vadd.f32 %v3243, %v3371
  %v3436 = vadd.f32 %v3244, %v3372
  %v3437 = vadd.f32 %v3245, %v3373
  %v3438 = vadd.f32 %v3246, %v3374
  %v3439 = vadd.f32 %v3247, %v3375
  %v3440 = vadd.f32 %v3248, %v3376
  %v3441 = vadd.f32 %v3249, %v3377
  %v3442 = vadd.f32 %v3250, %v3378
  %v3443 = vadd.f32 %v3251, %v3379
  %v3444 = vadd.f32 %v3252, %v3380
  %v3445 = vadd.f32 %v3253, %v3381
  %v3446 = vadd.f32 %v3254, %v3382
  %v3447 = vadd.f32 %v3255, %v3383
  %v3448 = vadd.f32 %v3256, %v3384
  %v3449 = vadd.f32 %v3257, %v3385
  %v3450 = vadd.f32 %v3258, %v3386
  %v3451 = vadd.f32 %v3259, %v3387
  %v3452 = vadd.f32 %v3260, %v3388
  %v3453 = vadd.f32 %v3261, %v3389
  %v3454 = vadd.f32 %v3262, %v3390
  %v3455 = vadd.f32 %v3263, %v3391
  %v3456 = vadd.f32 %v3264, %v3392
  %v3457 = vadd.f32 %v3265, %v3393
  %v3458 = vadd.f32 %v3266, %v3394
  %v3459 = vadd.f32 %v3267, %v3395
  %v3460 = vadd.f32 %v3268, %v3396
  %v3461 = vadd.f32 %v3269, %v3397
  %v3462 = vadd.f32 %v3270, %v3398
  %v3463 = vadd.f32 %v3271, %v3399
  %v3464 = vadd.f32 %v3272, %v3400
  %v3465 = vadd.f32 %v3273, %v3401
  %v3466 = vadd.f32 %v3274, %v3402
  %v3467 = vadd.f32 %v3275, %v3403
  %v3468 = vadd.f32 %v3276, %v3404
  %v3469 = vadd.f32 %v3277, %v3405
  %v3470 = vadd.f32 %v3278, %v3406
  %v3471 = vadd.f32 %v3279, %v3407
  %v3472 = vadd.f32 %v3280, %v3408
  %v3473 = vadd.f32 %v3281, %v3409
  %v3474 = vmul.f32 %v3410, %v1026
  %v3475 = vmul.f32 %v3411, %v1027
  %v3476 = vmul.f32 %v3412, %v1028
  %v3477 = vmul.f32 %v3413, %v1029
  %v3478 = vmul.f32 %v3414, %v1030
  %v3479 = vmul.f32 %v3415, %v1031
  %v3480 = vmul.f32 %v3416, %v1032
  %v3481 = vmul.f32 %v3417, %v1033
  %v3482 = vmul.f32 %v3418, %v1034
  %v3483 = vmul.f32 %v3419, %v1035
  %v3484 = vmul.f32 %v3420, %v1036
  %v3485 = vmul.f32 %v3421, %v1037
  %v3486 = vmul.f32 %v3422, %v1038
  %v3487 = vmul.f32 %v3423, %v1039
  %v3488 = vmul.f32 %v3424, %v1040
  %v3489 = vmul.f32 %v3425, %v1041
  %v3490 = vmul.f32 %v3426, %v1026
  %v3491 = vmul.f32 %v3427, %v1027
  %v3492 = vmul.f32 %v3428, %v1028
  %v3493 = vmul.f32 %v3429, %v1029
  %v3494 = vmul.f32 %v3430, %v1030
  %v3495 = vmul.f32 %v3431, %v1031
  %v3496 = vmul.f32 %v3432, %v1032
  %v3497 = vmul.f32 %v3433, %v1033
  %v3498 = vmul.f32 %v3434, %v1034
  %v3499 = vmul.f32 %v3435, %v1035
  %v3500 = vmul.f32 %v3436, %v1036
  %v3501 = vmul.f32 %v3437, %v1037
  %v3502 = vmul.f32 %v3438, %v1038
  %v3503 = vmul.f32 %v3439, %v1039
  %v3504 = vmul.f32 %v3440, %v1040
  %v3505 = vmul.f32 %v3441, %v1041
  %v3506 = vmul.f32 %v3442, %v1026
  %v3507 = vmul.f32 %v3443, %v1027
  %v3508 = vmul.f32 %v3444, %v1028
  %v3509 = vmul.f32 %v3445, %v1029
  %v3510 = vmul.f32 %v3446, %v1030
  %v3511 = vmul.f32 %v3447, %v1031
  %v3512 = vmul.f32 %v3448, %v1032
  %v3513 = vmul.f32 %v3449, %v1033
  %v3514 = vmul.f32 %v3450, %v1034
  %v3515 = vmul.f32 %v3451, %v1035
  %v3516 = vmul.f32 %v3452, %v1036
  %v3517 = vmul.f32 %v3453, %v1037
  %v3518 = vmul.f32 %v3454, %v1038
  %v3519 = vmul.f32 %v3455, %v1039
  %v3520 = vmul.f32 %v3456, %v1040
  %v3521 = vmul.f32 %v3457, %v1041
  %v3522 = vmul.f32 %v3458, %v1026
  %v3523 = vmul.f32 %v3459, %v1027
  %v3524 = vmul.f32 %v3460, %v1028
  %v3525 = vmul.f32 %v3461, %v1029
  %v3526 = vmul.f32 %v3462, %v1030
  %v3527 = vmul.f32 %v3463, %v1031
  %v3528 = vmul.f32 %v3464, %v1032
  %v3529 = vmul.f32 %v3465, %v1033
  %v3530 = vmul.f32 %v3466, %v1034
  %v3531 = vmul.f32 %v3467, %v1035
  %v3532 = vmul.f32 %v3468, %v1036
  %v3533 = vmul.f32 %v3469, %v1037
  %v3534 = vmul.f32 %v3470, %v1038
  %v3535 = vmul.f32 %v3471, %v1039
  %v3536 = vmul.f32 %v3472, %v1040
  %v3537 = vmul.f32 %v3473, %v1041
  %v3538 = vadd.f32 %v3474, %v1106
  %v3539 = vadd.f32 %v3475, %v1107
  %v3540 = vadd.f32 %v3476, %v1108
  %v3541 = vadd.f32 %v3477, %v1109
  %v3542 = vadd.f32 %v3478, %v1110
  %v3543 = vadd.f32 %v3479, %v1111
  %v3544 = vadd.f32 %v3480, %v1112
  %v3545 = vadd.f32 %v3481, %v1113
  %v3546 = vadd.f32 %v3482, %v1114
  %v3547 = vadd.f32 %v3483, %v1115
  %v3548 = vadd.f32 %v3484, %v1116
  %v3549 = vadd.f32 %v3485, %v1117
  %v3550 = vadd.f32 %v3486, %v1118
  %v3551 = vadd.f32 %v3487, %v1119
  %v3552 = vadd.f32 %v3488, %v1120
  %v3553 = vadd.f32 %v3489, %v1121
  %v3554 = vadd.f32 %v3490, %v1106
  %v3555 = vadd.f32 %v3491, %v1107
  %v3556 = vadd.f32 %v3492, %v1108
  %v3557 = vadd.f32 %v3493, %v1109
  %v3558 = vadd.f32 %v3494, %v1110
  %v3559 = vadd.f32 %v3495, %v1111
  %v3560 = vadd.f32 %v3496, %v1112
  %v3561 = vadd.f32 %v3497, %v1113
  %v3562 = vadd.f32 %v3498, %v1114
  %v3563 = vadd.f32 %v3499, %v1115
  %v3564 = vadd.f32 %v3500, %v1116
  %v3565 = vadd.f32 %v3501, %v1117
  %v3566 = vadd.f32 %v3502, %v1118
  %v3567 = vadd.f32 %v3503, %v1119
  %v3568 = vadd.f32 %v3504, %v1120
  %v3569 = vadd.f32 %v3505, %v1121
  %v3570 = vadd.f32 %v3506, %v1106
  %v3571 = vadd.f32 %v3507, %v1107
  %v3572 = vadd.f32 %v3508, %v1108
  %v3573 = vadd.f32 %v3509, %v1109
  %v3574 = vadd.f32 %v3510, %v1110
  %v3575 = vadd.f32 %v3511, %v1111
  %v3576 = vadd.f32 %v3512, %v1112
  %v3577 = vadd.f32 %v3513, %v1113
  %v3578 = vadd.f32 %v3514, %v1114
  %v3579 = vadd.f32 %v3515, %v1115
  %v3580 = vadd.f32 %v3516, %v1116
  %v3581 = vadd.f32 %v3517, %v1117
  %v3582 = vadd.f32 %v3518, %v1118
  %v3583 = vadd.f32 %v3519, %v1119
  %v3584 = vadd.f32 %v3520, %v1120
  %v3585 = vadd.f32 %v3521, %v1121
  %v3586 = vadd.f32 %v3522, %v1106
  %v3587 = vadd.f32 %v3523, %v1107
  %v3588 = vadd.f32 %v3524, %v1108
  %v3589 = vadd.f32 %v3525, %v1109
  %v3590 = vadd.f32 %v3526, %v1110
  %v3591 = vadd.f32 %v3527, %v1111
  %v3592 = vadd.f32 %v3528, %v1112
  %v3593 = vadd.f32 %v3529, %v1113
  %v3594 = vadd.f32 %v3530, %v1114
  %v3595 = vadd.f32 %v3531, %v1115
  %v3596 = vadd.f32 %v3532, %v1116
  %v3597 = vadd.f32 %v3533, %v1117
  %v3598 = vadd.f32 %v3534, %v1118
  %v3599 = vadd.f32 %v3535, %v1119
  %v3600 = vadd.f32 %v3536, %v1120
  %v3601 = vadd.f32 %v3537, %v1121
  %v3602 = vtanh.pop %v3538
  %v3603 = vtanh.pop %v3539
  %v3604 = vtanh.pop %v3540
  %v3605 = vtanh.pop %v3541
  %v3606 = vtanh.pop %v3542
  %v3607 = vtanh.pop %v3543
  %v3608 = vtanh.pop %v3544
  %v3609 = vtanh.pop %v3545
  %v3610 = vtanh.pop %v3546
  %v3611 = vtanh.pop %v3547
  %v3612 = vtanh.pop %v3548
  %v3613 = vtanh.pop %v3549
  %v3614 = vtanh.pop %v3550
  %v3615 = vtanh.pop %v3551
  %v3616 = vtanh.pop %v3552
  %v3617 = vtanh.pop %v3553
  %v3618 = vtanh.pop %v3554
  %v3619 = vtanh.pop %v3555
  %v3620 = vtanh.pop %v3556
  %v3621 = vtanh.pop %v3557
  %v3622 = vtanh.pop %v3558
  %v3623 = vtanh.pop %v3559
  %v3624 = vtanh.pop %v3560
  %v3625 = vtanh.pop %v3561
  %v3626 = vtanh.pop %v3562
  %v3627 = vtanh.pop %v3563
  %v3628 = vtanh.pop %v3564
  %v3629 = vtanh.pop %v3565
  %v3630 = vtanh.pop %v3566
  %v3631 = vtanh.pop %v3567
  %v3632 = vtanh.pop %v3568
  %v3633 = vtanh.pop %v3569
  %v3634 = vtanh.pop %v3570
  %v3635 = vtanh.pop %v3571
  %v3636 = vtanh.pop %v3572
  %v3637 = vtanh.pop %v3573
  %v3638 = vtanh.pop %v3574
  %v3639 = vtanh.pop %v3575
  %v3640 = vtanh.pop %v3576
  %v3641 = vtanh.pop %v3577
  %v3642 = vtanh.pop %v3578
  %v3643 = vtanh.pop %v3579
  %v3644 = vtanh.pop %v3580
  %v3645 = vtanh.pop %v3581
  %v3646 = vtanh.pop %v3582
  %v3647 = vtanh.pop %v3583
  %v3648 = vtanh.pop %v3584
  %v3649 = vtanh.pop %v3585
  %v3650 = vtanh.pop %v3586
  %v3651 = vtanh.pop %v3587
  %v3652 = vtanh.pop %v3588
  %v3653 = vtanh.pop %v3589
  %v3654 = vtanh.pop %v3590
  %v3655 = vtanh.pop %v3591
  %v3656 = vtanh.pop %v3592
  %v3657 = vtanh.pop %v3593
  %v3658 = vtanh.pop %v3594
  %v3659 = vtanh.pop %v3595
  %v3660 = vtanh.pop %v3596
  %v3661 = vtanh.pop %v3597
  %v3662 = vtanh.pop %v3598
  %v3663 = vtanh.pop %v3599
  %v3664 = vtanh.pop %v3600
  %v3665 = vtanh.pop %v3601
  %v3666 = vmul.f32 %v3602, %v1250
  %v3667 = vmul.f32 %v3603, %v1251
  %v3668 = vmul.f32 %v3604, %v1252
  %v3669 = vmul.f32 %v3605, %v1253
  %v3670 = vmul.f32 %v3606, %v1254
  %v3671 = vmul.f32 %v3607, %v1255
  %v3672 = vmul.f32 %v3608, %v1256
  %v3673 = vmul.f32 %v3609, %v1257
  %v3674 = vmul.f32 %v3610, %v1258
  %v3675 = vmul.f32 %v3611, %v1259
  %v3676 = vmul.f32 %v3612, %v1260
  %v3677 = vmul.f32 %v3613, %v1261
  %v3678 = vmul.f32 %v3614, %v1262
  %v3679 = vmul.f32 %v3615, %v1263
  %v3680 = vmul.f32 %v3616, %v1264
  %v3681 = vmul.f32 %v3617, %v1265
  %v3682 = vmul.f32 %v3618, %v1250
  %v3683 = vmul.f32 %v3619, %v1251
  %v3684 = vmul.f32 %v3620, %v1252
  %v3685 = vmul.f32 %v3621, %v1253
  %v3686 = vmul.f32 %v3622, %v1254
  %v3687 = vmul.f32 %v3623, %v1255
  %v3688 = vmul.f32 %v3624, %v1256
  %v3689 = vmul.f32 %v3625, %v1257
  %v3690 = vmul.f32 %v3626, %v1258
  %v3691 = vmul.f32 %v3627, %v1259
  %v3692 = vmul.f32 %v3628, %v1260
  %v3693 = vmul.f32 %v3629, %v1261
  %v3694 = vmul.f32 %v3630, %v1262
  %v3695 = vmul.f32 %v3631, %v1263
  %v3696 = vmul.f32 %v3632, %v1264
  %v3697 = vmul.f32 %v3633, %v1265
  %v3698 = vmul.f32 %v3634, %v1250
  %v3699 = vmul.f32 %v3635, %v1251
  %v3700 = vmul.f32 %v3636, %v1252
  %v3701 = vmul.f32 %v3637, %v1253
  %v3702 = vmul.f32 %v3638, %v1254
  %v3703 = vmul.f32 %v3639, %v1255
  %v3704 = vmul.f32 %v3640, %v1256
  %v3705 = vmul.f32 %v3641, %v1257
  %v3706 = vmul.f32 %v3642, %v1258
  %v3707 = vmul.f32 %v3643, %v1259
  %v3708 = vmul.f32 %v3644, %v1260
  %v3709 = vmul.f32 %v3645, %v1261
  %v3710 = vmul.f32 %v3646, %v1262
  %v3711 = vmul.f32 %v3647, %v1263
  %v3712 = vmul.f32 %v3648, %v1264
  %v3713 = vmul.f32 %v3649, %v1265
  %v3714 = vmul.f32 %v3650, %v1250
  %v3715 = vmul.f32 %v3651, %v1251
  %v3716 = vmul.f32 %v3652, %v1252
  %v3717 = vmul.f32 %v3653, %v1253
  %v3718 = vmul.f32 %v3654, %v1254
  %v3719 = vmul.f32 %v3655, %v1255
  %v3720 = vmul.f32 %v3656, %v1256
  %v3721 = vmul.f32 %v3657, %v1257
  %v3722 = vmul.f32 %v3658, %v1258
  %v3723 = vmul.f32 %v3659, %v1259
  %v3724 = vmul.f32 %v3660, %v1260
  %v3725 = vmul.f32 %v3661, %v1261
  %v3726 = vmul.f32 %v3662, %v1262
  %v3727 = vmul.f32 %v3663, %v1263
  %v3728 = vmul.f32 %v3664, %v1264
  %v3729 = vmul.f32 %v3665, %v1265
  %v3730 = vadd.f32 %v3538, %v3666
  %v3731 = vadd.f32 %v3539, %v3667
  %v3732 = vadd.f32 %v3540, %v3668
  %v3733 = vadd.f32 %v3541, %v3669
  %v3734 = vadd.f32 %v3542, %v3670
  %v3735 = vadd.f32 %v3543, %v3671
  %v3736 = vadd.f32 %v3544, %v3672
  %v3737 = vadd.f32 %v3545, %v3673
  %v3738 = vadd.f32 %v3546, %v3674
  %v3739 = vadd.f32 %v3547, %v3675
  %v3740 = vadd.f32 %v3548, %v3676
  %v3741 = vadd.f32 %v3549, %v3677
  %v3742 = vadd.f32 %v3550, %v3678
  %v3743 = vadd.f32 %v3551, %v3679
  %v3744 = vadd.f32 %v3552, %v3680
  %v3745 = vadd.f32 %v3553, %v3681
  %v3746 = vadd.f32 %v3554, %v3682
  %v3747 = vadd.f32 %v3555, %v3683
  %v3748 = vadd.f32 %v3556, %v3684
  %v3749 = vadd.f32 %v3557, %v3685
  %v3750 = vadd.f32 %v3558, %v3686
  %v3751 = vadd.f32 %v3559, %v3687
  %v3752 = vadd.f32 %v3560, %v3688
  %v3753 = vadd.f32 %v3561, %v3689
  %v3754 = vadd.f32 %v3562, %v3690
  %v3755 = vadd.f32 %v3563, %v3691
  %v3756 = vadd.f32 %v3564, %v3692
  %v3757 = vadd.f32 %v3565, %v3693
  %v3758 = vadd.f32 %v3566, %v3694
  %v3759 = vadd.f32 %v3567, %v3695
  %v3760 = vadd.f32 %v3568, %v3696
  %v3761 = vadd.f32 %v3569, %v3697
  %v3762 = vadd.f32 %v3570, %v3698
  %v3763 = vadd.f32 %v3571, %v3699
  %v3764 = vadd.f32 %v3572, %v3700
  %v3765 = vadd.f32 %v3573, %v3701
  %v3766 = vadd.f32 %v3574, %v3702
  %v3767 = vadd.f32 %v3575, %v3703
  %v3768 = vadd.f32 %v3576, %v3704
  %v3769 = vadd.f32 %v3577, %v3705
  %v3770 = vadd.f32 %v3578, %v3706
  %v3771 = vadd.f32 %v3579, %v3707
  %v3772 = vadd.f32 %v3580, %v3708
  %v3773 = vadd.f32 %v3581, %v3709
  %v3774 = vadd.f32 %v3582, %v3710
  %v3775 = vadd.f32 %v3583, %v3711
  %v3776 = vadd.f32 %v3584, %v3712
  %v3777 = vadd.f32 %v3585, %v3713
  %v3778 = vadd.f32 %v3586, %v3714
  %v3779 = vadd.f32 %v3587, %v3715
  %v3780 = vadd.f32 %v3588, %v3716
  %v3781 = vadd.f32 %v3589, %v3717
  %v3782 = vadd.f32 %v3590, %v3718
  %v3783 = vadd.f32 %v3591, %v3719
  %v3784 = vadd.f32 %v3592, %v3720
  %v3785 = vadd.f32 %v3593, %v3721
  %v3786 = vadd.f32 %v3594, %v3722
  %v3787 = vadd.f32 %v3595, %v3723
  %v3788 = vadd.f32 %v3596, %v3724
  %v3789 = vadd.f32 %v3597, %v3725
  %v3790 = vadd.f32 %v3598, %v3726
  %v3791 = vadd.f32 %v3599, %v3727
  %v3792 = vadd.f32 %v3600, %v3728
  %v3793 = vadd.f32 %v3601, %v3729
  %v3794 = vmul.f32 %v3730, %v1394
  %v3795 = vmul.f32 %v3731, %v1395
  %v3796 = vmul.f32 %v3732, %v1396
  %v3797 = vmul.f32 %v3733, %v1397
  %v3798 = vmul.f32 %v3734, %v1398
  %v3799 = vmul.f32 %v3735, %v1399
  %v3800 = vmul.f32 %v3736, %v1400
  %v3801 = vmul.f32 %v3737, %v1401
  %v3802 = vmul.f32 %v3738, %v1402
  %v3803 = vmul.f32 %v3739, %v1403
  %v3804 = vmul.f32 %v3740, %v1404
  %v3805 = vmul.f32 %v3741, %v1405
  %v3806 = vmul.f32 %v3742, %v1406
  %v3807 = vmul.f32 %v3743, %v1407
  %v3808 = vmul.f32 %v3744, %v1408
  %v3809 = vmul.f32 %v3745, %v1409
  %v3810 = vmul.f32 %v3746, %v1394
  %v3811 = vmul.f32 %v3747, %v1395
  %v3812 = vmul.f32 %v3748, %v1396
  %v3813 = vmul.f32 %v3749, %v1397
  %v3814 = vmul.f32 %v3750, %v1398
  %v3815 = vmul.f32 %v3751, %v1399
  %v3816 = vmul.f32 %v3752, %v1400
  %v3817 = vmul.f32 %v3753, %v1401
  %v3818 = vmul.f32 %v3754, %v1402
  %v3819 = vmul.f32 %v3755, %v1403
  %v3820 = vmul.f32 %v3756, %v1404
  %v3821 = vmul.f32 %v3757, %v1405
  %v3822 = vmul.f32 %v3758, %v1406
  %v3823 = vmul.f32 %v3759, %v1407
  %v3824 = vmul.f32 %v3760, %v1408
  %v3825 = vmul.f32 %v3761, %v1409
  %v3826 = vmul.f32 %v3762, %v1394
  %v3827 = vmul.f32 %v3763, %v1395
  %v3828 = vmul.f32 %v3764, %v1396
  %v3829 = vmul.f32 %v3765, %v1397
  %v3830 = vmul.f32 %v3766, %v1398
  %v3831 = vmul.f32 %v3767, %v1399
  %v3832 = vmul.f32 %v3768, %v1400
  %v3833 = vmul.f32 %v3769, %v1401
  %v3834 = vmul.f32 %v3770, %v1402
  %v3835 = vmul.f32 %v3771, %v1403
  %v3836 = vmul.f32 %v3772, %v1404
  %v3837 = vmul.f32 %v3773, %v1405
  %v3838 = vmul.f32 %v3774, %v1406
  %v3839 = vmul.f32 %v3775, %v1407
  %v3840 = vmul.f32 %v3776, %v1408
  %v3841 = vmul.f32 %v3777, %v1409
  %v3842 = vmul.f32 %v3778, %v1394
  %v3843 = vmul.f32 %v3779, %v1395
  %v3844 = vmul.f32 %v3780, %v1396
  %v3845 = vmul.f32 %v3781, %v1397
  %v3846 = vmul.f32 %v3782, %v1398
  %v3847 = vmul.f32 %v3783, %v1399
  %v3848 = vmul.f32 %v3784, %v1400
  %v3849 = vmul.f32 %v3785, %v1401
  %v3850 = vmul.f32 %v3786, %v1402
  %v3851 = vmul.f32 %v3787, %v1403
  %v3852 = vmul.f32 %v3788, %v1404
  %v3853 = vmul.f32 %v3789, %v1405
  %v3854 = vmul.f32 %v3790, %v1406
  %v3855 = vmul.f32 %v3791, %v1407
  %v3856 = vmul.f32 %v3792, %v1408
  %v3857 = vmul.f32 %v3793, %v1409
  %v3858 = vadd.f32 %v3794, %v1474
  %v3859 = vadd.f32 %v3795, %v1475
  %v3860 = vadd.f32 %v3796, %v1476
  %v3861 = vadd.f32 %v3797, %v1477
  %v3862 = vadd.f32 %v3798, %v1478
  %v3863 = vadd.f32 %v3799, %v1479
  %v3864 = vadd.f32 %v3800, %v1480
  %v3865 = vadd.f32 %v3801, %v1481
  %v3866 = vadd.f32 %v3802, %v1482
  %v3867 = vadd.f32 %v3803, %v1483
  %v3868 = vadd.f32 %v3804, %v1484
  %v3869 = vadd.f32 %v3805, %v1485
  %v3870 = vadd.f32 %v3806, %v1486
  %v3871 = vadd.f32 %v3807, %v1487
  %v3872 = vadd.f32 %v3808, %v1488
  %v3873 = vadd.f32 %v3809, %v1489
  %v3874 = vadd.f32 %v3810, %v1474
  %v3875 = vadd.f32 %v3811, %v1475
  %v3876 = vadd.f32 %v3812, %v1476
  %v3877 = vadd.f32 %v3813, %v1477
  %v3878 = vadd.f32 %v3814, %v1478
  %v3879 = vadd.f32 %v3815, %v1479
  %v3880 = vadd.f32 %v3816, %v1480
  %v3881 = vadd.f32 %v3817, %v1481
  %v3882 = vadd.f32 %v3818, %v1482
  %v3883 = vadd.f32 %v3819, %v1483
  %v3884 = vadd.f32 %v3820, %v1484
  %v3885 = vadd.f32 %v3821, %v1485
  %v3886 = vadd.f32 %v3822, %v1486
  %v3887 = vadd.f32 %v3823, %v1487
  %v3888 = vadd.f32 %v3824, %v1488
  %v3889 = vadd.f32 %v3825, %v1489
  %v3890 = vadd.f32 %v3826, %v1474
  %v3891 = vadd.f32 %v3827, %v1475
  %v3892 = vadd.f32 %v3828, %v1476
  %v3893 = vadd.f32 %v3829, %v1477
  %v3894 = vadd.f32 %v3830, %v1478
  %v3895 = vadd.f32 %v3831, %v1479
  %v3896 = vadd.f32 %v3832, %v1480
  %v3897 = vadd.f32 %v3833, %v1481
  %v3898 = vadd.f32 %v3834, %v1482
  %v3899 = vadd.f32 %v3835, %v1483
  %v3900 = vadd.f32 %v3836, %v1484
  %v3901 = vadd.f32 %v3837, %v1485
  %v3902 = vadd.f32 %v3838, %v1486
  %v3903 = vadd.f32 %v3839, %v1487
  %v3904 = vadd.f32 %v3840, %v1488
  %v3905 = vadd.f32 %v3841, %v1489
  %v3906 = vadd.f32 %v3842, %v1474
  %v3907 = vadd.f32 %v3843, %v1475
  %v3908 = vadd.f32 %v3844, %v1476
  %v3909 = vadd.f32 %v3845, %v1477
  %v3910 = vadd.f32 %v3846, %v1478
  %v3911 = vadd.f32 %v3847, %v1479
  %v3912 = vadd.f32 %v3848, %v1480
  %v3913 = vadd.f32 %v3849, %v1481
  %v3914 = vadd.f32 %v3850, %v1482
  %v3915 = vadd.f32 %v3851, %v1483
  %v3916 = vadd.f32 %v3852, %v1484
  %v3917 = vadd.f32 %v3853, %v1485
  %v3918 = vadd.f32 %v3854, %v1486
  %v3919 = vadd.f32 %v3855, %v1487
  %v3920 = vadd.f32 %v3856, %v1488
  %v3921 = vadd.f32 %v3857, %v1489
  %v3922 = vxor.u32 %v3858, 2147483648
  %v3923 = vxor.u32 %v3859, 2147483648
  %v3924 = vxor.u32 %v3860, 2147483648
  %v3925 = vxor.u32 %v3861, 2147483648
  %v3926 = vxor.u32 %v3862, 2147483648
  %v3927 = vxor.u32 %v3863, 2147483648
  %v3928 = vxor.u32 %v3864, 2147483648
  %v3929 = vxor.u32 %v3865, 2147483648
  %v3930 = vxor.u32 %v3866, 2147483648
  %v3931 = vxor.u32 %v3867, 2147483648
  %v3932 = vxor.u32 %v3868, 2147483648
  %v3933 = vxor.u32 %v3869, 2147483648
  %v3934 = vxor.u32 %v3870, 2147483648
  %v3935 = vxor.u32 %v3871, 2147483648
  %v3936 = vxor.u32 %v3872, 2147483648
  %v3937 = vxor.u32 %v3873, 2147483648
  %v3938 = vxor.u32 %v3874, 2147483648
  %v3939 = vxor.u32 %v3875, 2147483648
  %v3940 = vxor.u32 %v3876, 2147483648
  %v3941 = vxor.u32 %v3877, 2147483648
  %v3942 = vxor.u32 %v3878, 2147483648
  %v3943 = vxor.u32 %v3879, 2147483648
  %v3944 = vxor.u32 %v3880, 2147483648
  %v3945 = vxor.u32 %v3881, 2147483648
  %v3946 = vxor.u32 %v3882, 2147483648
  %v3947 = vxor.u32 %v3883, 2147483648
  %v3948 = vxor.u32 %v3884, 2147483648
  %v3949 = vxor.u32 %v3885, 2147483648
  %v3950 = vxor.u32 %v3886, 2147483648
  %v3951 = vxor.u32 %v3887, 2147483648
  %v3952 = vxor.u32 %v3888, 2147483648
  %v3953 = vxor.u32 %v3889, 2147483648
  %v3954 = vxor.u32 %v3890, 2147483648
  %v3955 = vxor.u32 %v3891, 2147483648
  %v3956 = vxor.u32 %v3892, 2147483648
  %v3957 = vxor.u32 %v3893, 2147483648
  %v3958 = vxor.u32 %v3894, 2147483648
  %v3959 = vxor.u32 %v3895, 2147483648
  %v3960 = vxor.u32 %v3896, 2147483648
  %v3961 = vxor.u32 %v3897, 2147483648
  %v3962 = vxor.u32 %v3898, 2147483648
  %v3963 = vxor.u32 %v3899, 2147483648
  %v3964 = vxor.u32 %v3900, 2147483648
  %v3965 = vxor.u32 %v3901, 2147483648
  %v3966 = vxor.u32 %v3902, 2147483648
  %v3967 = vxor.u32 %v3903, 2147483648
  %v3968 = vxor.u32 %v3904, 2147483648
  %v3969 = vxor.u32 %v3905, 2147483648
  %v3970 = vxor.u32 %v3906, 2147483648
  %v3971 = vxor.u32 %v3907, 2147483648
  %v3972 = vxor.u32 %v3908, 2147483648
  %v3973 = vxor.u32 %v3909, 2147483648
  %v3974 = vxor.u32 %v3910, 2147483648
  %v3975 = vxor.u32 %v3911, 2147483648
  %v3976 = vxor.u32 %v3912, 2147483648
  %v3977 = vxor.u32 %v3913, 2147483648
  %v3978 = vxor.u32 %v3914, 2147483648
  %v3979 = vxor.u32 %v3915, 2147483648
  %v3980 = vxor.u32 %v3916, 2147483648
  %v3981 = vxor.u32 %v3917, 2147483648
  %v3982 = vxor.u32 %v3918, 2147483648
  %v3983 = vxor.u32 %v3919, 2147483648
  %v3984 = vxor.u32 %v3920, 2147483648
  %v3985 = vxor.u32 %v3921, 2147483648
  %v3986 = vmul.f32 %v3922, 1.442695
  %v3987 = vpow.pop %v3986
  %v3988 = vmul.f32 %v3923, 1.442695
  %v3989 = vpow.pop %v3988
  %v3990 = vmul.f32 %v3924, 1.442695
  %v3991 = vpow.pop %v3990
  %v3992 = vmul.f32 %v3925, 1.442695
  %v3993 = vpow.pop %v3992
  %v3994 = vmul.f32 %v3926, 1.442695
  %v3995 = vpow.pop %v3994
  %v3996 = vmul.f32 %v3927, 1.442695
  %v3997 = vpow.pop %v3996
  %v3998 = vmul.f32 %v3928, 1.442695
  %v3999 = vpow.pop %v3998
  %v4000 = vmul.f32 %v3929, 1.442695
  %v4001 = vpow.pop %v4000
  %v4002 = vmul.f32 %v3930, 1.442695
  %v4003 = vpow.pop %v4002
  %v4004 = vmul.f32 %v3931, 1.442695
  %v4005 = vpow.pop %v4004
  %v4006 = vmul.f32 %v3932, 1.442695
  %v4007 = vpow.pop %v4006
  %v4008 = vmul.f32 %v3933, 1.442695
  %v4009 = vpow.pop %v4008
  %v4010 = vmul.f32 %v3934, 1.442695
  %v4011 = vpow.pop %v4010
  %v4012 = vmul.f32 %v3935, 1.442695
  %v4013 = vpow.pop %v4012
  %v4014 = vmul.f32 %v3936, 1.442695
  %v4015 = vpow.pop %v4014
  %v4016 = vmul.f32 %v3937, 1.442695
  %v4017 = vpow.pop %v4016
  %v4018 = vmul.f32 %v3938, 1.442695
  %v4019 = vpow.pop %v4018
  %v4020 = vmul.f32 %v3939, 1.442695
  %v4021 = vpow.pop %v4020
  %v4022 = vmul.f32 %v3940, 1.442695
  %v4023 = vpow.pop %v4022
  %v4024 = vmul.f32 %v3941, 1.442695
  %v4025 = vpow.pop %v4024
  %v4026 = vmul.f32 %v3942, 1.442695
  %v4027 = vpow.pop %v4026
  %v4028 = vmul.f32 %v3943, 1.442695
  %v4029 = vpow.pop %v4028
  %v4030 = vmul.f32 %v3944, 1.442695
  %v4031 = vpow.pop %v4030
  %v4032 = vmul.f32 %v3945, 1.442695
  %v4033 = vpow.pop %v4032
  %v4034 = vmul.f32 %v3946, 1.442695
  %v4035 = vpow.pop %v4034
  %v4036 = vmul.f32 %v3947, 1.442695
  %v4037 = vpow.pop %v4036
  %v4038 = vmul.f32 %v3948, 1.442695
  %v4039 = vpow.pop %v4038
  %v4040 = vmul.f32 %v3949, 1.442695
  %v4041 = vpow.pop %v4040
  %v4042 = vmul.f32 %v3950, 1.442695
  %v4043 = vpow.pop %v4042
  %v4044 = vmul.f32 %v3951, 1.442695
  %v4045 = vpow.pop %v4044
  %v4046 = vmul.f32 %v3952, 1.442695
  %v4047 = vpow.pop %v4046
  %v4048 = vmul.f32 %v3953, 1.442695
  %v4049 = vpow.pop %v4048
  %v4050 = vmul.f32 %v3954, 1.442695
  %v4051 = vpow.pop %v4050
  %v4052 = vmul.f32 %v3955, 1.442695
  %v4053 = vpow.pop %v4052
  %v4054 = vmul.f32 %v3956, 1.442695
  %v4055 = vpow.pop %v4054
  %v4056 = vmul.f32 %v3957, 1.442695
  %v4057 = vpow.pop %v4056
  %v4058 = vmul.f32 %v3958, 1.442695
  %v4059 = vpow.pop %v4058
  %v4060 = vmul.f32 %v3959, 1.442695
  %v4061 = vpow.pop %v4060
  %v4062 = vmul.f32 %v3960, 1.442695
  %v4063 = vpow.pop %v4062
  %v4064 = vmul.f32 %v3961, 1.442695
  %v4065 = vpow.pop %v4064
  %v4066 = vmul.f32 %v3962, 1.442695
  %v4067 = vpow.pop %v4066
  %v4068 = vmul.f32 %v3963, 1.442695
  %v4069 = vpow.pop %v4068
  %v4070 = vmul.f32 %v3964, 1.442695
  %v4071 = vpow.pop %v4070
  %v4072 = vmul.f32 %v3965, 1.442695
  %v4073 = vpow.pop %v4072
  %v4074 = vmul.f32 %v3966, 1.442695
  %v4075 = vpow.pop %v4074
  %v4076 = vmul.f32 %v3967, 1.442695
  %v4077 = vpow.pop %v4076
  %v4078 = vmul.f32 %v3968, 1.442695
  %v4079 = vpow.pop %v4078
  %v4080 = vmul.f32 %v3969, 1.442695
  %v4081 = vpow.pop %v4080
  %v4082 = vmul.f32 %v3970, 1.442695
  %v4083 = vpow.pop %v4082
  %v4084 = vmul.f32 %v3971, 1.442695
  %v4085 = vpow.pop %v4084
  %v4086 = vmul.f32 %v3972, 1.442695
  %v4087 = vpow.pop %v4086
  %v4088 = vmul.f32 %v3973, 1.442695
  %v4089 = vpow.pop %v4088
  %v4090 = vmul.f32 %v3974, 1.442695
  %v4091 = vpow.pop %v4090
  %v4092 = vmul.f32 %v3975, 1.442695
  %v4093 = vpow.pop %v4092
  %v4094 = vmul.f32 %v3976, 1.442695
  %v4095 = vpow.pop %v4094
  %v4096 = vmul.f32 %v3977, 1.442695
  %v4097 = vpow.pop %v4096
  %v4098 = vmul.f32 %v3978, 1.442695
  %v4099 = vpow.pop %v4098
  %v4100 = vmul.f32 %v3979, 1.442695
  %v4101 = vpow.pop %v4100
  %v4102 = vmul.f32 %v3980, 1.442695
  %v4103 = vpow.pop %v4102
  %v4104 = vmul.f32 %v3981, 1.442695
  %v4105 = vpow.pop %v4104
  %v4106 = vmul.f32 %v3982, 1.442695
  %v4107 = vpow.pop %v4106
  %v4108 = vmul.f32 %v3983, 1.442695
  %v4109 = vpow.pop %v4108
  %v4110 = vmul.f32 %v3984, 1.442695
  %v4111 = vpow.pop %v4110
  %v4112 = vmul.f32 %v3985, 1.442695
  %v4113 = vpow.pop %v4112
  %v4114 = vadd.f32 %v3987, 1.0
  %v4115 = vadd.f32 %v3989, 1.0
  %v4116 = vadd.f32 %v3991, 1.0
  %v4117 = vadd.f32 %v3993, 1.0
  %v4118 = vadd.f32 %v3995, 1.0
  %v4119 = vadd.f32 %v3997, 1.0
  %v4120 = vadd.f32 %v3999, 1.0
  %v4121 = vadd.f32 %v4001, 1.0
  %v4122 = vadd.f32 %v4003, 1.0
  %v4123 = vadd.f32 %v4005, 1.0
  %v4124 = vadd.f32 %v4007, 1.0
  %v4125 = vadd.f32 %v4009, 1.0
  %v4126 = vadd.f32 %v4011, 1.0
  %v4127 = vadd.f32 %v4013, 1.0
  %v4128 = vadd.f32 %v4015, 1.0
  %v4129 = vadd.f32 %v4017, 1.0
  %v4130 = vadd.f32 %v4019, 1.0
  %v4131 = vadd.f32 %v4021, 1.0
  %v4132 = vadd.f32 %v4023, 1.0
  %v4133 = vadd.f32 %v4025, 1.0
  %v4134 = vadd.f32 %v4027, 1.0
  %v4135 = vadd.f32 %v4029, 1.0
  %v4136 = vadd.f32 %v4031, 1.0
  %v4137 = vadd.f32 %v4033, 1.0
  %v4138 = vadd.f32 %v4035, 1.0
  %v4139 = vadd.f32 %v4037, 1.0
  %v4140 = vadd.f32 %v4039, 1.0
  %v4141 = vadd.f32 %v4041, 1.0
  %v4142 = vadd.f32 %v4043, 1.0
  %v4143 = vadd.f32 %v4045, 1.0
  %v4144 = vadd.f32 %v4047, 1.0
  %v4145 = vadd.f32 %v4049, 1.0
  %v4146 = vadd.f32 %v4051, 1.0
  %v4147 = vadd.f32 %v4053, 1.0
  %v4148 = vadd.f32 %v4055, 1.0
  %v4149 = vadd.f32 %v4057, 1.0
  %v4150 = vadd.f32 %v4059, 1.0
  %v4151 = vadd.f32 %v4061, 1.0
  %v4152 = vadd.f32 %v4063, 1.0
  %v4153 = vadd.f32 %v4065, 1.0
  %v4154 = vadd.f32 %v4067, 1.0
  %v4155 = vadd.f32 %v4069, 1.0
  %v4156 = vadd.f32 %v4071, 1.0
  %v4157 = vadd.f32 %v4073, 1.0
  %v4158 = vadd.f32 %v4075, 1.0
  %v4159 = vadd.f32 %v4077, 1.0
  %v4160 = vadd.f32 %v4079, 1.0
  %v4161 = vadd.f32 %v4081, 1.0
  %v4162 = vadd.f32 %v4083, 1.0
  %v4163 = vadd.f32 %v4085, 1.0
  %v4164 = vadd.f32 %v4087, 1.0
  %v4165 = vadd.f32 %v4089, 1.0
  %v4166 = vadd.f32 %v4091, 1.0
  %v4167 = vadd.f32 %v4093, 1.0
  %v4168 = vadd.f32 %v4095, 1.0
  %v4169 = vadd.f32 %v4097, 1.0
  %v4170 = vadd.f32 %v4099, 1.0
  %v4171 = vadd.f32 %v4101, 1.0
  %v4172 = vadd.f32 %v4103, 1.0
  %v4173 = vadd.f32 %v4105, 1.0
  %v4174 = vadd.f32 %v4107, 1.0
  %v4175 = vadd.f32 %v4109, 1.0
  %v4176 = vadd.f32 %v4111, 1.0
  %v4177 = vadd.f32 %v4113, 1.0
  %v4178 = vrcp.pop %v4114
  %v4179 = vmul.f32 %v4114, %v4178
  %v4180 = vsub.f32 1.0, %v4179
  %v4181 = vmul.f32 %v4178, %v4180
  %v4182 = vadd.f32 %v4178, %v4181
  %vm4183 = vweird.f32 %v4114
  %vm4184 = vweird.f32 %v4178
  %vm4185 = vmor %vm4183, %vm4184
  %v4186 = vsel %vm4185, %v4178, %v4182
  %v4187 = vand.u32 2147483647, %v4114
  %vm4188 = vcmp.eq.f32.partialorder %v4187, 8.507059e+37
  %v4189 = vand.u32 %v4114, 2147483648
  %v4190 = vor.u32 1.1754944e-38, %v4189
  %v4191 = vsel %vm4188, %v4190, %v4186
  %v4192 = vmul.f32 1.0, %v4191
  %v4193 = vrcp.pop %v4115
  %v4194 = vmul.f32 %v4115, %v4193
  %v4195 = vsub.f32 1.0, %v4194
  %v4196 = vmul.f32 %v4193, %v4195
  %v4197 = vadd.f32 %v4193, %v4196
  %vm4198 = vweird.f32 %v4115
  %vm4199 = vweird.f32 %v4193
  %vm4200 = vmor %vm4198, %vm4199
  %v4201 = vsel %vm4200, %v4193, %v4197
  %v4202 = vand.u32 2147483647, %v4115
  %vm4203 = vcmp.eq.f32.partialorder %v4202, 8.507059e+37
  %v4204 = vand.u32 %v4115, 2147483648
  %v4205 = vor.u32 1.1754944e-38, %v4204
  %v4206 = vsel %vm4203, %v4205, %v4201
  %v4207 = vmul.f32 1.0, %v4206
  %v4208 = vrcp.pop %v4116
  %v4209 = vmul.f32 %v4116, %v4208
  %v4210 = vsub.f32 1.0, %v4209
  %v4211 = vmul.f32 %v4208, %v4210
  %v4212 = vadd.f32 %v4208, %v4211
  %vm4213 = vweird.f32 %v4116
  %vm4214 = vweird.f32 %v4208
  %vm4215 = vmor %vm4213, %vm4214
  %v4216 = vsel %vm4215, %v4208, %v4212
  %v4217 = vand.u32 2147483647, %v4116
  %vm4218 = vcmp.eq.f32.partialorder %v4217, 8.507059e+37
  %v4219 = vand.u32 %v4116, 2147483648
  %v4220 = vor.u32 1.1754944e-38, %v4219
  %v4221 = vsel %vm4218, %v4220, %v4216
  %v4222 = vmul.f32 1.0, %v4221
  %v4223 = vrcp.pop %v4117
  %v4224 = vmul.f32 %v4117, %v4223
  %v4225 = vsub.f32 1.0, %v4224
  %v4226 = vmul.f32 %v4223, %v4225
  %v4227 = vadd.f32 %v4223, %v4226
  %vm4228 = vweird.f32 %v4117
  %vm4229 = vweird.f32 %v4223
  %vm4230 = vmor %vm4228, %vm4229
  %v4231 = vsel %vm4230, %v4223, %v4227
  %v4232 = vand.u32 2147483647, %v4117
  %vm4233 = vcmp.eq.f32.partialorder %v4232, 8.507059e+37
  %v4234 = vand.u32 %v4117, 2147483648
  %v4235 = vor.u32 1.1754944e-38, %v4234
  %v4236 = vsel %vm4233, %v4235, %v4231
  %v4237 = vmul.f32 1.0, %v4236
  %v4238 = vrcp.pop %v4118
  %v4239 = vmul.f32 %v4118, %v4238
  %v4240 = vsub.f32 1.0, %v4239
  %v4241 = vmul.f32 %v4238, %v4240
  %v4242 = vadd.f32 %v4238, %v4241
  %vm4243 = vweird.f32 %v4118
  %vm4244 = vweird.f32 %v4238
  %vm4245 = vmor %vm4243, %vm4244
  %v4246 = vsel %vm4245, %v4238, %v4242
  %v4247 = vand.u32 2147483647, %v4118
  %vm4248 = vcmp.eq.f32.partialorder %v4247, 8.507059e+37
  %v4249 = vand.u32 %v4118, 2147483648
  %v4250 = vor.u32 1.1754944e-38, %v4249
  %v4251 = vsel %vm4248, %v4250, %v4246
  %v4252 = vmul.f32 1.0, %v4251
  %v4253 = vrcp.pop %v4119
  %v4254 = vmul.f32 %v4119, %v4253
  %v4255 = vsub.f32 1.0, %v4254
  %v4256 = vmul.f32 %v4253, %v4255
  %v4257 = vadd.f32 %v4253, %v4256
  %vm4258 = vweird.f32 %v4119
  %vm4259 = vweird.f32 %v4253
  %vm4260 = vmor %vm4258, %vm4259
  %v4261 = vsel %vm4260, %v4253, %v4257
  %v4262 = vand.u32 2147483647, %v4119
  %vm4263 = vcmp.eq.f32.partialorder %v4262, 8.507059e+37
  %v4264 = vand.u32 %v4119, 2147483648
  %v4265 = vor.u32 1.1754944e-38, %v4264
  %v4266 = vsel %vm4263, %v4265, %v4261
  %v4267 = vmul.f32 1.0, %v4266
  %v4268 = vrcp.pop %v4120
  %v4269 = vmul.f32 %v4120, %v4268
  %v4270 = vsub.f32 1.0, %v4269
  %v4271 = vmul.f32 %v4268, %v4270
  %v4272 = vadd.f32 %v4268, %v4271
  %vm4273 = vweird.f32 %v4120
  %vm4274 = vweird.f32 %v4268
  %vm4275 = vmor %vm4273, %vm4274
  %v4276 = vsel %vm4275, %v4268, %v4272
  %v4277 = vand.u32 2147483647, %v4120
  %vm4278 = vcmp.eq.f32.partialorder %v4277, 8.507059e+37
  %v4279 = vand.u32 %v4120, 2147483648
  %v4280 = vor.u32 1.1754944e-38, %v4279
  %v4281 = vsel %vm4278, %v4280, %v4276
  %v4282 = vmul.f32 1.0, %v4281
  %v4283 = vrcp.pop %v4121
  %v4284 = vmul.f32 %v4121, %v4283
  %v4285 = vsub.f32 1.0, %v4284
  %v4286 = vmul.f32 %v4283, %v4285
  %v4287 = vadd.f32 %v4283, %v4286
  %vm4288 = vweird.f32 %v4121
  %vm4289 = vweird.f32 %v4283
  %vm4290 = vmor %vm4288, %vm4289
  %v4291 = vsel %vm4290, %v4283, %v4287
  %v4292 = vand.u32 2147483647, %v4121
  %vm4293 = vcmp.eq.f32.partialorder %v4292, 8.507059e+37
  %v4294 = vand.u32 %v4121, 2147483648
  %v4295 = vor.u32 1.1754944e-38, %v4294
  %v4296 = vsel %vm4293, %v4295, %v4291
  %v4297 = vmul.f32 1.0, %v4296
  %v4298 = vrcp.pop %v4122
  %v4299 = vmul.f32 %v4122, %v4298
  %v4300 = vsub.f32 1.0, %v4299
  %v4301 = vmul.f32 %v4298, %v4300
  %v4302 = vadd.f32 %v4298, %v4301
  %vm4303 = vweird.f32 %v4122
  %vm4304 = vweird.f32 %v4298
  %vm4305 = vmor %vm4303, %vm4304
  %v4306 = vsel %vm4305, %v4298, %v4302
  %v4307 = vand.u32 2147483647, %v4122
  %vm4308 = vcmp.eq.f32.partialorder %v4307, 8.507059e+37
  %v4309 = vand.u32 %v4122, 2147483648
  %v4310 = vor.u32 1.1754944e-38, %v4309
  %v4311 = vsel %vm4308, %v4310, %v4306
  %v4312 = vmul.f32 1.0, %v4311
  %v4313 = vrcp.pop %v4123
  %v4314 = vmul.f32 %v4123, %v4313
  %v4315 = vsub.f32 1.0, %v4314
  %v4316 = vmul.f32 %v4313, %v4315
  %v4317 = vadd.f32 %v4313, %v4316
  %vm4318 = vweird.f32 %v4123
  %vm4319 = vweird.f32 %v4313
  %vm4320 = vmor %vm4318, %vm4319
  %v4321 = vsel %vm4320, %v4313, %v4317
  %v4322 = vand.u32 2147483647, %v4123
  %vm4323 = vcmp.eq.f32.partialorder %v4322, 8.507059e+37
  %v4324 = vand.u32 %v4123, 2147483648
  %v4325 = vor.u32 1.1754944e-38, %v4324
  %v4326 = vsel %vm4323, %v4325, %v4321
  %v4327 = vmul.f32 1.0, %v4326
  %v4328 = vrcp.pop %v4124
  %v4329 = vmul.f32 %v4124, %v4328
  %v4330 = vsub.f32 1.0, %v4329
  %v4331 = vmul.f32 %v4328, %v4330
  %v4332 = vadd.f32 %v4328, %v4331
  %vm4333 = vweird.f32 %v4124
  %vm4334 = vweird.f32 %v4328
  %vm4335 = vmor %vm4333, %vm4334
  %v4336 = vsel %vm4335, %v4328, %v4332
  %v4337 = vand.u32 2147483647, %v4124
  %vm4338 = vcmp.eq.f32.partialorder %v4337, 8.507059e+37
  %v4339 = vand.u32 %v4124, 2147483648
  %v4340 = vor.u32 1.1754944e-38, %v4339
  %v4341 = vsel %vm4338, %v4340, %v4336
  %v4342 = vmul.f32 1.0, %v4341
  %v4343 = vrcp.pop %v4125
  %v4344 = vmul.f32 %v4125, %v4343
  %v4345 = vsub.f32 1.0, %v4344
  %v4346 = vmul.f32 %v4343, %v4345
  %v4347 = vadd.f32 %v4343, %v4346
  %vm4348 = vweird.f32 %v4125
  %vm4349 = vweird.f32 %v4343
  %vm4350 = vmor %vm4348, %vm4349
  %v4351 = vsel %vm4350, %v4343, %v4347
  %v4352 = vand.u32 2147483647, %v4125
  %vm4353 = vcmp.eq.f32.partialorder %v4352, 8.507059e+37
  %v4354 = vand.u32 %v4125, 2147483648
  %v4355 = vor.u32 1.1754944e-38, %v4354
  %v4356 = vsel %vm4353, %v4355, %v4351
  %v4357 = vmul.f32 1.0, %v4356
  %v4358 = vrcp.pop %v4126
  %v4359 = vmul.f32 %v4126, %v4358
  %v4360 = vsub.f32 1.0, %v4359
  %v4361 = vmul.f32 %v4358, %v4360
  %v4362 = vadd.f32 %v4358, %v4361
  %vm4363 = vweird.f32 %v4126
  %vm4364 = vweird.f32 %v4358
  %vm4365 = vmor %vm4363, %vm4364
  %v4366 = vsel %vm4365, %v4358, %v4362
  %v4367 = vand.u32 2147483647, %v4126
  %vm4368 = vcmp.eq.f32.partialorder %v4367, 8.507059e+37
  %v4369 = vand.u32 %v4126, 2147483648
  %v4370 = vor.u32 1.1754944e-38, %v4369
  %v4371 = vsel %vm4368, %v4370, %v4366
  %v4372 = vmul.f32 1.0, %v4371
  %v4373 = vrcp.pop %v4127
  %v4374 = vmul.f32 %v4127, %v4373
  %v4375 = vsub.f32 1.0, %v4374
  %v4376 = vmul.f32 %v4373, %v4375
  %v4377 = vadd.f32 %v4373, %v4376
  %vm4378 = vweird.f32 %v4127
  %vm4379 = vweird.f32 %v4373
  %vm4380 = vmor %vm4378, %vm4379
  %v4381 = vsel %vm4380, %v4373, %v4377
  %v4382 = vand.u32 2147483647, %v4127
  %vm4383 = vcmp.eq.f32.partialorder %v4382, 8.507059e+37
  %v4384 = vand.u32 %v4127, 2147483648
  %v4385 = vor.u32 1.1754944e-38, %v4384
  %v4386 = vsel %vm4383, %v4385, %v4381
  %v4387 = vmul.f32 1.0, %v4386
  %v4388 = vrcp.pop %v4128
  %v4389 = vmul.f32 %v4128, %v4388
  %v4390 = vsub.f32 1.0, %v4389
  %v4391 = vmul.f32 %v4388, %v4390
  %v4392 = vadd.f32 %v4388, %v4391
  %vm4393 = vweird.f32 %v4128
  %vm4394 = vweird.f32 %v4388
  %vm4395 = vmor %vm4393, %vm4394
  %v4396 = vsel %vm4395, %v4388, %v4392
  %v4397 = vand.u32 2147483647, %v4128
  %vm4398 = vcmp.eq.f32.partialorder %v4397, 8.507059e+37
  %v4399 = vand.u32 %v4128, 2147483648
  %v4400 = vor.u32 1.1754944e-38, %v4399
  %v4401 = vsel %vm4398, %v4400, %v4396
  %v4402 = vmul.f32 1.0, %v4401
  %v4403 = vrcp.pop %v4129
  %v4404 = vmul.f32 %v4129, %v4403
  %v4405 = vsub.f32 1.0, %v4404
  %v4406 = vmul.f32 %v4403, %v4405
  %v4407 = vadd.f32 %v4403, %v4406
  %vm4408 = vweird.f32 %v4129
  %vm4409 = vweird.f32 %v4403
  %vm4410 = vmor %vm4408, %vm4409
  %v4411 = vsel %vm4410, %v4403, %v4407
  %v4412 = vand.u32 2147483647, %v4129
  %vm4413 = vcmp.eq.f32.partialorder %v4412, 8.507059e+37
  %v4414 = vand.u32 %v4129, 2147483648
  %v4415 = vor.u32 1.1754944e-38, %v4414
  %v4416 = vsel %vm4413, %v4415, %v4411
  %v4417 = vmul.f32 1.0, %v4416
  %v4418 = vrcp.pop %v4130
  %v4419 = vmul.f32 %v4130, %v4418
  %v4420 = vsub.f32 1.0, %v4419
  %v4421 = vmul.f32 %v4418, %v4420
  %v4422 = vadd.f32 %v4418, %v4421
  %vm4423 = vweird.f32 %v4130
  %vm4424 = vweird.f32 %v4418
  %vm4425 = vmor %vm4423, %vm4424
  %v4426 = vsel %vm4425, %v4418, %v4422
  %v4427 = vand.u32 2147483647, %v4130
  %vm4428 = vcmp.eq.f32.partialorder %v4427, 8.507059e+37
  %v4429 = vand.u32 %v4130, 2147483648
  %v4430 = vor.u32 1.1754944e-38, %v4429
  %v4431 = vsel %vm4428, %v4430, %v4426
  %v4432 = vmul.f32 1.0, %v4431
  %v4433 = vrcp.pop %v4131
  %v4434 = vmul.f32 %v4131, %v4433
  %v4435 = vsub.f32 1.0, %v4434
  %v4436 = vmul.f32 %v4433, %v4435
  %v4437 = vadd.f32 %v4433, %v4436
  %vm4438 = vweird.f32 %v4131
  %vm4439 = vweird.f32 %v4433
  %vm4440 = vmor %vm4438, %vm4439
  %v4441 = vsel %vm4440, %v4433, %v4437
  %v4442 = vand.u32 2147483647, %v4131
  %vm4443 = vcmp.eq.f32.partialorder %v4442, 8.507059e+37
  %v4444 = vand.u32 %v4131, 2147483648
  %v4445 = vor.u32 1.1754944e-38, %v4444
  %v4446 = vsel %vm4443, %v4445, %v4441
  %v4447 = vmul.f32 1.0, %v4446
  %v4448 = vrcp.pop %v4132
  %v4449 = vmul.f32 %v4132, %v4448
  %v4450 = vsub.f32 1.0, %v4449
  %v4451 = vmul.f32 %v4448, %v4450
  %v4452 = vadd.f32 %v4448, %v4451
  %vm4453 = vweird.f32 %v4132
  %vm4454 = vweird.f32 %v4448
  %vm4455 = vmor %vm4453, %vm4454
  %v4456 = vsel %vm4455, %v4448, %v4452
  %v4457 = vand.u32 2147483647, %v4132
  %vm4458 = vcmp.eq.f32.partialorder %v4457, 8.507059e+37
  %v4459 = vand.u32 %v4132, 2147483648
  %v4460 = vor.u32 1.1754944e-38, %v4459
  %v4461 = vsel %vm4458, %v4460, %v4456
  %v4462 = vmul.f32 1.0, %v4461
  %v4463 = vrcp.pop %v4133
  %v4464 = vmul.f32 %v4133, %v4463
  %v4465 = vsub.f32 1.0, %v4464
  %v4466 = vmul.f32 %v4463, %v4465
  %v4467 = vadd.f32 %v4463, %v4466
  %vm4468 = vweird.f32 %v4133
  %vm4469 = vweird.f32 %v4463
  %vm4470 = vmor %vm4468, %vm4469
  %v4471 = vsel %vm4470, %v4463, %v4467
  %v4472 = vand.u32 2147483647, %v4133
  %vm4473 = vcmp.eq.f32.partialorder %v4472, 8.507059e+37
  %v4474 = vand.u32 %v4133, 2147483648
  %v4475 = vor.u32 1.1754944e-38, %v4474
  %v4476 = vsel %vm4473, %v4475, %v4471
  %v4477 = vmul.f32 1.0, %v4476
  %v4478 = vrcp.pop %v4134
  %v4479 = vmul.f32 %v4134, %v4478
  %v4480 = vsub.f32 1.0, %v4479
  %v4481 = vmul.f32 %v4478, %v4480
  %v4482 = vadd.f32 %v4478, %v4481
  %vm4483 = vweird.f32 %v4134
  %vm4484 = vweird.f32 %v4478
  %vm4485 = vmor %vm4483, %vm4484
  %v4486 = vsel %vm4485, %v4478, %v4482
  %v4487 = vand.u32 2147483647, %v4134
  %vm4488 = vcmp.eq.f32.partialorder %v4487, 8.507059e+37
  %v4489 = vand.u32 %v4134, 2147483648
  %v4490 = vor.u32 1.1754944e-38, %v4489
  %v4491 = vsel %vm4488, %v4490, %v4486
  %v4492 = vmul.f32 1.0, %v4491
  %v4493 = vrcp.pop %v4135
  %v4494 = vmul.f32 %v4135, %v4493
  %v4495 = vsub.f32 1.0, %v4494
  %v4496 = vmul.f32 %v4493, %v4495
  %v4497 = vadd.f32 %v4493, %v4496
  %vm4498 = vweird.f32 %v4135
  %vm4499 = vweird.f32 %v4493
  %vm4500 = vmor %vm4498, %vm4499
  %v4501 = vsel %vm4500, %v4493, %v4497
  %v4502 = vand.u32 2147483647, %v4135
  %vm4503 = vcmp.eq.f32.partialorder %v4502, 8.507059e+37
  %v4504 = vand.u32 %v4135, 2147483648
  %v4505 = vor.u32 1.1754944e-38, %v4504
  %v4506 = vsel %vm4503, %v4505, %v4501
  %v4507 = vmul.f32 1.0, %v4506
  %v4508 = vrcp.pop %v4136
  %v4509 = vmul.f32 %v4136, %v4508
  %v4510 = vsub.f32 1.0, %v4509
  %v4511 = vmul.f32 %v4508, %v4510
  %v4512 = vadd.f32 %v4508, %v4511
  %vm4513 = vweird.f32 %v4136
  %vm4514 = vweird.f32 %v4508
  %vm4515 = vmor %vm4513, %vm4514
  %v4516 = vsel %vm4515, %v4508, %v4512
  %v4517 = vand.u32 2147483647, %v4136
  %vm4518 = vcmp.eq.f32.partialorder %v4517, 8.507059e+37
  %v4519 = vand.u32 %v4136, 2147483648
  %v4520 = vor.u32 1.1754944e-38, %v4519
  %v4521 = vsel %vm4518, %v4520, %v4516
  %v4522 = vmul.f32 1.0, %v4521
  %v4523 = vrcp.pop %v4137
  %v4524 = vmul.f32 %v4137, %v4523
  %v4525 = vsub.f32 1.0, %v4524
  %v4526 = vmul.f32 %v4523, %v4525
  %v4527 = vadd.f32 %v4523, %v4526
  %vm4528 = vweird.f32 %v4137
  %vm4529 = vweird.f32 %v4523
  %vm4530 = vmor %vm4528, %vm4529
  %v4531 = vsel %vm4530, %v4523, %v4527
  %v4532 = vand.u32 2147483647, %v4137
  %vm4533 = vcmp.eq.f32.partialorder %v4532, 8.507059e+37
  %v4534 = vand.u32 %v4137, 2147483648
  %v4535 = vor.u32 1.1754944e-38, %v4534
  %v4536 = vsel %vm4533, %v4535, %v4531
  %v4537 = vmul.f32 1.0, %v4536
  %v4538 = vrcp.pop %v4138
  %v4539 = vmul.f32 %v4138, %v4538
  %v4540 = vsub.f32 1.0, %v4539
  %v4541 = vmul.f32 %v4538, %v4540
  %v4542 = vadd.f32 %v4538, %v4541
  %vm4543 = vweird.f32 %v4138
  %vm4544 = vweird.f32 %v4538
  %vm4545 = vmor %vm4543, %vm4544
  %v4546 = vsel %vm4545, %v4538, %v4542
  %v4547 = vand.u32 2147483647, %v4138
  %vm4548 = vcmp.eq.f32.partialorder %v4547, 8.507059e+37
  %v4549 = vand.u32 %v4138, 2147483648
  %v4550 = vor.u32 1.1754944e-38, %v4549
  %v4551 = vsel %vm4548, %v4550, %v4546
  %v4552 = vmul.f32 1.0, %v4551
  %v4553 = vrcp.pop %v4139
  %v4554 = vmul.f32 %v4139, %v4553
  %v4555 = vsub.f32 1.0, %v4554
  %v4556 = vmul.f32 %v4553, %v4555
  %v4557 = vadd.f32 %v4553, %v4556
  %vm4558 = vweird.f32 %v4139
  %vm4559 = vweird.f32 %v4553
  %vm4560 = vmor %vm4558, %vm4559
  %v4561 = vsel %vm4560, %v4553, %v4557
  %v4562 = vand.u32 2147483647, %v4139
  %vm4563 = vcmp.eq.f32.partialorder %v4562, 8.507059e+37
  %v4564 = vand.u32 %v4139, 2147483648
  %v4565 = vor.u32 1.1754944e-38, %v4564
  %v4566 = vsel %vm4563, %v4565, %v4561
  %v4567 = vmul.f32 1.0, %v4566
  %v4568 = vrcp.pop %v4140
  %v4569 = vmul.f32 %v4140, %v4568
  %v4570 = vsub.f32 1.0, %v4569
  %v4571 = vmul.f32 %v4568, %v4570
  %v4572 = vadd.f32 %v4568, %v4571
  %vm4573 = vweird.f32 %v4140
  %vm4574 = vweird.f32 %v4568
  %vm4575 = vmor %vm4573, %vm4574
  %v4576 = vsel %vm4575, %v4568, %v4572
  %v4577 = vand.u32 2147483647, %v4140
  %vm4578 = vcmp.eq.f32.partialorder %v4577, 8.507059e+37
  %v4579 = vand.u32 %v4140, 2147483648
  %v4580 = vor.u32 1.1754944e-38, %v4579
  %v4581 = vsel %vm4578, %v4580, %v4576
  %v4582 = vmul.f32 1.0, %v4581
  %v4583 = vrcp.pop %v4141
  %v4584 = vmul.f32 %v4141, %v4583
  %v4585 = vsub.f32 1.0, %v4584
  %v4586 = vmul.f32 %v4583, %v4585
  %v4587 = vadd.f32 %v4583, %v4586
  %vm4588 = vweird.f32 %v4141
  %vm4589 = vweird.f32 %v4583
  %vm4590 = vmor %vm4588, %vm4589
  %v4591 = vsel %vm4590, %v4583, %v4587
  %v4592 = vand.u32 2147483647, %v4141
  %vm4593 = vcmp.eq.f32.partialorder %v4592, 8.507059e+37
  %v4594 = vand.u32 %v4141, 2147483648
  %v4595 = vor.u32 1.1754944e-38, %v4594
  %v4596 = vsel %vm4593, %v4595, %v4591
  %v4597 = vmul.f32 1.0, %v4596
  %v4598 = vrcp.pop %v4142
  %v4599 = vmul.f32 %v4142, %v4598
  %v4600 = vsub.f32 1.0, %v4599
  %v4601 = vmul.f32 %v4598, %v4600
  %v4602 = vadd.f32 %v4598, %v4601
  %vm4603 = vweird.f32 %v4142
  %vm4604 = vweird.f32 %v4598
  %vm4605 = vmor %vm4603, %vm4604
  %v4606 = vsel %vm4605, %v4598, %v4602
  %v4607 = vand.u32 2147483647, %v4142
  %vm4608 = vcmp.eq.f32.partialorder %v4607, 8.507059e+37
  %v4609 = vand.u32 %v4142, 2147483648
  %v4610 = vor.u32 1.1754944e-38, %v4609
  %v4611 = vsel %vm4608, %v4610, %v4606
  %v4612 = vmul.f32 1.0, %v4611
  %v4613 = vrcp.pop %v4143
  %v4614 = vmul.f32 %v4143, %v4613
  %v4615 = vsub.f32 1.0, %v4614
  %v4616 = vmul.f32 %v4613, %v4615
  %v4617 = vadd.f32 %v4613, %v4616
  %vm4618 = vweird.f32 %v4143
  %vm4619 = vweird.f32 %v4613
  %vm4620 = vmor %vm4618, %vm4619
  %v4621 = vsel %vm4620, %v4613, %v4617
  %v4622 = vand.u32 2147483647, %v4143
  %vm4623 = vcmp.eq.f32.partialorder %v4622, 8.507059e+37
  %v4624 = vand.u32 %v4143, 2147483648
  %v4625 = vor.u32 1.1754944e-38, %v4624
  %v4626 = vsel %vm4623, %v4625, %v4621
  %v4627 = vmul.f32 1.0, %v4626
  %v4628 = vrcp.pop %v4144
  %v4629 = vmul.f32 %v4144, %v4628
  %v4630 = vsub.f32 1.0, %v4629
  %v4631 = vmul.f32 %v4628, %v4630
  %v4632 = vadd.f32 %v4628, %v4631
  %vm4633 = vweird.f32 %v4144
  %vm4634 = vweird.f32 %v4628
  %vm4635 = vmor %vm4633, %vm4634
  %v4636 = vsel %vm4635, %v4628, %v4632
  %v4637 = vand.u32 2147483647, %v4144
  %vm4638 = vcmp.eq.f32.partialorder %v4637, 8.507059e+37
  %v4639 = vand.u32 %v4144, 2147483648
  %v4640 = vor.u32 1.1754944e-38, %v4639
  %v4641 = vsel %vm4638, %v4640, %v4636
  %v4642 = vmul.f32 1.0, %v4641
  %v4643 = vrcp.pop %v4145
  %v4644 = vmul.f32 %v4145, %v4643
  %v4645 = vsub.f32 1.0, %v4644
  %v4646 = vmul.f32 %v4643, %v4645
  %v4647 = vadd.f32 %v4643, %v4646
  %vm4648 = vweird.f32 %v4145
  %vm4649 = vweird.f32 %v4643
  %vm4650 = vmor %vm4648, %vm4649
  %v4651 = vsel %vm4650, %v4643, %v4647
  %v4652 = vand.u32 2147483647, %v4145
  %vm4653 = vcmp.eq.f32.partialorder %v4652, 8.507059e+37
  %v4654 = vand.u32 %v4145, 2147483648
  %v4655 = vor.u32 1.1754944e-38, %v4654
  %v4656 = vsel %vm4653, %v4655, %v4651
  %v4657 = vmul.f32 1.0, %v4656
  %v4658 = vrcp.pop %v4146
  %v4659 = vmul.f32 %v4146, %v4658
  %v4660 = vsub.f32 1.0, %v4659
  %v4661 = vmul.f32 %v4658, %v4660
  %v4662 = vadd.f32 %v4658, %v4661
  %vm4663 = vweird.f32 %v4146
  %vm4664 = vweird.f32 %v4658
  %vm4665 = vmor %vm4663, %vm4664
  %v4666 = vsel %vm4665, %v4658, %v4662
  %v4667 = vand.u32 2147483647, %v4146
  %vm4668 = vcmp.eq.f32.partialorder %v4667, 8.507059e+37
  %v4669 = vand.u32 %v4146, 2147483648
  %v4670 = vor.u32 1.1754944e-38, %v4669
  %v4671 = vsel %vm4668, %v4670, %v4666
  %v4672 = vmul.f32 1.0, %v4671
  %v4673 = vrcp.pop %v4147
  %v4674 = vmul.f32 %v4147, %v4673
  %v4675 = vsub.f32 1.0, %v4674
  %v4676 = vmul.f32 %v4673, %v4675
  %v4677 = vadd.f32 %v4673, %v4676
  %vm4678 = vweird.f32 %v4147
  %vm4679 = vweird.f32 %v4673
  %vm4680 = vmor %vm4678, %vm4679
  %v4681 = vsel %vm4680, %v4673, %v4677
  %v4682 = vand.u32 2147483647, %v4147
  %vm4683 = vcmp.eq.f32.partialorder %v4682, 8.507059e+37
  %v4684 = vand.u32 %v4147, 2147483648
  %v4685 = vor.u32 1.1754944e-38, %v4684
  %v4686 = vsel %vm4683, %v4685, %v4681
  %v4687 = vmul.f32 1.0, %v4686
  %v4688 = vrcp.pop %v4148
  %v4689 = vmul.f32 %v4148, %v4688
  %v4690 = vsub.f32 1.0, %v4689
  %v4691 = vmul.f32 %v4688, %v4690
  %v4692 = vadd.f32 %v4688, %v4691
  %vm4693 = vweird.f32 %v4148
  %vm4694 = vweird.f32 %v4688
  %vm4695 = vmor %vm4693, %vm4694
  %v4696 = vsel %vm4695, %v4688, %v4692
  %v4697 = vand.u32 2147483647, %v4148
  %vm4698 = vcmp.eq.f32.partialorder %v4697, 8.507059e+37
  %v4699 = vand.u32 %v4148, 2147483648
  %v4700 = vor.u32 1.1754944e-38, %v4699
  %v4701 = vsel %vm4698, %v4700, %v4696
  %v4702 = vmul.f32 1.0, %v4701
  %v4703 = vrcp.pop %v4149
  %v4704 = vmul.f32 %v4149, %v4703
  %v4705 = vsub.f32 1.0, %v4704
  %v4706 = vmul.f32 %v4703, %v4705
  %v4707 = vadd.f32 %v4703, %v4706
  %vm4708 = vweird.f32 %v4149
  %vm4709 = vweird.f32 %v4703
  %vm4710 = vmor %vm4708, %vm4709
  %v4711 = vsel %vm4710, %v4703, %v4707
  %v4712 = vand.u32 2147483647, %v4149
  %vm4713 = vcmp.eq.f32.partialorder %v4712, 8.507059e+37
  %v4714 = vand.u32 %v4149, 2147483648
  %v4715 = vor.u32 1.1754944e-38, %v4714
  %v4716 = vsel %vm4713, %v4715, %v4711
  %v4717 = vmul.f32 1.0, %v4716
  %v4718 = vrcp.pop %v4150
  %v4719 = vmul.f32 %v4150, %v4718
  %v4720 = vsub.f32 1.0, %v4719
  %v4721 = vmul.f32 %v4718, %v4720
  %v4722 = vadd.f32 %v4718, %v4721
  %vm4723 = vweird.f32 %v4150
  %vm4724 = vweird.f32 %v4718
  %vm4725 = vmor %vm4723, %vm4724
  %v4726 = vsel %vm4725, %v4718, %v4722
  %v4727 = vand.u32 2147483647, %v4150
  %vm4728 = vcmp.eq.f32.partialorder %v4727, 8.507059e+37
  %v4729 = vand.u32 %v4150, 2147483648
  %v4730 = vor.u32 1.1754944e-38, %v4729
  %v4731 = vsel %vm4728, %v4730, %v4726
  %v4732 = vmul.f32 1.0, %v4731
  %v4733 = vrcp.pop %v4151
  %v4734 = vmul.f32 %v4151, %v4733
  %v4735 = vsub.f32 1.0, %v4734
  %v4736 = vmul.f32 %v4733, %v4735
  %v4737 = vadd.f32 %v4733, %v4736
  %vm4738 = vweird.f32 %v4151
  %vm4739 = vweird.f32 %v4733
  %vm4740 = vmor %vm4738, %vm4739
  %v4741 = vsel %vm4740, %v4733, %v4737
  %v4742 = vand.u32 2147483647, %v4151
  %vm4743 = vcmp.eq.f32.partialorder %v4742, 8.507059e+37
  %v4744 = vand.u32 %v4151, 2147483648
  %v4745 = vor.u32 1.1754944e-38, %v4744
  %v4746 = vsel %vm4743, %v4745, %v4741
  %v4747 = vmul.f32 1.0, %v4746
  %v4748 = vrcp.pop %v4152
  %v4749 = vmul.f32 %v4152, %v4748
  %v4750 = vsub.f32 1.0, %v4749
  %v4751 = vmul.f32 %v4748, %v4750
  %v4752 = vadd.f32 %v4748, %v4751
  %vm4753 = vweird.f32 %v4152
  %vm4754 = vweird.f32 %v4748
  %vm4755 = vmor %vm4753, %vm4754
  %v4756 = vsel %vm4755, %v4748, %v4752
  %v4757 = vand.u32 2147483647, %v4152
  %vm4758 = vcmp.eq.f32.partialorder %v4757, 8.507059e+37
  %v4759 = vand.u32 %v4152, 2147483648
  %v4760 = vor.u32 1.1754944e-38, %v4759
  %v4761 = vsel %vm4758, %v4760, %v4756
  %v4762 = vmul.f32 1.0, %v4761
  %v4763 = vrcp.pop %v4153
  %v4764 = vmul.f32 %v4153, %v4763
  %v4765 = vsub.f32 1.0, %v4764
  %v4766 = vmul.f32 %v4763, %v4765
  %v4767 = vadd.f32 %v4763, %v4766
  %vm4768 = vweird.f32 %v4153
  %vm4769 = vweird.f32 %v4763
  %vm4770 = vmor %vm4768, %vm4769
  %v4771 = vsel %vm4770, %v4763, %v4767
  %v4772 = vand.u32 2147483647, %v4153
  %vm4773 = vcmp.eq.f32.partialorder %v4772, 8.507059e+37
  %v4774 = vand.u32 %v4153, 2147483648
  %v4775 = vor.u32 1.1754944e-38, %v4774
  %v4776 = vsel %vm4773, %v4775, %v4771
  %v4777 = vmul.f32 1.0, %v4776
  %v4778 = vrcp.pop %v4154
  %v4779 = vmul.f32 %v4154, %v4778
  %v4780 = vsub.f32 1.0, %v4779
  %v4781 = vmul.f32 %v4778, %v4780
  %v4782 = vadd.f32 %v4778, %v4781
  %vm4783 = vweird.f32 %v4154
  %vm4784 = vweird.f32 %v4778
  %vm4785 = vmor %vm4783, %vm4784
  %v4786 = vsel %vm4785, %v4778, %v4782
  %v4787 = vand.u32 2147483647, %v4154
  %vm4788 = vcmp.eq.f32.partialorder %v4787, 8.507059e+37
  %v4789 = vand.u32 %v4154, 2147483648
  %v4790 = vor.u32 1.1754944e-38, %v4789
  %v4791 = vsel %vm4788, %v4790, %v4786
  %v4792 = vmul.f32 1.0, %v4791
  %v4793 = vrcp.pop %v4155
  %v4794 = vmul.f32 %v4155, %v4793
  %v4795 = vsub.f32 1.0, %v4794
  %v4796 = vmul.f32 %v4793, %v4795
  %v4797 = vadd.f32 %v4793, %v4796
  %vm4798 = vweird.f32 %v4155
  %vm4799 = vweird.f32 %v4793
  %vm4800 = vmor %vm4798, %vm4799
  %v4801 = vsel %vm4800, %v4793, %v4797
  %v4802 = vand.u32 2147483647, %v4155
  %vm4803 = vcmp.eq.f32.partialorder %v4802, 8.507059e+37
  %v4804 = vand.u32 %v4155, 2147483648
  %v4805 = vor.u32 1.1754944e-38, %v4804
  %v4806 = vsel %vm4803, %v4805, %v4801
  %v4807 = vmul.f32 1.0, %v4806
  %v4808 = vrcp.pop %v4156
  %v4809 = vmul.f32 %v4156, %v4808
  %v4810 = vsub.f32 1.0, %v4809
  %v4811 = vmul.f32 %v4808, %v4810
  %v4812 = vadd.f32 %v4808, %v4811
  %vm4813 = vweird.f32 %v4156
  %vm4814 = vweird.f32 %v4808
  %vm4815 = vmor %vm4813, %vm4814
  %v4816 = vsel %vm4815, %v4808, %v4812
  %v4817 = vand.u32 2147483647, %v4156
  %vm4818 = vcmp.eq.f32.partialorder %v4817, 8.507059e+37
  %v4819 = vand.u32 %v4156, 2147483648
  %v4820 = vor.u32 1.1754944e-38, %v4819
  %v4821 = vsel %vm4818, %v4820, %v4816
  %v4822 = vmul.f32 1.0, %v4821
  %v4823 = vrcp.pop %v4157
  %v4824 = vmul.f32 %v4157, %v4823
  %v4825 = vsub.f32 1.0, %v4824
  %v4826 = vmul.f32 %v4823, %v4825
  %v4827 = vadd.f32 %v4823, %v4826
  %vm4828 = vweird.f32 %v4157
  %vm4829 = vweird.f32 %v4823
  %vm4830 = vmor %vm4828, %vm4829
  %v4831 = vsel %vm4830, %v4823, %v4827
  %v4832 = vand.u32 2147483647, %v4157
  %vm4833 = vcmp.eq.f32.partialorder %v4832, 8.507059e+37
  %v4834 = vand.u32 %v4157, 2147483648
  %v4835 = vor.u32 1.1754944e-38, %v4834
  %v4836 = vsel %vm4833, %v4835, %v4831
  %v4837 = vmul.f32 1.0, %v4836
  %v4838 = vrcp.pop %v4158
  %v4839 = vmul.f32 %v4158, %v4838
  %v4840 = vsub.f32 1.0, %v4839
  %v4841 = vmul.f32 %v4838, %v4840
  %v4842 = vadd.f32 %v4838, %v4841
  %vm4843 = vweird.f32 %v4158
  %vm4844 = vweird.f32 %v4838
  %vm4845 = vmor %vm4843, %vm4844
  %v4846 = vsel %vm4845, %v4838, %v4842
  %v4847 = vand.u32 2147483647, %v4158
  %vm4848 = vcmp.eq.f32.partialorder %v4847, 8.507059e+37
  %v4849 = vand.u32 %v4158, 2147483648
  %v4850 = vor.u32 1.1754944e-38, %v4849
  %v4851 = vsel %vm4848, %v4850, %v4846
  %v4852 = vmul.f32 1.0, %v4851
  %v4853 = vrcp.pop %v4159
  %v4854 = vmul.f32 %v4159, %v4853
  %v4855 = vsub.f32 1.0, %v4854
  %v4856 = vmul.f32 %v4853, %v4855
  %v4857 = vadd.f32 %v4853, %v4856
  %vm4858 = vweird.f32 %v4159
  %vm4859 = vweird.f32 %v4853
  %vm4860 = vmor %vm4858, %vm4859
  %v4861 = vsel %vm4860, %v4853, %v4857
  %v4862 = vand.u32 2147483647, %v4159
  %vm4863 = vcmp.eq.f32.partialorder %v4862, 8.507059e+37
  %v4864 = vand.u32 %v4159, 2147483648
  %v4865 = vor.u32 1.1754944e-38, %v4864
  %v4866 = vsel %vm4863, %v4865, %v4861
  %v4867 = vmul.f32 1.0, %v4866
  %v4868 = vrcp.pop %v4160
  %v4869 = vmul.f32 %v4160, %v4868
  %v4870 = vsub.f32 1.0, %v4869
  %v4871 = vmul.f32 %v4868, %v4870
  %v4872 = vadd.f32 %v4868, %v4871
  %vm4873 = vweird.f32 %v4160
  %vm4874 = vweird.f32 %v4868
  %vm4875 = vmor %vm4873, %vm4874
  %v4876 = vsel %vm4875, %v4868, %v4872
  %v4877 = vand.u32 2147483647, %v4160
  %vm4878 = vcmp.eq.f32.partialorder %v4877, 8.507059e+37
  %v4879 = vand.u32 %v4160, 2147483648
  %v4880 = vor.u32 1.1754944e-38, %v4879
  %v4881 = vsel %vm4878, %v4880, %v4876
  %v4882 = vmul.f32 1.0, %v4881
  %v4883 = vrcp.pop %v4161
  %v4884 = vmul.f32 %v4161, %v4883
  %v4885 = vsub.f32 1.0, %v4884
  %v4886 = vmul.f32 %v4883, %v4885
  %v4887 = vadd.f32 %v4883, %v4886
  %vm4888 = vweird.f32 %v4161
  %vm4889 = vweird.f32 %v4883
  %vm4890 = vmor %vm4888, %vm4889
  %v4891 = vsel %vm4890, %v4883, %v4887
  %v4892 = vand.u32 2147483647, %v4161
  %vm4893 = vcmp.eq.f32.partialorder %v4892, 8.507059e+37
  %v4894 = vand.u32 %v4161, 2147483648
  %v4895 = vor.u32 1.1754944e-38, %v4894
  %v4896 = vsel %vm4893, %v4895, %v4891
  %v4897 = vmul.f32 1.0, %v4896
  %v4898 = vrcp.pop %v4162
  %v4899 = vmul.f32 %v4162, %v4898
  %v4900 = vsub.f32 1.0, %v4899
  %v4901 = vmul.f32 %v4898, %v4900
  %v4902 = vadd.f32 %v4898, %v4901
  %vm4903 = vweird.f32 %v4162
  %vm4904 = vweird.f32 %v4898
  %vm4905 = vmor %vm4903, %vm4904
  %v4906 = vsel %vm4905, %v4898, %v4902
  %v4907 = vand.u32 2147483647, %v4162
  %vm4908 = vcmp.eq.f32.partialorder %v4907, 8.507059e+37
  %v4909 = vand.u32 %v4162, 2147483648
  %v4910 = vor.u32 1.1754944e-38, %v4909
  %v4911 = vsel %vm4908, %v4910, %v4906
  %v4912 = vmul.f32 1.0, %v4911
  %v4913 = vrcp.pop %v4163
  %v4914 = vmul.f32 %v4163, %v4913
  %v4915 = vsub.f32 1.0, %v4914
  %v4916 = vmul.f32 %v4913, %v4915
  %v4917 = vadd.f32 %v4913, %v4916
  %vm4918 = vweird.f32 %v4163
  %vm4919 = vweird.f32 %v4913
  %vm4920 = vmor %vm4918, %vm4919
  %v4921 = vsel %vm4920, %v4913, %v4917
  %v4922 = vand.u32 2147483647, %v4163
  %vm4923 = vcmp.eq.f32.partialorder %v4922, 8.507059e+37
  %v4924 = vand.u32 %v4163, 2147483648
  %v4925 = vor.u32 1.1754944e-38, %v4924
  %v4926 = vsel %vm4923, %v4925, %v4921
  %v4927 = vmul.f32 1.0, %v4926
  %v4928 = vrcp.pop %v4164
  %v4929 = vmul.f32 %v4164, %v4928
  %v4930 = vsub.f32 1.0, %v4929
  %v4931 = vmul.f32 %v4928, %v4930
  %v4932 = vadd.f32 %v4928, %v4931
  %vm4933 = vweird.f32 %v4164
  %vm4934 = vweird.f32 %v4928
  %vm4935 = vmor %vm4933, %vm4934
  %v4936 = vsel %vm4935, %v4928, %v4932
  %v4937 = vand.u32 2147483647, %v4164
  %vm4938 = vcmp.eq.f32.partialorder %v4937, 8.507059e+37
  %v4939 = vand.u32 %v4164, 2147483648
  %v4940 = vor.u32 1.1754944e-38, %v4939
  %v4941 = vsel %vm4938, %v4940, %v4936
  %v4942 = vmul.f32 1.0, %v4941
  %v4943 = vrcp.pop %v4165
  %v4944 = vmul.f32 %v4165, %v4943
  %v4945 = vsub.f32 1.0, %v4944
  %v4946 = vmul.f32 %v4943, %v4945
  %v4947 = vadd.f32 %v4943, %v4946
  %vm4948 = vweird.f32 %v4165
  %vm4949 = vweird.f32 %v4943
  %vm4950 = vmor %vm4948, %vm4949
  %v4951 = vsel %vm4950, %v4943, %v4947
  %v4952 = vand.u32 2147483647, %v4165
  %vm4953 = vcmp.eq.f32.partialorder %v4952, 8.507059e+37
  %v4954 = vand.u32 %v4165, 2147483648
  %v4955 = vor.u32 1.1754944e-38, %v4954
  %v4956 = vsel %vm4953, %v4955, %v4951
  %v4957 = vmul.f32 1.0, %v4956
  %v4958 = vrcp.pop %v4166
  %v4959 = vmul.f32 %v4166, %v4958
  %v4960 = vsub.f32 1.0, %v4959
  %v4961 = vmul.f32 %v4958, %v4960
  %v4962 = vadd.f32 %v4958, %v4961
  %vm4963 = vweird.f32 %v4166
  %vm4964 = vweird.f32 %v4958
  %vm4965 = vmor %vm4963, %vm4964
  %v4966 = vsel %vm4965, %v4958, %v4962
  %v4967 = vand.u32 2147483647, %v4166
  %vm4968 = vcmp.eq.f32.partialorder %v4967, 8.507059e+37
  %v4969 = vand.u32 %v4166, 2147483648
  %v4970 = vor.u32 1.1754944e-38, %v4969
  %v4971 = vsel %vm4968, %v4970, %v4966
  %v4972 = vmul.f32 1.0, %v4971
  %v4973 = vrcp.pop %v4167
  %v4974 = vmul.f32 %v4167, %v4973
  %v4975 = vsub.f32 1.0, %v4974
  %v4976 = vmul.f32 %v4973, %v4975
  %v4977 = vadd.f32 %v4973, %v4976
  %vm4978 = vweird.f32 %v4167
  %vm4979 = vweird.f32 %v4973
  %vm4980 = vmor %vm4978, %vm4979
  %v4981 = vsel %vm4980, %v4973, %v4977
  %v4982 = vand.u32 2147483647, %v4167
  %vm4983 = vcmp.eq.f32.partialorder %v4982, 8.507059e+37
  %v4984 = vand.u32 %v4167, 2147483648
  %v4985 = vor.u32 1.1754944e-38, %v4984
  %v4986 = vsel %vm4983, %v4985, %v4981
  %v4987 = vmul.f32 1.0, %v4986
  %v4988 = vrcp.pop %v4168
  %v4989 = vmul.f32 %v4168, %v4988
  %v4990 = vsub.f32 1.0, %v4989
  %v4991 = vmul.f32 %v4988, %v4990
  %v4992 = vadd.f32 %v4988, %v4991
  %vm4993 = vweird.f32 %v4168
  %vm4994 = vweird.f32 %v4988
  %vm4995 = vmor %vm4993, %vm4994
  %v4996 = vsel %vm4995, %v4988, %v4992
  %v4997 = vand.u32 2147483647, %v4168
  %vm4998 = vcmp.eq.f32.partialorder %v4997, 8.507059e+37
  %v4999 = vand.u32 %v4168, 2147483648
  %v5000 = vor.u32 1.1754944e-38, %v4999
  %v5001 = vsel %vm4998, %v5000, %v4996
  %v5002 = vmul.f32 1.0, %v5001
  %v5003 = vrcp.pop %v4169
  %v5004 = vmul.f32 %v4169, %v5003
  %v5005 = vsub.f32 1.0, %v5004
  %v5006 = vmul.f32 %v5003, %v5005
  %v5007 = vadd.f32 %v5003, %v5006
  %vm5008 = vweird.f32 %v4169
  %vm5009 = vweird.f32 %v5003
  %vm5010 = vmor %vm5008, %vm5009
  %v5011 = vsel %vm5010, %v5003, %v5007
  %v5012 = vand.u32 2147483647, %v4169
  %vm5013 = vcmp.eq.f32.partialorder %v5012, 8.507059e+37
  %v5014 = vand.u32 %v4169, 2147483648
  %v5015 = vor.u32 1.1754944e-38, %v5014
  %v5016 = vsel %vm5013, %v5015, %v5011
  %v5017 = vmul.f32 1.0, %v5016
  %v5018 = vrcp.pop %v4170
  %v5019 = vmul.f32 %v4170, %v5018
  %v5020 = vsub.f32 1.0, %v5019
  %v5021 = vmul.f32 %v5018, %v5020
  %v5022 = vadd.f32 %v5018, %v5021
  %vm5023 = vweird.f32 %v4170
  %vm5024 = vweird.f32 %v5018
  %vm5025 = vmor %vm5023, %vm5024
  %v5026 = vsel %vm5025, %v5018, %v5022
  %v5027 = vand.u32 2147483647, %v4170
  %vm5028 = vcmp.eq.f32.partialorder %v5027, 8.507059e+37
  %v5029 = vand.u32 %v4170, 2147483648
  %v5030 = vor.u32 1.1754944e-38, %v5029
  %v5031 = vsel %vm5028, %v5030, %v5026
  %v5032 = vmul.f32 1.0, %v5031
  %v5033 = vrcp.pop %v4171
  %v5034 = vmul.f32 %v4171, %v5033
  %v5035 = vsub.f32 1.0, %v5034
  %v5036 = vmul.f32 %v5033, %v5035
  %v5037 = vadd.f32 %v5033, %v5036
  %vm5038 = vweird.f32 %v4171
  %vm5039 = vweird.f32 %v5033
  %vm5040 = vmor %vm5038, %vm5039
  %v5041 = vsel %vm5040, %v5033, %v5037
  %v5042 = vand.u32 2147483647, %v4171
  %vm5043 = vcmp.eq.f32.partialorder %v5042, 8.507059e+37
  %v5044 = vand.u32 %v4171, 2147483648
  %v5045 = vor.u32 1.1754944e-38, %v5044
  %v5046 = vsel %vm5043, %v5045, %v5041
  %v5047 = vmul.f32 1.0, %v5046
  %v5048 = vrcp.pop %v4172
  %v5049 = vmul.f32 %v4172, %v5048
  %v5050 = vsub.f32 1.0, %v5049
  %v5051 = vmul.f32 %v5048, %v5050
  %v5052 = vadd.f32 %v5048, %v5051
  %vm5053 = vweird.f32 %v4172
  %vm5054 = vweird.f32 %v5048
  %vm5055 = vmor %vm5053, %vm5054
  %v5056 = vsel %vm5055, %v5048, %v5052
  %v5057 = vand.u32 2147483647, %v4172
  %vm5058 = vcmp.eq.f32.partialorder %v5057, 8.507059e+37
  %v5059 = vand.u32 %v4172, 2147483648
  %v5060 = vor.u32 1.1754944e-38, %v5059
  %v5061 = vsel %vm5058, %v5060, %v5056
  %v5062 = vmul.f32 1.0, %v5061
  %v5063 = vrcp.pop %v4173
  %v5064 = vmul.f32 %v4173, %v5063
  %v5065 = vsub.f32 1.0, %v5064
  %v5066 = vmul.f32 %v5063, %v5065
  %v5067 = vadd.f32 %v5063, %v5066
  %vm5068 = vweird.f32 %v4173
  %vm5069 = vweird.f32 %v5063
  %vm5070 = vmor %vm5068, %vm5069
  %v5071 = vsel %vm5070, %v5063, %v5067
  %v5072 = vand.u32 2147483647, %v4173
  %vm5073 = vcmp.eq.f32.partialorder %v5072, 8.507059e+37
  %v5074 = vand.u32 %v4173, 2147483648
  %v5075 = vor.u32 1.1754944e-38, %v5074
  %v5076 = vsel %vm5073, %v5075, %v5071
  %v5077 = vmul.f32 1.0, %v5076
  %v5078 = vrcp.pop %v4174
  %v5079 = vmul.f32 %v4174, %v5078
  %v5080 = vsub.f32 1.0, %v5079
  %v5081 = vmul.f32 %v5078, %v5080
  %v5082 = vadd.f32 %v5078, %v5081
  %vm5083 = vweird.f32 %v4174
  %vm5084 = vweird.f32 %v5078
  %vm5085 = vmor %vm5083, %vm5084
  %v5086 = vsel %vm5085, %v5078, %v5082
  %v5087 = vand.u32 2147483647, %v4174
  %vm5088 = vcmp.eq.f32.partialorder %v5087, 8.507059e+37
  %v5089 = vand.u32 %v4174, 2147483648
  %v5090 = vor.u32 1.1754944e-38, %v5089
  %v5091 = vsel %vm5088, %v5090, %v5086
  %v5092 = vmul.f32 1.0, %v5091
  %v5093 = vrcp.pop %v4175
  %v5094 = vmul.f32 %v4175, %v5093
  %v5095 = vsub.f32 1.0, %v5094
  %v5096 = vmul.f32 %v5093, %v5095
  %v5097 = vadd.f32 %v5093, %v5096
  %vm5098 = vweird.f32 %v4175
  %vm5099 = vweird.f32 %v5093
  %vm5100 = vmor %vm5098, %vm5099
  %v5101 = vsel %vm5100, %v5093, %v5097
  %v5102 = vand.u32 2147483647, %v4175
  %vm5103 = vcmp.eq.f32.partialorder %v5102, 8.507059e+37
  %v5104 = vand.u32 %v4175, 2147483648
  %v5105 = vor.u32 1.1754944e-38, %v5104
  %v5106 = vsel %vm5103, %v5105, %v5101
  %v5107 = vmul.f32 1.0, %v5106
  %v5108 = vrcp.pop %v4176
  %v5109 = vmul.f32 %v4176, %v5108
  %v5110 = vsub.f32 1.0, %v5109
  %v5111 = vmul.f32 %v5108, %v5110
  %v5112 = vadd.f32 %v5108, %v5111
  %vm5113 = vweird.f32 %v4176
  %vm5114 = vweird.f32 %v5108
  %vm5115 = vmor %vm5113, %vm5114
  %v5116 = vsel %vm5115, %v5108, %v5112
  %v5117 = vand.u32 2147483647, %v4176
  %vm5118 = vcmp.eq.f32.partialorder %v5117, 8.507059e+37
  %v5119 = vand.u32 %v4176, 2147483648
  %v5120 = vor.u32 1.1754944e-38, %v5119
  %v5121 = vsel %vm5118, %v5120, %v5116
  %v5122 = vmul.f32 1.0, %v5121
  %v5123 = vrcp.pop %v4177
  %v5124 = vmul.f32 %v4177, %v5123
  %v5125 = vsub.f32 1.0, %v5124
  %v5126 = vmul.f32 %v5123, %v5125
  %v5127 = vadd.f32 %v5123, %v5126
  %vm5128 = vweird.f32 %v4177
  %vm5129 = vweird.f32 %v5123
  %vm5130 = vmor %vm5128, %vm5129
  %v5131 = vsel %vm5130, %v5123, %v5127
  %v5132 = vand.u32 2147483647, %v4177
  %vm5133 = vcmp.eq.f32.partialorder %v5132, 8.507059e+37
  %v5134 = vand.u32 %v4177, 2147483648
  %v5135 = vor.u32 1.1754944e-38, %v5134
  %v5136 = vsel %vm5133, %v5135, %v5131
  %v5137 = vmul.f32 1.0, %v5136
  %v5138 = vsub.f32 %v1824, %v4192
  %v5139 = vsub.f32 %v1839, %v4207
  %v5140 = vsub.f32 %v1854, %v4222
  %v5141 = vsub.f32 %v1869, %v4237
  %v5142 = vsub.f32 %v1884, %v4252
  %v5143 = vsub.f32 %v1899, %v4267
  %v5144 = vsub.f32 %v1914, %v4282
  %v5145 = vsub.f32 %v1929, %v4297
  %v5146 = vsub.f32 %v1944, %v4312
  %v5147 = vsub.f32 %v1959, %v4327
  %v5148 = vsub.f32 %v1974, %v4342
  %v5149 = vsub.f32 %v1989, %v4357
  %v5150 = vsub.f32 %v2004, %v4372
  %v5151 = vsub.f32 %v2019, %v4387
  %v5152 = vsub.f32 %v2034, %v4402
  %v5153 = vsub.f32 %v2049, %v4417
  %v5154 = vsub.f32 %v2064, %v4432
  %v5155 = vsub.f32 %v2079, %v4447
  %v5156 = vsub.f32 %v2094, %v4462
  %v5157 = vsub.f32 %v2109, %v4477
  %v5158 = vsub.f32 %v2124, %v4492
  %v5159 = vsub.f32 %v2139, %v4507
  %v5160 = vsub.f32 %v2154, %v4522
  %v5161 = vsub.f32 %v2169, %v4537
  %v5162 = vsub.f32 %v2184, %v4552
  %v5163 = vsub.f32 %v2199, %v4567
  %v5164 = vsub.f32 %v2214, %v4582
  %v5165 = vsub.f32 %v2229, %v4597
  %v5166 = vsub.f32 %v2244, %v4612
  %v5167 = vsub.f32 %v2259, %v4627
  %v5168 = vsub.f32 %v2274, %v4642
  %v5169 = vsub.f32 %v2289, %v4657
  %v5170 = vsub.f32 %v2304, %v4672
  %v5171 = vsub.f32 %v2319, %v4687
  %v5172 = vsub.f32 %v2334, %v4702
  %v5173 = vsub.f32 %v2349, %v4717
  %v5174 = vsub.f32 %v2364, %v4732
  %v5175 = vsub.f32 %v2379, %v4747
  %v5176 = vsub.f32 %v2394, %v4762
  %v5177 = vsub.f32 %v2409, %v4777
  %v5178 = vsub.f32 %v2424, %v4792
  %v5179 = vsub.f32 %v2439, %v4807
  %v5180 = vsub.f32 %v2454, %v4822
  %v5181 = vsub.f32 %v2469, %v4837
  %v5182 = vsub.f32 %v2484, %v4852
  %v5183 = vsub.f32 %v2499, %v4867
  %v5184 = vsub.f32 %v2514, %v4882
  %v5185 = vsub.f32 %v2529, %v4897
  %v5186 = vsub.f32 %v2544, %v4912
  %v5187 = vsub.f32 %v2559, %v4927
  %v5188 = vsub.f32 %v2574, %v4942
  %v5189 = vsub.f32 %v2589, %v4957
  %v5190 = vsub.f32 %v2604, %v4972
  %v5191 = vsub.f32 %v2619, %v4987
  %v5192 = vsub.f32 %v2634, %v5002
  %v5193 = vsub.f32 %v2649, %v5017
  %v5194 = vsub.f32 %v2664, %v5032
  %v5195 = vsub.f32 %v2679, %v5047
  %v5196 = vsub.f32 %v2694, %v5062
  %v5197 = vsub.f32 %v2709, %v5077
  %v5198 = vsub.f32 %v2724, %v5092
  %v5199 = vsub.f32 %v2739, %v5107
  %v5200 = vsub.f32 %v2754, %v5122
  %v5201 = vsub.f32 %v2769, %v5137
  %v5202 = vadd.f32 %v5138, 1e-10
  %v5203 = vadd.f32 %v5139, 1e-10
  %v5204 = vadd.f32 %v5140, 1e-10
  %v5205 = vadd.f32 %v5141, 1e-10
  %v5206 = vadd.f32 %v5142, 1e-10
  %v5207 = vadd.f32 %v5143, 1e-10
  %v5208 = vadd.f32 %v5144, 1e-10
  %v5209 = vadd.f32 %v5145, 1e-10
  %v5210 = vadd.f32 %v5146, 1e-10
  %v5211 = vadd.f32 %v5147, 1e-10
  %v5212 = vadd.f32 %v5148, 1e-10
  %v5213 = vadd.f32 %v5149, 1e-10
  %v5214 = vadd.f32 %v5150, 1e-10
  %v5215 = vadd.f32 %v5151, 1e-10
  %v5216 = vadd.f32 %v5152, 1e-10
  %v5217 = vadd.f32 %v5153, 1e-10
  %v5218 = vadd.f32 %v5154, 1e-10
  %v5219 = vadd.f32 %v5155, 1e-10
  %v5220 = vadd.f32 %v5156, 1e-10
  %v5221 = vadd.f32 %v5157, 1e-10
  %v5222 = vadd.f32 %v5158, 1e-10
  %v5223 = vadd.f32 %v5159, 1e-10
  %v5224 = vadd.f32 %v5160, 1e-10
  %v5225 = vadd.f32 %v5161, 1e-10
  %v5226 = vadd.f32 %v5162, 1e-10
  %v5227 = vadd.f32 %v5163, 1e-10
  %v5228 = vadd.f32 %v5164, 1e-10
  %v5229 = vadd.f32 %v5165, 1e-10
  %v5230 = vadd.f32 %v5166, 1e-10
  %v5231 = vadd.f32 %v5167, 1e-10
  %v5232 = vadd.f32 %v5168, 1e-10
  %v5233 = vadd.f32 %v5169, 1e-10
  %v5234 = vadd.f32 %v5170, 1e-10
  %v5235 = vadd.f32 %v5171, 1e-10
  %v5236 = vadd.f32 %v5172, 1e-10
  %v5237 = vadd.f32 %v5173, 1e-10
  %v5238 = vadd.f32 %v5174, 1e-10
  %v5239 = vadd.f32 %v5175, 1e-10
  %v5240 = vadd.f32 %v5176, 1e-10
  %v5241 = vadd.f32 %v5177, 1e-10
  %v5242 = vadd.f32 %v5178, 1e-10
  %v5243 = vadd.f32 %v5179, 1e-10
  %v5244 = vadd.f32 %v5180, 1e-10
  %v5245 = vadd.f32 %v5181, 1e-10
  %v5246 = vadd.f32 %v5182, 1e-10
  %v5247 = vadd.f32 %v5183, 1e-10
  %v5248 = vadd.f32 %v5184, 1e-10
  %v5249 = vadd.f32 %v5185, 1e-10
  %v5250 = vadd.f32 %v5186, 1e-10
  %v5251 = vadd.f32 %v5187, 1e-10
  %v5252 = vadd.f32 %v5188, 1e-10
  %v5253 = vadd.f32 %v5189, 1e-10
  %v5254 = vadd.f32 %v5190, 1e-10
  %v5255 = vadd.f32 %v5191, 1e-10
  %v5256 = vadd.f32 %v5192, 1e-10
  %v5257 = vadd.f32 %v5193, 1e-10
  %v5258 = vadd.f32 %v5194, 1e-10
  %v5259 = vadd.f32 %v5195, 1e-10
  %v5260 = vadd.f32 %v5196, 1e-10
  %v5261 = vadd.f32 %v5197, 1e-10
  %v5262 = vadd.f32 %v5198, 1e-10
  %v5263 = vadd.f32 %v5199, 1e-10
  %v5264 = vadd.f32 %v5200, 1e-10
  %v5265 = vadd.f32 %v5201, 1e-10
  %v5266 = vlog2.pop %v5202
  %v5267 = vmul.f32 %v5266, 0.6931472
  %v5268 = vlog2.pop %v5203
  %v5269 = vmul.f32 %v5268, 0.6931472
  %v5270 = vlog2.pop %v5204
  %v5271 = vmul.f32 %v5270, 0.6931472
  %v5272 = vlog2.pop %v5205
  %v5273 = vmul.f32 %v5272, 0.6931472
  %v5274 = vlog2.pop %v5206
  %v5275 = vmul.f32 %v5274, 0.6931472
  %v5276 = vlog2.pop %v5207
  %v5277 = vmul.f32 %v5276, 0.6931472
  %v5278 = vlog2.pop %v5208
  %v5279 = vmul.f32 %v5278, 0.6931472
  %v5280 = vlog2.pop %v5209
  %v5281 = vmul.f32 %v5280, 0.6931472
  %v5282 = vlog2.pop %v5210
  %v5283 = vmul.f32 %v5282, 0.6931472
  %v5284 = vlog2.pop %v5211
  %v5285 = vmul.f32 %v5284, 0.6931472
  %v5286 = vlog2.pop %v5212
  %v5287 = vmul.f32 %v5286, 0.6931472
  %v5288 = vlog2.pop %v5213
  %v5289 = vmul.f32 %v5288, 0.6931472
  %v5290 = vlog2.pop %v5214
  %v5291 = vmul.f32 %v5290, 0.6931472
  %v5292 = vlog2.pop %v5215
  %v5293 = vmul.f32 %v5292, 0.6931472
  %v5294 = vlog2.pop %v5216
  %v5295 = vmul.f32 %v5294, 0.6931472
  %v5296 = vlog2.pop %v5217
  %v5297 = vmul.f32 %v5296, 0.6931472
  %v5298 = vlog2.pop %v5218
  %v5299 = vmul.f32 %v5298, 0.6931472
  %v5300 = vlog2.pop %v5219
  %v5301 = vmul.f32 %v5300, 0.6931472
  %v5302 = vlog2.pop %v5220
  %v5303 = vmul.f32 %v5302, 0.6931472
  %v5304 = vlog2.pop %v5221
  %v5305 = vmul.f32 %v5304, 0.6931472
  %v5306 = vlog2.pop %v5222
  %v5307 = vmul.f32 %v5306, 0.6931472
  %v5308 = vlog2.pop %v5223
  %v5309 = vmul.f32 %v5308, 0.6931472
  %v5310 = vlog2.pop %v5224
  %v5311 = vmul.f32 %v5310, 0.6931472
  %v5312 = vlog2.pop %v5225
  %v5313 = vmul.f32 %v5312, 0.6931472
  %v5314 = vlog2.pop %v5226
  %v5315 = vmul.f32 %v5314, 0.6931472
  %v5316 = vlog2.pop %v5227
  %v5317 = vmul.f32 %v5316, 0.6931472
  %v5318 = vlog2.pop %v5228
  %v5319 = vmul.f32 %v5318, 0.6931472
  %v5320 = vlog2.pop %v5229
  %v5321 = vmul.f32 %v5320, 0.6931472
  %v5322 = vlog2.pop %v5230
  %v5323 = vmul.f32 %v5322, 0.6931472
  %v5324 = vlog2.pop %v5231
  %v5325 = vmul.f32 %v5324, 0.6931472
  %v5326 = vlog2.pop %v5232
  %v5327 = vmul.f32 %v5326, 0.6931472
  %v5328 = vlog2.pop %v5233
  %v5329 = vmul.f32 %v5328, 0.6931472
  %v5330 = vlog2.pop %v5234
  %v5331 = vmul.f32 %v5330, 0.6931472
  %v5332 = vlog2.pop %v5235
  %v5333 = vmul.f32 %v5332, 0.6931472
  %v5334 = vlog2.pop %v5236
  %v5335 = vmul.f32 %v5334, 0.6931472
  %v5336 = vlog2.pop %v5237
  %v5337 = vmul.f32 %v5336, 0.6931472
  %v5338 = vlog2.pop %v5238
  %v5339 = vmul.f32 %v5338, 0.6931472
  %v5340 = vlog2.pop %v5239
  %v5341 = vmul.f32 %v5340, 0.6931472
  %v5342 = vlog2.pop %v5240
  %v5343 = vmul.f32 %v5342, 0.6931472
  %v5344 = vlog2.pop %v5241
  %v5345 = vmul.f32 %v5344, 0.6931472
  %v5346 = vlog2.pop %v5242
  %v5347 = vmul.f32 %v5346, 0.6931472
  %v5348 = vlog2.pop %v5243
  %v5349 = vmul.f32 %v5348, 0.6931472
  %v5350 = vlog2.pop %v5244
  %v5351 = vmul.f32 %v5350, 0.6931472
  %v5352 = vlog2.pop %v5245
  %v5353 = vmul.f32 %v5352, 0.6931472
  %v5354 = vlog2.pop %v5246
  %v5355 = vmul.f32 %v5354, 0.6931472
  %v5356 = vlog2.pop %v5247
  %v5357 = vmul.f32 %v5356, 0.6931472
  %v5358 = vlog2.pop %v5248
  %v5359 = vmul.f32 %v5358, 0.6931472
  %v5360 = vlog2.pop %v5249
  %v5361 = vmul.f32 %v5360, 0.6931472
  %v5362 = vlog2.pop %v5250
  %v5363 = vmul.f32 %v5362, 0.6931472
  %v5364 = vlog2.pop %v5251
  %v5365 = vmul.f32 %v5364, 0.6931472
  %v5366 = vlog2.pop %v5252
  %v5367 = vmul.f32 %v5366, 0.6931472
  %v5368 = vlog2.pop %v5253
  %v5369 = vmul.f32 %v5368, 0.6931472
  %v5370 = vlog2.pop %v5254
  %v5371 = vmul.f32 %v5370, 0.6931472
  %v5372 = vlog2.pop %v5255
  %v5373 = vmul.f32 %v5372, 0.6931472
  %v5374 = vlog2.pop %v5256
  %v5375 = vmul.f32 %v5374, 0.6931472
  %v5376 = vlog2.pop %v5257
  %v5377 = vmul.f32 %v5376, 0.6931472
  %v5378 = vlog2.pop %v5258
  %v5379 = vmul.f32 %v5378, 0.6931472
  %v5380 = vlog2.pop %v5259
  %v5381 = vmul.f32 %v5380, 0.6931472
  %v5382 = vlog2.pop %v5260
  %v5383 = vmul.f32 %v5382, 0.6931472
  %v5384 = vlog2.pop %v5261
  %v5385 = vmul.f32 %v5384, 0.6931472
  %v5386 = vlog2.pop %v5262
  %v5387 = vmul.f32 %v5386, 0.6931472
  %v5388 = vlog2.pop %v5263
  %v5389 = vmul.f32 %v5388, 0.6931472
  %v5390 = vlog2.pop %v5264
  %v5391 = vmul.f32 %v5390, 0.6931472
  %v5392 = vlog2.pop %v5265
  %v5393 = vmul.f32 %v5392, 0.6931472
  %v5394 = vsub.f32 0.0, %v5267
  %v5395 = vsub.f32 0.0, %v5269
  %v5396 = vsub.f32 0.0, %v5271
  %v5397 = vsub.f32 0.0, %v5273
  %v5398 = vsub.f32 0.0, %v5275
  %v5399 = vsub.f32 0.0, %v5277
  %v5400 = vsub.f32 0.0, %v5279
  %v5401 = vsub.f32 0.0, %v5281
  %v5402 = vsub.f32 0.0, %v5283
  %v5403 = vsub.f32 0.0, %v5285
  %v5404 = vsub.f32 0.0, %v5287
  %v5405 = vsub.f32 0.0, %v5289
  %v5406 = vsub.f32 0.0, %v5291
  %v5407 = vsub.f32 0.0, %v5293
  %v5408 = vsub.f32 0.0, %v5295
  %v5409 = vsub.f32 0.0, %v5297
  %v5410 = vsub.f32 0.0, %v5299
  %v5411 = vsub.f32 0.0, %v5301
  %v5412 = vsub.f32 0.0, %v5303
  %v5413 = vsub.f32 0.0, %v5305
  %v5414 = vsub.f32 0.0, %v5307
  %v5415 = vsub.f32 0.0, %v5309
  %v5416 = vsub.f32 0.0, %v5311
  %v5417 = vsub.f32 0.0, %v5313
  %v5418 = vsub.f32 0.0, %v5315
  %v5419 = vsub.f32 0.0, %v5317
  %v5420 = vsub.f32 0.0, %v5319
  %v5421 = vsub.f32 0.0, %v5321
  %v5422 = vsub.f32 0.0, %v5323
  %v5423 = vsub.f32 0.0, %v5325
  %v5424 = vsub.f32 0.0, %v5327
  %v5425 = vsub.f32 0.0, %v5329
  %v5426 = vsub.f32 0.0, %v5331
  %v5427 = vsub.f32 0.0, %v5333
  %v5428 = vsub.f32 0.0, %v5335
  %v5429 = vsub.f32 0.0, %v5337
  %v5430 = vsub.f32 0.0, %v5339
  %v5431 = vsub.f32 0.0, %v5341
  %v5432 = vsub.f32 0.0, %v5343
  %v5433 = vsub.f32 0.0, %v5345
  %v5434 = vsub.f32 0.0, %v5347
  %v5435 = vsub.f32 0.0, %v5349
  %v5436 = vsub.f32 0.0, %v5351
  %v5437 = vsub.f32 0.0, %v5353
  %v5438 = vsub.f32 0.0, %v5355
  %v5439 = vsub.f32 0.0, %v5357
  %v5440 = vsub.f32 0.0, %v5359
  %v5441 = vsub.f32 0.0, %v5361
  %v5442 = vsub.f32 0.0, %v5363
  %v5443 = vsub.f32 0.0, %v5365
  %v5444 = vsub.f32 0.0, %v5367
  %v5445 = vsub.f32 0.0, %v5369
  %v5446 = vsub.f32 0.0, %v5371
  %v5447 = vsub.f32 0.0, %v5373
  %v5448 = vsub.f32 0.0, %v5375
  %v5449 = vsub.f32 0.0, %v5377
  %v5450 = vsub.f32 0.0, %v5379
  %v5451 = vsub.f32 0.0, %v5381
  %v5452 = vsub.f32 0.0, %v5383
  %v5453 = vsub.f32 0.0, %v5385
  %v5454 = vsub.f32 0.0, %v5387
  %v5455 = vsub.f32 0.0, %v5389
  %v5456 = vsub.f32 0.0, %v5391
  %v5457 = vsub.f32 0.0, %v5393
  %v5458 = vmul.f32 %v5394, 1.442695
  %v5459 = vmul.f32 %v5395, 1.442695
  %v5460 = vmul.f32 %v5396, 1.442695
  %v5461 = vmul.f32 %v5397, 1.442695
  %v5462 = vmul.f32 %v5398, 1.442695
  %v5463 = vmul.f32 %v5399, 1.442695
  %v5464 = vmul.f32 %v5400, 1.442695
  %v5465 = vmul.f32 %v5401, 1.442695
  %v5466 = vmul.f32 %v5402, 1.442695
  %v5467 = vmul.f32 %v5403, 1.442695
  %v5468 = vmul.f32 %v5404, 1.442695
  %v5469 = vmul.f32 %v5405, 1.442695
  %v5470 = vmul.f32 %v5406, 1.442695
  %v5471 = vmul.f32 %v5407, 1.442695
  %v5472 = vmul.f32 %v5408, 1.442695
  %v5473 = vmul.f32 %v5409, 1.442695
  %v5474 = vmul.f32 %v5410, 1.442695
  %v5475 = vmul.f32 %v5411, 1.442695
  %v5476 = vmul.f32 %v5412, 1.442695
  %v5477 = vmul.f32 %v5413, 1.442695
  %v5478 = vmul.f32 %v5414, 1.442695
  %v5479 = vmul.f32 %v5415, 1.442695
  %v5480 = vmul.f32 %v5416, 1.442695
  %v5481 = vmul.f32 %v5417, 1.442695
  %v5482 = vmul.f32 %v5418, 1.442695
  %v5483 = vmul.f32 %v5419, 1.442695
  %v5484 = vmul.f32 %v5420, 1.442695
  %v5485 = vmul.f32 %v5421, 1.442695
  %v5486 = vmul.f32 %v5422, 1.442695
  %v5487 = vmul.f32 %v5423, 1.442695
  %v5488 = vmul.f32 %v5424, 1.442695
  %v5489 = vmul.f32 %v5425, 1.442695
  %v5490 = vmul.f32 %v5426, 1.442695
  %v5491 = vmul.f32 %v5427, 1.442695
  %v5492 = vmul.f32 %v5428, 1.442695
  %v5493 = vmul.f32 %v5429, 1.442695
  %v5494 = vmul.f32 %v5430, 1.442695
  %v5495 = vmul.f32 %v5431, 1.442695
  %v5496 = vmul.f32 %v5432, 1.442695
  %v5497 = vmul.f32 %v5433, 1.442695
  %v5498 = vmul.f32 %v5434, 1.442695
  %v5499 = vmul.f32 %v5435, 1.442695
  %v5500 = vmul.f32 %v5436, 1.442695
  %v5501 = vmul.f32 %v5437, 1.442695
  %v5502 = vmul.f32 %v5438, 1.442695
  %v5503 = vmul.f32 %v5439, 1.442695
  %v5504 = vmul.f32 %v5440, 1.442695
  %v5505 = vmul.f32 %v5441, 1.442695
  %v5506 = vmul.f32 %v5442, 1.442695
  %v5507 = vmul.f32 %v5443, 1.442695
  %v5508 = vmul.f32 %v5444, 1.442695
  %v5509 = vmul.f32 %v5445, 1.442695
  %v5510 = vmul.f32 %v5446, 1.442695
  %v5511 = vmul.f32 %v5447, 1.442695
  %v5512 = vmul.f32 %v5448, 1.442695
  %v5513 = vmul.f32 %v5449, 1.442695
  %v5514 = vmul.f32 %v5450, 1.442695
  %v5515 = vmul.f32 %v5451, 1.442695
  %v5516 = vmul.f32 %v5452, 1.442695
  %v5517 = vmul.f32 %v5453, 1.442695
  %v5518 = vmul.f32 %v5454, 1.442695
  %v5519 = vmul.f32 %v5455, 1.442695
  %v5520 = vmul.f32 %v5456, 1.442695
  %v5521 = vmul.f32 %v5457, 1.442695
  %v5522 = vmax.f32 %v5458, 0.0
  %v5523 = vmax.f32 %v5459, 0.0
  %v5524 = vmax.f32 %v5460, 0.0
  %v5525 = vmax.f32 %v5461, 0.0
  %v5526 = vmax.f32 %v5462, 0.0
  %v5527 = vmax.f32 %v5463, 0.0
  %v5528 = vmax.f32 %v5464, 0.0
  %v5529 = vmax.f32 %v5465, 0.0
  %v5530 = vmax.f32 %v5466, 0.0
  %v5531 = vmax.f32 %v5467, 0.0
  %v5532 = vmax.f32 %v5468, 0.0
  %v5533 = vmax.f32 %v5469, 0.0
  %v5534 = vmax.f32 %v5470, 0.0
  %v5535 = vmax.f32 %v5471, 0.0
  %v5536 = vmax.f32 %v5472, 0.0
  %v5537 = vmax.f32 %v5473, 0.0
  %v5538 = vmax.f32 %v5474, 0.0
  %v5539 = vmax.f32 %v5475, 0.0
  %v5540 = vmax.f32 %v5476, 0.0
  %v5541 = vmax.f32 %v5477, 0.0
  %v5542 = vmax.f32 %v5478, 0.0
  %v5543 = vmax.f32 %v5479, 0.0
  %v5544 = vmax.f32 %v5480, 0.0
  %v5545 = vmax.f32 %v5481, 0.0
  %v5546 = vmax.f32 %v5482, 0.0
  %v5547 = vmax.f32 %v5483, 0.0
  %v5548 = vmax.f32 %v5484, 0.0
  %v5549 = vmax.f32 %v5485, 0.0
  %v5550 = vmax.f32 %v5486, 0.0
  %v5551 = vmax.f32 %v5487, 0.0
  %v5552 = vmax.f32 %v5488, 0.0
  %v5553 = vmax.f32 %v5489, 0.0
  %v5554 = vmax.f32 %v5490, 0.0
  %v5555 = vmax.f32 %v5491, 0.0
  %v5556 = vmax.f32 %v5492, 0.0
  %v5557 = vmax.f32 %v5493, 0.0
  %v5558 = vmax.f32 %v5494, 0.0
  %v5559 = vmax.f32 %v5495, 0.0
  %v5560 = vmax.f32 %v5496, 0.0
  %v5561 = vmax.f32 %v5497, 0.0
  %v5562 = vmax.f32 %v5498, 0.0
  %v5563 = vmax.f32 %v5499, 0.0
  %v5564 = vmax.f32 %v5500, 0.0
  %v5565 = vmax.f32 %v5501, 0.0
  %v5566 = vmax.f32 %v5502, 0.0
  %v5567 = vmax.f32 %v5503, 0.0
  %v5568 = vmax.f32 %v5504, 0.0
  %v5569 = vmax.f32 %v5505, 0.0
  %v5570 = vmax.f32 %v5506, 0.0
  %v5571 = vmax.f32 %v5507, 0.0
  %v5572 = vmax.f32 %v5508, 0.0
  %v5573 = vmax.f32 %v5509, 0.0
  %v5574 = vmax.f32 %v5510, 0.0
  %v5575 = vmax.f32 %v5511, 0.0
  %v5576 = vmax.f32 %v5512, 0.0
  %v5577 = vmax.f32 %v5513, 0.0
  %v5578 = vmax.f32 %v5514, 0.0
  %v5579 = vmax.f32 %v5515, 0.0
  %v5580 = vmax.f32 %v5516, 0.0
  %v5581 = vmax.f32 %v5517, 0.0
  %v5582 = vmax.f32 %v5518, 0.0
  %v5583 = vmax.f32 %v5519, 0.0
  %v5584 = vmax.f32 %v5520, 0.0
  %v5585 = vmax.f32 %v5521, 0.0
  %v5586 = vmin.f32 %v5522, 50.0
  %v5587 = vmin.f32 %v5523, 50.0
  %v5588 = vmin.f32 %v5524, 50.0
  %v5589 = vmin.f32 %v5525, 50.0
  %v5590 = vmin.f32 %v5526, 50.0
  %v5591 = vmin.f32 %v5527, 50.0
  %v5592 = vmin.f32 %v5528, 50.0
  %v5593 = vmin.f32 %v5529, 50.0
  %v5594 = vmin.f32 %v5530, 50.0
  %v5595 = vmin.f32 %v5531, 50.0
  %v5596 = vmin.f32 %v5532, 50.0
  %v5597 = vmin.f32 %v5533, 50.0
  %v5598 = vmin.f32 %v5534, 50.0
  %v5599 = vmin.f32 %v5535, 50.0
  %v5600 = vmin.f32 %v5536, 50.0
  %v5601 = vmin.f32 %v5537, 50.0
  %v5602 = vmin.f32 %v5538, 50.0
  %v5603 = vmin.f32 %v5539, 50.0
  %v5604 = vmin.f32 %v5540, 50.0
  %v5605 = vmin.f32 %v5541, 50.0
  %v5606 = vmin.f32 %v5542, 50.0
  %v5607 = vmin.f32 %v5543, 50.0
  %v5608 = vmin.f32 %v5544, 50.0
  %v5609 = vmin.f32 %v5545, 50.0
  %v5610 = vmin.f32 %v5546, 50.0
  %v5611 = vmin.f32 %v5547, 50.0
  %v5612 = vmin.f32 %v5548, 50.0
  %v5613 = vmin.f32 %v5549, 50.0
  %v5614 = vmin.f32 %v5550, 50.0
  %v5615 = vmin.f32 %v5551, 50.0
  %v5616 = vmin.f32 %v5552, 50.0
  %v5617 = vmin.f32 %v5553, 50.0
  %v5618 = vmin.f32 %v5554, 50.0
  %v5619 = vmin.f32 %v5555, 50.0
  %v5620 = vmin.f32 %v5556, 50.0
  %v5621 = vmin.f32 %v5557, 50.0
  %v5622 = vmin.f32 %v5558, 50.0
  %v5623 = vmin.f32 %v5559, 50.0
  %v5624 = vmin.f32 %v5560, 50.0
  %v5625 = vmin.f32 %v5561, 50.0
  %v5626 = vmin.f32 %v5562, 50.0
  %v5627 = vmin.f32 %v5563, 50.0
  %v5628 = vmin.f32 %v5564, 50.0
  %v5629 = vmin.f32 %v5565, 50.0
  %v5630 = vmin.f32 %v5566, 50.0
  %v5631 = vmin.f32 %v5567, 50.0
  %v5632 = vmin.f32 %v5568, 50.0
  %v5633 = vmin.f32 %v5569, 50.0
  %v5634 = vmin.f32 %v5570, 50.0
  %v5635 = vmin.f32 %v5571, 50.0
  %v5636 = vmin.f32 %v5572, 50.0
  %v5637 = vmin.f32 %v5573, 50.0
  %v5638 = vmin.f32 %v5574, 50.0
  %v5639 = vmin.f32 %v5575, 50.0
  %v5640 = vmin.f32 %v5576, 50.0
  %v5641 = vmin.f32 %v5577, 50.0
  %v5642 = vmin.f32 %v5578, 50.0
  %v5643 = vmin.f32 %v5579, 50.0
  %v5644 = vmin.f32 %v5580, 50.0
  %v5645 = vmin.f32 %v5581, 50.0
  %v5646 = vmin.f32 %v5582, 50.0
  %v5647 = vmin.f32 %v5583, 50.0
  %v5648 = vmin.f32 %v5584, 50.0
  %v5649 = vmin.f32 %v5585, 50.0
  %v5650 = vld [vmem:[#allocation2] sm:$0xff]
  %v5651 = vld [vmem:[#allocation2 + $0x8] sm:$0xff]
  %v5652 = vld [vmem:[#allocation2 + $0x10] sm:$0xff]
  %v5653 = vld [vmem:[#allocation2 + $0x18] sm:$0xff]
  %v5654 = vld [vmem:[#allocation2 + $0x20] sm:$0xff]
  %v5655 = vld [vmem:[#allocation2 + $0x28] sm:$0xff]
  %v5656 = vld [vmem:[#allocation2 + $0x30] sm:$0xff]
  %v5657 = vld [vmem:[#allocation2 + $0x38] sm:$0xff]
  %v5658 = vld [vmem:[#allocation2 + $0x40] sm:$0xff]
  %v5659 = vld [vmem:[#allocation2 + $0x48] sm:$0xff]
  %v5660 = vld [vmem:[#allocation2 + $0x50] sm:$0xff]
  %v5661 = vld [vmem:[#allocation2 + $0x58] sm:$0xff]
  %v5662 = vld [vmem:[#allocation2 + $0x60] sm:$0xff]
  %v5663 = vld [vmem:[#allocation2 + $0x68] sm:$0xff]
  %v5664 = vld [vmem:[#allocation2 + $0x70] sm:$0xff]
  %v5665 = vld [vmem:[#allocation2 + $0x78] sm:$0xff]
  %v5666 = vadd.f32 %v5586, %v5602
  %v5667 = vadd.f32 %v5587, %v5603
  %v5668 = vadd.f32 %v5588, %v5604
  %v5669 = vadd.f32 %v5589, %v5605
  %v5670 = vadd.f32 %v5590, %v5606
  %v5671 = vadd.f32 %v5591, %v5607
  %v5672 = vadd.f32 %v5592, %v5608
  %v5673 = vadd.f32 %v5593, %v5609
  %v5674 = vadd.f32 %v5594, %v5610
  %v5675 = vadd.f32 %v5595, %v5611
  %v5676 = vadd.f32 %v5596, %v5612
  %v5677 = vadd.f32 %v5597, %v5613
  %v5678 = vadd.f32 %v5598, %v5614
  %v5679 = vadd.f32 %v5599, %v5615
  %v5680 = vadd.f32 %v5600, %v5616
  %v5681 = vadd.f32 %v5601, %v5617
  %v5682 = vadd.f32 %v5666, %v5618
  %v5683 = vadd.f32 %v5667, %v5619
  %v5684 = vadd.f32 %v5668, %v5620
  %v5685 = vadd.f32 %v5669, %v5621
  %v5686 = vadd.f32 %v5670, %v5622
  %v5687 = vadd.f32 %v5671, %v5623
  %v5688 = vadd.f32 %v5672, %v5624
  %v5689 = vadd.f32 %v5673, %v5625
  %v5690 = vadd.f32 %v5674, %v5626
  %v5691 = vadd.f32 %v5675, %v5627
  %v5692 = vadd.f32 %v5676, %v5628
  %v5693 = vadd.f32 %v5677, %v5629
  %v5694 = vadd.f32 %v5678, %v5630
  %v5695 = vadd.f32 %v5679, %v5631
  %v5696 = vadd.f32 %v5680, %v5632
  %v5697 = vadd.f32 %v5681, %v5633
  %v5698 = vadd.f32 %v5682, %v5634
  %v5699 = vadd.f32 %v5683, %v5635
  %v5700 = vadd.f32 %v5684, %v5636
  %v5701 = vadd.f32 %v5685, %v5637
  %v5702 = vadd.f32 %v5686, %v5638
  %v5703 = vadd.f32 %v5687, %v5639
  %v5704 = vadd.f32 %v5688, %v5640
  %v5705 = vadd.f32 %v5689, %v5641
  %v5706 = vadd.f32 %v5690, %v5642
  %v5707 = vadd.f32 %v5691, %v5643
  %v5708 = vadd.f32 %v5692, %v5644
  %v5709 = vadd.f32 %v5693, %v5645
  %v5710 = vadd.f32 %v5694, %v5646
  %v5711 = vadd.f32 %v5695, %v5647
  %v5712 = vadd.f32 %v5696, %v5648
  %v5713 = vadd.f32 %v5697, %v5649
  %v5714 = vadd.f32 %v5650, %v5698
  %v5715 = vadd.f32 %v5651, %v5699
  %v5716 = vadd.f32 %v5652, %v5700
  %v5717 = vadd.f32 %v5653, %v5701
  %v5718 = vadd.f32 %v5654, %v5702
  %v5719 = vadd.f32 %v5655, %v5703
  %v5720 = vadd.f32 %v5656, %v5704
  %v5721 = vadd.f32 %v5657, %v5705
  %v5722 = vadd.f32 %v5658, %v5706
  %v5723 = vadd.f32 %v5659, %v5707
  %v5724 = vadd.f32 %v5660, %v5708
  %v5725 = vadd.f32 %v5661, %v5709
  %v5726 = vadd.f32 %v5662, %v5710
  %v5727 = vadd.f32 %v5663, %v5711
  %v5728 = vadd.f32 %v5664, %v5712
  %v5729 = vadd.f32 %v5665, %v5713
  %5730 = vst [vmem:[#allocation2] sm:$0xff] %v5714
  %5731 = vst [vmem:[#allocation2 + $0x8] sm:$0xff] %v5715
  %5732 = vst [vmem:[#allocation2 + $0x10] sm:$0xff] %v5716
  %5733 = vst [vmem:[#allocation2 + $0x18] sm:$0xff] %v5717
  %5734 = vst [vmem:[#allocation2 + $0x20] sm:$0xff] %v5718
  %5735 = vst [vmem:[#allocation2 + $0x28] sm:$0xff] %v5719
  %5736 = vst [vmem:[#allocation2 + $0x30] sm:$0xff] %v5720
  %5737 = vst [vmem:[#allocation2 + $0x38] sm:$0xff] %v5721
  %5738 = vst [vmem:[#allocation2 + $0x40] sm:$0xff] %v5722
  %5739 = vst [vmem:[#allocation2 + $0x48] sm:$0xff] %v5723
  %5740 = vst [vmem:[#allocation2 + $0x50] sm:$0xff] %v5724
  %5741 = vst [vmem:[#allocation2 + $0x58] sm:$0xff] %v5725
  %5742 = vst [vmem:[#allocation2 + $0x60] sm:$0xff] %v5726
  %5743 = vst [vmem:[#allocation2 + $0x68] sm:$0xff] %v5727
  %5744 = vst [vmem:[#allocation2 + $0x70] sm:$0xff] %v5728
  %5745 = vst [vmem:[#allocation2 + $0x78] sm:$0xff] %v5729
  // Predicated region
  $region14: #{cal_bpp.1} parent=0 // pred_check
    %p5746 = pneg %p46
  $region15: #{cal_bpp.1} parent=0 // pred_check_branch
    %5748 = sbr.rel (%p5746) target = $region17
  $region16: #{cal_bpp.1} parent=0 // pred_region
    %v5749 = vld [vmem:[#allocation2] sm:$0xff]
    %v5750 = vld [vmem:[#allocation2 + $0x8] sm:$0xff]
    %v5751 = vld [vmem:[#allocation2 + $0x10] sm:$0xff]
    %v5752 = vld [vmem:[#allocation2 + $0x18] sm:$0xff]
    %v5753 = vld [vmem:[#allocation2 + $0x20] sm:$0xff]
    %v5754 = vld [vmem:[#allocation2 + $0x28] sm:$0xff]
    %v5755 = vld [vmem:[#allocation2 + $0x30] sm:$0xff]
    %v5756 = vld [vmem:[#allocation2 + $0x38] sm:$0xff]
    %v5757 = vld [vmem:[#allocation2 + $0x40] sm:$0xff]
    %v5758 = vld [vmem:[#allocation2 + $0x48] sm:$0xff]
    %v5759 = vld [vmem:[#allocation2 + $0x50] sm:$0xff]
    %v5760 = vld [vmem:[#allocation2 + $0x58] sm:$0xff]
    %v5761 = vld [vmem:[#allocation2 + $0x60] sm:$0xff]
    %v5762 = vld [vmem:[#allocation2 + $0x68] sm:$0xff]
    %v5763 = vld [vmem:[#allocation2 + $0x70] sm:$0xff]
    %v5764 = vld [vmem:[#allocation2 + $0x78] sm:$0xff]
    %v5765 = vrot.slane %v5749, 4
    %v5766 = vadd.f32 %v5749, %v5765
    %v5767 = vrot.slane %v5766, 2
    %v5768 = vadd.f32 %v5766, %v5767
    %v5769 = vrot.slane %v5768, 1
    %v5770 = vadd.f32 %v5768, %v5769
    %v5771 = vrot.slane %v5750, 4
    %v5772 = vadd.f32 %v5750, %v5771
    %v5773 = vrot.slane %v5772, 2
    %v5774 = vadd.f32 %v5772, %v5773
    %v5775 = vrot.slane %v5774, 1
    %v5776 = vadd.f32 %v5774, %v5775
    %v5777 = vrot.slane %v5751, 4
    %v5778 = vadd.f32 %v5751, %v5777
    %v5779 = vrot.slane %v5778, 2
    %v5780 = vadd.f32 %v5778, %v5779
    %v5781 = vrot.slane %v5780, 1
    %v5782 = vadd.f32 %v5780, %v5781
    %v5783 = vrot.slane %v5752, 4
    %v5784 = vadd.f32 %v5752, %v5783
    %v5785 = vrot.slane %v5784, 2
    %v5786 = vadd.f32 %v5784, %v5785
    %v5787 = vrot.slane %v5786, 1
    %v5788 = vadd.f32 %v5786, %v5787
    %v5789 = vrot.slane %v5753, 4
    %v5790 = vadd.f32 %v5753, %v5789
    %v5791 = vrot.slane %v5790, 2
    %v5792 = vadd.f32 %v5790, %v5791
    %v5793 = vrot.slane %v5792, 1
    %v5794 = vadd.f32 %v5792, %v5793
    %v5795 = vrot.slane %v5754, 4
    %v5796 = vadd.f32 %v5754, %v5795
    %v5797 = vrot.slane %v5796, 2
    %v5798 = vadd.f32 %v5796, %v5797
    %v5799 = vrot.slane %v5798, 1
    %v5800 = vadd.f32 %v5798, %v5799
    %v5801 = vrot.slane %v5755, 4
    %v5802 = vadd.f32 %v5755, %v5801
    %v5803 = vrot.slane %v5802, 2
    %v5804 = vadd.f32 %v5802, %v5803
    %v5805 = vrot.slane %v5804, 1
    %v5806 = vadd.f32 %v5804, %v5805
    %v5807 = vrot.slane %v5756, 4
    %v5808 = vadd.f32 %v5756, %v5807
    %v5809 = vrot.slane %v5808, 2
    %v5810 = vadd.f32 %v5808, %v5809
    %v5811 = vrot.slane %v5810, 1
    %v5812 = vadd.f32 %v5810, %v5811
    %v5813 = vrot.slane %v5757, 4
    %v5814 = vadd.f32 %v5757, %v5813
    %v5815 = vrot.slane %v5814, 2
    %v5816 = vadd.f32 %v5814, %v5815
    %v5817 = vrot.slane %v5816, 1
    %v5818 = vadd.f32 %v5816, %v5817
    %v5819 = vrot.slane %v5758, 4
    %v5820 = vadd.f32 %v5758, %v5819
    %v5821 = vrot.slane %v5820, 2
    %v5822 = vadd.f32 %v5820, %v5821
    %v5823 = vrot.slane %v5822, 1
    %v5824 = vadd.f32 %v5822, %v5823
    %v5825 = vrot.slane %v5759, 4
    %v5826 = vadd.f32 %v5759, %v5825
    %v5827 = vrot.slane %v5826, 2
    %v5828 = vadd.f32 %v5826, %v5827
    %v5829 = vrot.slane %v5828, 1
    %v5830 = vadd.f32 %v5828, %v5829
    %v5831 = vrot.slane %v5760, 4
    %v5832 = vadd.f32 %v5760, %v5831
    %v5833 = vrot.slane %v5832, 2
    %v5834 = vadd.f32 %v5832, %v5833
    %v5835 = vrot.slane %v5834, 1
    %v5836 = vadd.f32 %v5834, %v5835
    %v5837 = vrot.slane %v5761, 4
    %v5838 = vadd.f32 %v5761, %v5837
    %v5839 = vrot.slane %v5838, 2
    %v5840 = vadd.f32 %v5838, %v5839
    %v5841 = vrot.slane %v5840, 1
    %v5842 = vadd.f32 %v5840, %v5841
    %v5843 = vrot.slane %v5762, 4
    %v5844 = vadd.f32 %v5762, %v5843
    %v5845 = vrot.slane %v5844, 2
    %v5846 = vadd.f32 %v5844, %v5845
    %v5847 = vrot.slane %v5846, 1
    %v5848 = vadd.f32 %v5846, %v5847
    %v5849 = vrot.slane %v5763, 4
    %v5850 = vadd.f32 %v5763, %v5849
    %v5851 = vrot.slane %v5850, 2
    %v5852 = vadd.f32 %v5850, %v5851
    %v5853 = vrot.slane %v5852, 1
    %v5854 = vadd.f32 %v5852, %v5853
    %v5855 = vrot.slane %v5764, 4
    %v5856 = vadd.f32 %v5764, %v5855
    %v5857 = vrot.slane %v5856, 2
    %v5858 = vadd.f32 %v5856, %v5857
    %v5859 = vrot.slane %v5858, 1
    %v5860 = vadd.f32 %v5858, %v5859
    %v5877 = vrot.slane %v5776, 7
    %v5878 = vrot.slane %v5782, 6
    %v5879 = vrot.slane %v5788, 5
    %v5880 = vrot.slane %v5794, 4
    %v5881 = vrot.slane %v5800, 3
    %v5882 = vrot.slane %v5806, 2
    %v5883 = vrot.slane %v5812, 1
    %v5884 = vrot.slane %v5824, 7
    %v5885 = vrot.slane %v5830, 6
    %v5886 = vrot.slane %v5836, 5
    %v5887 = vrot.slane %v5842, 4
    %v5888 = vrot.slane %v5848, 3
    %v5889 = vrot.slane %v5854, 2
    %v5890 = vrot.slane %v5860, 1
    %vm5891 = vcmask 1040384
    %v5892 = vsel %vm5891, %v5770, %v5877
    %vm5893 = vcmask 1042434
    %v5894 = vsel %vm5893, %v5878, %v5879
    %vm5895 = vcmask 1041408
    %v5896 = vsel %vm5895, %v5892, %v5894
    %vm5897 = vcmask 1044484
    %v5898 = vsel %vm5897, %v5880, %v5881
    %vm5899 = vcmask 1046534
    %v5900 = vsel %vm5899, %v5882, %v5883
    %vm5901 = vcmask 1045508
    %v5902 = vsel %vm5901, %v5898, %v5900
    %vm5903 = vcmask 1043456
    %v5904 = vsel %vm5903, %v5896, %v5902
    %v5905 = vsel %vm5891, %v5818, %v5884
    %v5906 = vsel %vm5893, %v5885, %v5886
    %v5907 = vsel %vm5895, %v5905, %v5906
    %v5908 = vsel %vm5897, %v5887, %v5888
    %v5909 = vsel %vm5899, %v5889, %v5890
    %v5910 = vsel %vm5901, %v5908, %v5909
    %v5911 = vsel %vm5903, %v5907, %v5910
    %5914 = vst [vmem:[%s2] sm:$0xff] %v5904
    %5915 = vst [vmem:[%s2 + $0x8] sm:$0xff] %v5911
  $region17: #{cal_bpp.1} parent=0 // pred_fallthru
    _
  // Predicated region
  $region18: #{cal_bpp.1} parent=0 // pred_check
    _
  $region19: #{cal_bpp.1} parent=0 // pred_check_branch
    %5917 = sbr.rel (0) target = $region21
  $region20: #{cal_bpp.1} parent=0 // pred_region
    _
  $region21: #{cal_bpp.1} parent=0 // pred_fallthru
    _
  // Predicated region
  $region22: #{cal_bpp.1} parent=0 // pred_check
    _
  $region23: #{cal_bpp.1} parent=0 // pred_check_branch
    %5919 = sbr.rel (0) target = $region25
  $region24: #{cal_bpp.1} parent=0 // pred_region
    _
  $region25: #{cal_bpp.1} parent=0 // pred_fallthru
    _

</llo_original>
